<compile_context>
chip_gen: v7x
topology: tpu7x:2x2x1
jax: 0.10.0
libtpu: 0.0.40
codegen_flags: <defaults>
</compile_context>

<pallas_src>
from functools import partial

import jax
import jax.numpy as jnp
from jax.experimental import pallas as pl
from jax.experimental.pallas import tpu as pltpu

EPS = 1e-5  # PyTorch InstanceNorm2d default


def _downblock_kernel(x_ref, w_ref, g_ref, beta_ref, o_ref):
    # x_ref   : (bb, Hp, Wp, Cin) bf16 zero-padded image; Hp = H+3 (1 top pad,
    #           1 bottom pad, 1 slack row for the flat-shift slices),
    #           Wp = round_up(W+2, 16) (1 left pad, >=1 right pad + alignment).
    # w_ref   : (9, Cin, Cout)    bf16 conv taps, tap t = ky*3 + kx
    # g_ref   : (1, Cout)         f32 instance-norm gamma
    # beta_ref: (1, Cout)         f32 instance-norm beta
    # o_ref   : (bb, H//2, (W//2)*Cout)  f32 lane-dense output
    bb, Hp, Wp, _ = x_ref.shape
    Cout = g_ref.shape[-1]
    _, Hh, _ = o_ref.shape
    Wh = o_ref.shape[2] // Cout
    H, W = 2 * Hh, 2 * Wh
    L = H * Wp                      # rows of the (Wp-strided) conv accumulator

    gamma = g_ref[...].reshape(1, 1, Cout)
    beta = beta_ref[...].reshape(1, 1, Cout)
    inv_n = 1.0 / float(H * W)

    for b in range(bb):             # static, small
        # ---- 3x3 conv: 9 MXU matmuls, register accumulation (no scratch) ----
        # acc[h*Wp + w] = sum_t S_t[h*Wp + w + (ky*Wp + kx)]
        xf = x_ref[b].reshape(Hp * Wp, Cin := x_ref.shape[-1])  # bf16, flat
        acc = None
        for t in range(9):
            ky, kx = divmod(t, 3)
            off = ky * Wp + kx
            s = jnp.dot(xf, w_ref[t], preferred_element_type=jnp.float32)
            c = s[off:off + L, :]              # leading-axis shifted slice
            acc = c if acc is None else acc + c

        # Crop the Wp-stride garbage columns before the statistics.
        y = acc.reshape(H, Wp, Cout)[:, :W, :]          # (H, W, Cout) f32

        # ---- InstanceNorm2d: single-pass stats, gamma folded into scale ----
        s1 = jnp.sum(y, axis=(0, 1), keepdims=True)         # (1,1,Cout)
        s2 = jnp.sum(y * y, axis=(0, 1), keepdims=True)
        mean = s1 * inv_n
        var = s2 * inv_n - mean * mean                       # biased variance
        scale = gamma * jax.lax.rsqrt(var + EPS)
        shift = beta - mean * scale
        # affine + ReLU in one pass (conv bias omitted: cancelled by `- mean`)
        y = jnp.maximum(y * scale + shift, 0.0)

        # ---- AvgPool2d(2x2): cheap leading-axis H pairs first, then W pairs ----
        y4 = y.reshape(Hh, 2, W, Cout)
        zh = y4[:, 0] + y4[:, 1]                             # (Hh, W, Cout)
        z4 = zh.reshape(Hh, Wh, 2, Cout)
        pooled = (z4[:, :, 0, :] + z4[:, :, 1, :]) * 0.25    # (Hh, Wh, Cout)

        # ---- single lane-dense store: out[hh, wh*Cout + co] ----
        o_ref[b] = pooled.reshape(Hh, Wh * Cout).astype(o_ref.dtype)


@partial(jax.jit, static_argnames=("images_per_step",))
def down_block2d(x_nchw, w_oihw, bias, gamma, beta, *, images_per_step=1):
    """Forward pass equivalent to PyTorch DownBlock2d (groups=1, k=3, pad=1)."""
    del bias  # provably cancelled by InstanceNorm's per-channel mean subtraction
    B, Cin, H, W = x_nchw.shape
    Cout = w_oihw.shape[0]
    assert H % 2 == 0 and W % 2 == 0
    bb = int(images_per_step)
    assert B % bb == 0
    Hh, Wh = H // 2, W // 2
    Wp = ((W + 2 + 15) // 16) * 16     # bf16-sublane-friendly padded width
    Hp = H + 3                         # 1 top + 1 bottom pad + 1 slack row

    # NCHW -> NHWC, zero-pad once, bf16 for the MXU.  No kx/ky im2col inflation.
    x_nhwc = jnp.transpose(x_nchw, (0, 2, 3, 1))
    x_pad = jnp.pad(
        x_nhwc, ((0, 0), (1, 2), (1, Wp - W - 1), (0, 0))
    ).astype(jnp.bfloat16)                                  # (B, Hp, Wp, Cin)

    # (Cout, Cin, 3, 3) -> (ky*3+kx, Cin, Cout), bf16 for the MXU.
    w_k = (jnp.transpose(w_oihw, (2, 3, 1, 0))
           .reshape(9, Cin, Cout).astype(jnp.bfloat16))
    g2 = gamma.reshape(1, Cout).astype(jnp.float32)
    be2 = beta.reshape(1, Cout).astype(jnp.float32)

    cost = pl.CostEstimate(
        flops=2 * B * Hp * Wp * 9 * Cin * Cout,
        transcendentals=B * Cout,
        bytes_accessed=(x_pad.size * 2 + w_k.size * 2
                        + (g2.size + be2.size) * 4
                        + B * Hh * Wh * Cout * 4),
    )

    # VMEM budget: double-buffered in/out blocks + weights + f32 intermediates,
    # capped at 80% of the physical VMEM of the current chip (64 MiB/TC on v7x).
    block_bytes = (2 * bb * Hp * Wp * Cin * 2         # bf16 input block x2
                   + 2 * bb * Hh * Wh * Cout * 4      # f32 output block x2
                   + 2 * 9 * Cin * Cout * 2           # bf16 weights x2
                   + 6 * Hp * Wp * Cout * 4)          # f32 intermediates headroom
    try:
        phys_vmem = int(pltpu.get_tpu_info().vmem_capacity_bytes)
    except Exception:
        phys_vmem = 64 << 20                          # conservative (v7x per-TC)
    vmem_limit = int(min(max(32 << 20, 2 * block_bytes), phys_vmem * 4 // 5))

    out_flat = pl.pallas_call(
        _downblock_kernel,
        out_shape=jax.ShapeDtypeStruct((B, Hh, Wh * Cout), jnp.float32),
        grid_spec=pltpu.PrefetchScalarGridSpec(
            num_scalar_prefetch=0,
            grid=(B // bb,),
            in_specs=[
                pl.BlockSpec((bb, Hp, Wp, Cin), lambda i: (i, 0, 0, 0)),
                pl.BlockSpec((9, Cin, Cout), lambda i: (0, 0, 0)),
                pl.BlockSpec((1, Cout), lambda i: (0, 0)),
                pl.BlockSpec((1, Cout), lambda i: (0, 0)),
            ],
            out_specs=pl.BlockSpec((bb, Hh, Wh * Cout), lambda i: (i, 0, 0)),
        ),
        compiler_params=pltpu.CompilerParams(
            dimension_semantics=("parallel",),   # shards batch across v7x's 2 TCs
            vmem_limit_bytes=vmem_limit,
        ),
        cost_estimate=cost,
    )(x_pad, w_k, g2, be2)

    # (B, Hh, Wh*Cout) -> (B, Cout, Hh, Wh) to match the PyTorch NCHW output.
    return jnp.transpose(out_flat.reshape(B, Hh, Wh, Cout), (0, 3, 1, 2))


def _reference(x, w, b, gamma, beta):
    """Pure-JAX reference mirroring the PyTorch forward (for validation)."""
    out = jax.lax.conv_general_dilated(
        x, w, window_strides=(1, 1), padding=((1, 1), (1, 1)),
        dimension_numbers=("NCHW", "OIHW", "NCHW"),
    )
    out = out + b[None, :, None, None]
    mean = out.mean(axis=(2, 3), keepdims=True)
    var = out.var(axis=(2, 3), keepdims=True)  # biased, like InstanceNorm2d
    out = (out - mean) / jnp.sqrt(var + EPS)
    out = out * gamma[None, :, None, None] + beta[None, :, None, None]
    out = jnp.maximum(out, 0.0)
    B, C, H, W = out.shape
    return out.reshape(B, C, H // 2, 2, W // 2, 2).mean(axis=(3, 5))


if __name__ == "__main__":
    B, Cin, Cout, H, W = 2, 4, 8, 16, 16
    key = jax.random.PRNGKey(0)
    kx_, kw_, kb_, kg_, kbe_ = jax.random.split(key, 5)

    x = jax.random.normal(kx_, (B, Cin, H, W), dtype=jnp.float32)
    w = jax.random.normal(kw_, (Cout, Cin, 3, 3), dtype=jnp.float32) * 0.1
    bias = jax.random.normal(kb_, (Cout,), dtype=jnp.float32) * 0.1
    gamma = 1.0 + 0.1 * jax.random.normal(kg_, (Cout,), dtype=jnp.float32)
    beta = 0.1 * jax.random.normal(kbe_, (Cout,), dtype=jnp.float32)

    out = jax.block_until_ready(down_block2d(x, w, bias, gamma, beta))
    assert out.shape == (B, Cout, H // 2, W // 2), out.shape

    # The kernel feeds the MXU bf16 operands; validate against an f32 reference
    # run on the same bf16-rounded conv inputs (norm/ReLU/pool are f32 in both).
    x_r = x.astype(jnp.bfloat16).astype(jnp.float32)
    w_r = w.astype(jnp.bfloat16).astype(jnp.float32)
    ref = jax.block_until_ready(_reference(x_r, w_r, bias, gamma, beta))
    max_err = float(jnp.max(jnp.abs(out - ref)))
    assert jnp.allclose(out, ref, atol=2e-3, rtol=2e-3), max_err

    # The multi-image-per-step path (grid-step amortization) must agree too.
    out2 = jax.block_until_ready(
        down_block2d(x, w, bias, gamma, beta, images_per_step=2))
    assert jnp.allclose(out, out2, atol=1e-5, rtol=1e-5), "batched path mismatch"

    print("KERNEL_OK")
</pallas_src>

<mosaic_0001>
module attributes {stable_mosaic.version = 11 : i64} {
  func.func @_downblock_kernel(%arg0: i32, %arg1: memref<1x19x32x4xbf16, #tpu.memory_space<vmem>>, %arg2: memref<9x4x8xbf16, #tpu.memory_space<vmem>>, %arg3: memref<1x8xf32, #tpu.memory_space<vmem>>, %arg4: memref<1x8xf32, #tpu.memory_space<vmem>>, %arg5: memref<1x8x64xf32, #tpu.memory_space<vmem>>) attributes {dimension_semantics = [#tpu.dimension_semantics<parallel>], iteration_bounds = array<i64: 2>, scalar_prefetch = 0 : i64, scratch_operands = 0 : i64, tpu.core_type = #tpu.core_type<tc>, window_params = [{transform_indices = @transform_0, window_bounds = array<i64: 1, 19, 32, 4>}, {pipeline_mode = #tpu.pipeline_mode<synchronous>, transform_indices = @transform_1, window_bounds = array<i64: 9, 4, 8>}, {pipeline_mode = #tpu.pipeline_mode<synchronous>, transform_indices = @transform_2, window_bounds = array<i64: 1, 8>}, {pipeline_mode = #tpu.pipeline_mode<synchronous>, transform_indices = @transform_3, window_bounds = array<i64: 1, 8>}, {transform_indices = @transform_4, window_bounds = array<i64: 1, 8, 64>}]} {
    %c0 = arith.constant 0 : index
    %c0_0 = arith.constant 0 : index
    %0 = vector.load %arg3[%c0, %c0_0] : memref<1x8xf32, #tpu.memory_space<vmem>>, vector<1x8xf32>
    %1 = vector.shape_cast %0 : vector<1x8xf32> to vector<1x1x8xf32>
    %c0_1 = arith.constant 0 : index
    %c0_2 = arith.constant 0 : index
    %2 = vector.load %arg4[%c0_1, %c0_2] : memref<1x8xf32, #tpu.memory_space<vmem>>, vector<1x8xf32>
    %3 = vector.shape_cast %2 : vector<1x8xf32> to vector<1x1x8xf32>
    %c0_3 = arith.constant 0 : index
    %c0_4 = arith.constant 0 : index
    %c0_5 = arith.constant 0 : index
    %c0_6 = arith.constant 0 : index
    %4 = vector.load %arg1[%c0_3, %c0_4, %c0_5, %c0_6] : memref<1x19x32x4xbf16, #tpu.memory_space<vmem>>, vector<1x19x32x4xbf16>
    %5 = vector.shape_cast %4 : vector<1x19x32x4xbf16> to vector<19x32x4xbf16>
    %6 = vector.shape_cast %5 : vector<19x32x4xbf16> to vector<608x4xbf16>
    %c0_7 = arith.constant 0 : index
    %c0_8 = arith.constant 0 : index
    %c0_9 = arith.constant 0 : index
    %7 = vector.load %arg2[%c0_7, %c0_8, %c0_9] : memref<9x4x8xbf16, #tpu.memory_space<vmem>>, vector<1x4x8xbf16>
    %8 = vector.shape_cast %7 : vector<1x4x8xbf16> to vector<4x8xbf16>
    %cst = arith.constant dense<0.000000e+00> : vector<608x8xf32>
    %9 = tpu.matmul %6, %8, %cst {dimension_numbers = #tpu.dot_dimension_numbers<[1], [0], [0], [1], [0, 0, 1, 1], [], []>} : vector<608x4xbf16>, vector<4x8xbf16>, vector<608x8xf32> -> vector<608x8xf32>
    %10 = vector.extract_strided_slice %9 {offsets = [0, 0], sizes = [512, 8], strides = [1, 1]} : vector<608x8xf32> to vector<512x8xf32>
    %c1 = arith.constant 1 : index
    %c0_10 = arith.constant 0 : index
    %c0_11 = arith.constant 0 : index
    %11 = vector.load %arg2[%c1, %c0_10, %c0_11] : memref<9x4x8xbf16, #tpu.memory_space<vmem>>, vector<1x4x8xbf16>
    %12 = vector.shape_cast %11 : vector<1x4x8xbf16> to vector<4x8xbf16>
    %cst_12 = arith.constant dense<0.000000e+00> : vector<608x8xf32>
    %13 = tpu.matmul %6, %12, %cst_12 {dimension_numbers = #tpu.dot_dimension_numbers<[1], [0], [0], [1], [0, 0, 1, 1], [], []>} : vector<608x4xbf16>, vector<4x8xbf16>, vector<608x8xf32> -> vector<608x8xf32>
    %14 = vector.extract_strided_slice %13 {offsets = [1, 0], sizes = [512, 8], strides = [1, 1]} : vector<608x8xf32> to vector<512x8xf32>
    %15 = arith.addf %10, %14 : vector<512x8xf32>
    %c2 = arith.constant 2 : index
    %c0_13 = arith.constant 0 : index
    %c0_14 = arith.constant 0 : index
    %16 = vector.load %arg2[%c2, %c0_13, %c0_14] : memref<9x4x8xbf16, #tpu.memory_space<vmem>>, vector<1x4x8xbf16>
    %17 = vector.shape_cast %16 : vector<1x4x8xbf16> to vector<4x8xbf16>
    %cst_15 = arith.constant dense<0.000000e+00> : vector<608x8xf32>
    %18 = tpu.matmul %6, %17, %cst_15 {dimension_numbers = #tpu.dot_dimension_numbers<[1], [0], [0], [1], [0, 0, 1, 1], [], []>} : vector<608x4xbf16>, vector<4x8xbf16>, vector<608x8xf32> -> vector<608x8xf32>
    %19 = vector.extract_strided_slice %18 {offsets = [2, 0], sizes = [512, 8], strides = [1, 1]} : vector<608x8xf32> to vector<512x8xf32>
    %20 = arith.addf %15, %19 : vector<512x8xf32>
    %c3 = arith.constant 3 : index
    %c0_16 = arith.constant 0 : index
    %c0_17 = arith.constant 0 : index
    %21 = vector.load %arg2[%c3, %c0_16, %c0_17] : memref<9x4x8xbf16, #tpu.memory_space<vmem>>, vector<1x4x8xbf16>
    %22 = vector.shape_cast %21 : vector<1x4x8xbf16> to vector<4x8xbf16>
    %cst_18 = arith.constant dense<0.000000e+00> : vector<608x8xf32>
    %23 = tpu.matmul %6, %22, %cst_18 {dimension_numbers = #tpu.dot_dimension_numbers<[1], [0], [0], [1], [0, 0, 1, 1], [], []>} : vector<608x4xbf16>, vector<4x8xbf16>, vector<608x8xf32> -> vector<608x8xf32>
    %24 = vector.extract_strided_slice %23 {offsets = [32, 0], sizes = [512, 8], strides = [1, 1]} : vector<608x8xf32> to vector<512x8xf32>
    %25 = arith.addf %20, %24 : vector<512x8xf32>
    %c4 = arith.constant 4 : index
    %c0_19 = arith.constant 0 : index
    %c0_20 = arith.constant 0 : index
    %26 = vector.load %arg2[%c4, %c0_19, %c0_20] : memref<9x4x8xbf16, #tpu.memory_space<vmem>>, vector<1x4x8xbf16>
    %27 = vector.shape_cast %26 : vector<1x4x8xbf16> to vector<4x8xbf16>
    %cst_21 = arith.constant dense<0.000000e+00> : vector<608x8xf32>
    %28 = tpu.matmul %6, %27, %cst_21 {dimension_numbers = #tpu.dot_dimension_numbers<[1], [0], [0], [1], [0, 0, 1, 1], [], []>} : vector<608x4xbf16>, vector<4x8xbf16>, vector<608x8xf32> -> vector<608x8xf32>
    %29 = vector.extract_strided_slice %28 {offsets = [33, 0], sizes = [512, 8], strides = [1, 1]} : vector<608x8xf32> to vector<512x8xf32>
    %30 = arith.addf %25, %29 : vector<512x8xf32>
    %c5 = arith.constant 5 : index
    %c0_22 = arith.constant 0 : index
    %c0_23 = arith.constant 0 : index
    %31 = vector.load %arg2[%c5, %c0_22, %c0_23] : memref<9x4x8xbf16, #tpu.memory_space<vmem>>, vector<1x4x8xbf16>
    %32 = vector.shape_cast %31 : vector<1x4x8xbf16> to vector<4x8xbf16>
    %cst_24 = arith.constant dense<0.000000e+00> : vector<608x8xf32>
    %33 = tpu.matmul %6, %32, %cst_24 {dimension_numbers = #tpu.dot_dimension_numbers<[1], [0], [0], [1], [0, 0, 1, 1], [], []>} : vector<608x4xbf16>, vector<4x8xbf16>, vector<608x8xf32> -> vector<608x8xf32>
    %34 = vector.extract_strided_slice %33 {offsets = [34, 0], sizes = [512, 8], strides = [1, 1]} : vector<608x8xf32> to vector<512x8xf32>
    %35 = arith.addf %30, %34 : vector<512x8xf32>
    %c6 = arith.constant 6 : index
    %c0_25 = arith.constant 0 : index
    %c0_26 = arith.constant 0 : index
    %36 = vector.load %arg2[%c6, %c0_25, %c0_26] : memref<9x4x8xbf16, #tpu.memory_space<vmem>>, vector<1x4x8xbf16>
    %37 = vector.shape_cast %36 : vector<1x4x8xbf16> to vector<4x8xbf16>
    %cst_27 = arith.constant dense<0.000000e+00> : vector<608x8xf32>
    %38 = tpu.matmul %6, %37, %cst_27 {dimension_numbers = #tpu.dot_dimension_numbers<[1], [0], [0], [1], [0, 0, 1, 1], [], []>} : vector<608x4xbf16>, vector<4x8xbf16>, vector<608x8xf32> -> vector<608x8xf32>
    %39 = vector.extract_strided_slice %38 {offsets = [64, 0], sizes = [512, 8], strides = [1, 1]} : vector<608x8xf32> to vector<512x8xf32>
    %40 = arith.addf %35, %39 : vector<512x8xf32>
    %c7 = arith.constant 7 : index
    %c0_28 = arith.constant 0 : index
    %c0_29 = arith.constant 0 : index
    %41 = vector.load %arg2[%c7, %c0_28, %c0_29] : memref<9x4x8xbf16, #tpu.memory_space<vmem>>, vector<1x4x8xbf16>
    %42 = vector.shape_cast %41 : vector<1x4x8xbf16> to vector<4x8xbf16>
    %cst_30 = arith.constant dense<0.000000e+00> : vector<608x8xf32>
    %43 = tpu.matmul %6, %42, %cst_30 {dimension_numbers = #tpu.dot_dimension_numbers<[1], [0], [0], [1], [0, 0, 1, 1], [], []>} : vector<608x4xbf16>, vector<4x8xbf16>, vector<608x8xf32> -> vector<608x8xf32>
    %44 = vector.extract_strided_slice %43 {offsets = [65, 0], sizes = [512, 8], strides = [1, 1]} : vector<608x8xf32> to vector<512x8xf32>
    %45 = arith.addf %40, %44 : vector<512x8xf32>
    %c8 = arith.constant 8 : index
    %c0_31 = arith.constant 0 : index
    %c0_32 = arith.constant 0 : index
    %46 = vector.load %arg2[%c8, %c0_31, %c0_32] : memref<9x4x8xbf16, #tpu.memory_space<vmem>>, vector<1x4x8xbf16>
    %47 = vector.shape_cast %46 : vector<1x4x8xbf16> to vector<4x8xbf16>
    %cst_33 = arith.constant dense<0.000000e+00> : vector<608x8xf32>
    %48 = tpu.matmul %6, %47, %cst_33 {dimension_numbers = #tpu.dot_dimension_numbers<[1], [0], [0], [1], [0, 0, 1, 1], [], []>} : vector<608x4xbf16>, vector<4x8xbf16>, vector<608x8xf32> -> vector<608x8xf32>
    %49 = vector.extract_strided_slice %48 {offsets = [66, 0], sizes = [512, 8], strides = [1, 1]} : vector<608x8xf32> to vector<512x8xf32>
    %50 = arith.addf %45, %49 : vector<512x8xf32>
    %51 = vector.shape_cast %50 : vector<512x8xf32> to vector<16x32x8xf32>
    %52 = vector.extract_strided_slice %51 {offsets = [0, 0, 0], sizes = [16, 16, 8], strides = [1, 1, 1]} : vector<16x32x8xf32> to vector<16x16x8xf32>
    %cst_34 = arith.constant dense<0.000000e+00> : vector<8xf32>
    %53 = vector.multi_reduction <add>, %52, %cst_34 [0, 1] : vector<16x16x8xf32> to vector<8xf32>
    %54 = vector.shape_cast %53 : vector<8xf32> to vector<1x1x8xf32>
    %55 = arith.mulf %52, %52 : vector<16x16x8xf32>
    %cst_35 = arith.constant dense<0.000000e+00> : vector<8xf32>
    %56 = vector.multi_reduction <add>, %55, %cst_35 [0, 1] : vector<16x16x8xf32> to vector<8xf32>
    %57 = vector.shape_cast %56 : vector<8xf32> to vector<1x1x8xf32>
    %cst_36 = arith.constant 3.906250e-03 : f32
    %58 = vector.broadcast %cst_36 : f32 to vector<1x1x8xf32>
    %59 = arith.mulf %54, %58 : vector<1x1x8xf32>
    %cst_37 = arith.constant 3.906250e-03 : f32
    %60 = vector.broadcast %cst_37 : f32 to vector<1x1x8xf32>
    %61 = arith.mulf %57, %60 : vector<1x1x8xf32>
    %62 = arith.mulf %59, %59 : vector<1x1x8xf32>
    %63 = arith.subf %61, %62 : vector<1x1x8xf32>
    %cst_38 = arith.constant 9.99999974E-6 : f32
    %64 = vector.broadcast %cst_38 : f32 to vector<1x1x8xf32>
    %65 = arith.addf %63, %64 : vector<1x1x8xf32>
    %66 = math.rsqrt %65 : vector<1x1x8xf32>
    %67 = arith.mulf %1, %66 : vector<1x1x8xf32>
    %68 = arith.mulf %59, %67 : vector<1x1x8xf32>
    %69 = arith.subf %3, %68 : vector<1x1x8xf32>
    %70 = vector.broadcast %67 : vector<1x1x8xf32> to vector<16x16x8xf32>
    %71 = arith.mulf %52, %70 : vector<16x16x8xf32>
    %72 = vector.broadcast %69 : vector<1x1x8xf32> to vector<16x16x8xf32>
    %73 = arith.addf %71, %72 : vector<16x16x8xf32>
    %cst_39 = arith.constant 0.000000e+00 : f32
    %74 = vector.broadcast %cst_39 : f32 to vector<16x16x8xf32>
    %75 = arith.maximumf %73, %74 : vector<16x16x8xf32>
    %76 = vector.shape_cast %75 : vector<16x16x8xf32> to vector<8x2x16x8xf32>
    %77 = vector.extract_strided_slice %76 {offsets = [0, 0, 0, 0], sizes = [8, 1, 16, 8], strides = [1, 1, 1, 1]} : vector<8x2x16x8xf32> to vector<8x1x16x8xf32>
    %78 = vector.shape_cast %77 : vector<8x1x16x8xf32> to vector<8x16x8xf32>
    %79 = vector.extract_strided_slice %76 {offsets = [0, 1, 0, 0], sizes = [8, 1, 16, 8], strides = [1, 1, 1, 1]} : vector<8x2x16x8xf32> to vector<8x1x16x8xf32>
    %80 = vector.shape_cast %79 : vector<8x1x16x8xf32> to vector<8x16x8xf32>
    %81 = arith.addf %78, %80 : vector<8x16x8xf32>
    %82 = vector.shape_cast %81 : vector<8x16x8xf32> to vector<8x8x2x8xf32>
    %83 = vector.extract_strided_slice %82 {offsets = [0, 0, 0, 0], sizes = [8, 8, 1, 8], strides = [1, 1, 1, 1]} : vector<8x8x2x8xf32> to vector<8x8x1x8xf32>
    %84 = vector.shape_cast %83 : vector<8x8x1x8xf32> to vector<8x8x8xf32>
    %85 = vector.extract_strided_slice %82 {offsets = [0, 0, 1, 0], sizes = [8, 8, 1, 8], strides = [1, 1, 1, 1]} : vector<8x8x2x8xf32> to vector<8x8x1x8xf32>
    %86 = vector.shape_cast %85 : vector<8x8x1x8xf32> to vector<8x8x8xf32>
    %87 = arith.addf %84, %86 : vector<8x8x8xf32>
    %cst_40 = arith.constant 2.500000e-01 : f32
    %88 = vector.broadcast %cst_40 : f32 to vector<8x8x8xf32>
    %89 = arith.mulf %87, %88 : vector<8x8x8xf32>
    %90 = vector.shape_cast %89 : vector<8x8x8xf32> to vector<8x64xf32>
    %c0_41 = arith.constant 0 : index
    %c0_42 = arith.constant 0 : index
    %c0_43 = arith.constant 0 : index
    %91 = vector.load %arg5[%c0_41, %c0_42, %c0_43] : memref<1x8x64xf32, #tpu.memory_space<vmem>>, vector<1x8x64xf32>
    %92 = vector.shape_cast %91 : vector<1x8x64xf32> to vector<8x64xf32>
    %93 = vector.shape_cast %90 : vector<8x64xf32> to vector<1x8x64xf32>
    tpu.vector_store %arg5[%c0_41, %c0_42, %c0_43], %93 {strides = array<i32>} : memref<1x8x64xf32, #tpu.memory_space<vmem>>, vector<1x8x64xf32>,
    return
  }
  func.func @transform_0(%arg0: i32) -> (i32, i32, i32, i32) {
    %c0_i32 = arith.constant 0 : i32
    %c0_i32_0 = arith.constant 0 : i32
    %c0_i32_1 = arith.constant 0 : i32
    %c0_i32_2 = arith.constant 0 : i32
    return %arg0, %c0_i32, %c0_i32_0, %c0_i32_1 : i32, i32, i32, i32
  }
  func.func @transform_1(%arg0: i32) -> (i32, i32, i32) {
    %c0_i32 = arith.constant 0 : i32
    %c0_i32_0 = arith.constant 0 : i32
    %c0_i32_1 = arith.constant 0 : i32
    %c0_i32_2 = arith.constant 0 : i32
    return %c0_i32, %c0_i32_0, %c0_i32_1 : i32, i32, i32
  }
  func.func @transform_2(%arg0: i32) -> (i32, i32) {
    %c0_i32 = arith.constant 0 : i32
    %c0_i32_0 = arith.constant 0 : i32
    %c0_i32_1 = arith.constant 0 : i32
    return %c0_i32, %c0_i32_0 : i32, i32
  }
  func.func @transform_3(%arg0: i32) -> (i32, i32) {
    %c0_i32 = arith.constant 0 : i32
    %c0_i32_0 = arith.constant 0 : i32
    %c0_i32_1 = arith.constant 0 : i32
    return %c0_i32, %c0_i32_0 : i32, i32
  }
  func.func @transform_4(%arg0: i32) -> (i32, i32, i32) {
    %c0_i32 = arith.constant 0 : i32
    %c0_i32_0 = arith.constant 0 : i32
    %c0_i32_1 = arith.constant 0 : i32
    return %arg0, %c0_i32, %c0_i32_0 : i32, i32, i32
  }
}

</mosaic_0001>

<llo_original>
// kernel: down_block2d.1
$region0: #{down_block2d.1}
  #allocation0 [shape = 'u32[]', space=smem, size = 0x4, offset = 0x4, fixed_abs, tag = 'smem constant byte address 0x4 - core index']
  #allocation1 [shape = 'u32[144,128]{1,0:T(1,128)}', space=vmem, size = 0x12000, scoped, tag = 'internal scratch']
  %s0 = inlined_call_operand.vmem [shape: bf16[2,19,32,4], index: 0, kind: input, shape index: {}]
  %s1 = inlined_call_operand.vmem [shape: bf16[9,4,8], index: 1, kind: input, shape index: {}]
  %s2 = inlined_call_operand.vmem [shape: f32[1,8], index: 2, kind: input, shape index: {}]
  %s3 = inlined_call_operand.vmem [shape: f32[1,8], index: 3, kind: input, shape index: {}]
  %s4 = inlined_call_operand.vmem [shape: f32[2,8,64], index: 4, kind: output, shape index: {}]
  %s5 = sld [smem:[#allocation0]]
  $region49: #{down_block2d.1} parent=0
    _
  %s7 = ssub.s32 1, %s5
  %s8 = scalar_select 0, %s7, %s5
  loop: start=0, step=1, limit=4
  $region2: #{down_block2d.1} parent=0 // loop_pre_header
    _
  $region3: #{down_block2d.1} parent=0 // loop_header
    %s10 = sphi 0, %s14
    %p11 = scmp.ge.s32.totalorder %s10, 4
    %s20 = sphi 0, %s22
    %s23 = sphi 0, %s20
    %s24 = sphi 0, %s23
    %s40 = sphi 0, %s24
    %s44 = sphi 0, %s44
    %s46 = sphi 0, %s44
    %s47 = sphi 0, %s46
    %s61 = sphi 0, %s47
    %s65 = sphi 0, %s65
    %s67 = sphi 0, %s65
    %s68 = sphi 0, %s67
    %s82 = sphi 0, %s68
    %s86 = sphi 0, %s86
    %s88 = sphi 0, %s86
    %s89 = sphi 0, %s88
    %s103 = sphi 0, %s89
    %s109 = sphi 0, %s111
    %s112 = sphi 0, %s109
    %s113 = sphi 0, %s112
    %s129 = sphi 0, %s113
  $region4: #{down_block2d.1} parent=0 // loop_header_branch
    %13 = sbr.rel (%p11) target = $region8
  $region5: #{down_block2d.1} parent=0 // loop_body
    %s15 = ssub.s32 %s10, 1
    %s16 = ssub.s32 %s10, 2
    %s17 = sadd.s32 %s10, 1
    %s18 = ssub.s32 %s10, %s17
    %p19 = scmp.eq.s32.totalorder %s18, 0
    %s21 = sadd.s32 %s20, 1
    %s22 = scalar_select %p19, %s20, %s21
    %p25 = pneg %p19
    %p26 = scmp.eq.s32.totalorder %s10, 1
    %p27 = por %p25, %p26
    %p28 = scmp.ne.s32.totalorder %s20, %s23
    %p29 = scmp.eq.s32.totalorder %s10, 0
    %p30 = por %p28, %p29
    %p31 = scmp.ne.s32.totalorder %s20, %s23
    %p32 = scmp.eq.s32.totalorder %s15, 1
    %p33 = por %p31, %p32
    %p34 = scmp.ne.s32.totalorder %s23, %s24
    %p35 = scmp.eq.s32.totalorder %s15, 0
    %p36 = por %p34, %p35
    %p37 = scmp.ne.s32.totalorder %s23, %s24
    %p38 = scmp.eq.s32.totalorder %s16, 1
    %p39 = por %p37, %p38
    %p41 = scmp.ne.s32.totalorder %s24, %s40
    %p42 = scmp.eq.s32.totalorder %s16, 0
    %p43 = por %p41, %p42
    %s45 = sadd.s32 %s44, 1
    %p48 = scmp.eq.s32.totalorder %s10, 1
    %p49 = scmp.ne.s32.totalorder %s44, %s46
    %p50 = scmp.eq.s32.totalorder %s10, 0
    %p51 = por %p49, %p50
    %p52 = scmp.ne.s32.totalorder %s44, %s46
    %p53 = scmp.eq.s32.totalorder %s15, 1
    %p54 = por %p52, %p53
    %p55 = scmp.ne.s32.totalorder %s46, %s47
    %p56 = scmp.eq.s32.totalorder %s15, 0
    %p57 = por %p55, %p56
    %p58 = scmp.ne.s32.totalorder %s46, %s47
    %p59 = scmp.eq.s32.totalorder %s16, 1
    %p60 = por %p58, %p59
    %p62 = scmp.ne.s32.totalorder %s47, %s61
    %p63 = scmp.eq.s32.totalorder %s16, 0
    %p64 = por %p62, %p63
    %s66 = sadd.s32 %s65, 1
    %p69 = scmp.eq.s32.totalorder %s10, 1
    %p70 = scmp.ne.s32.totalorder %s65, %s67
    %p71 = scmp.eq.s32.totalorder %s10, 0
    %p72 = por %p70, %p71
    %p73 = scmp.ne.s32.totalorder %s65, %s67
    %p74 = scmp.eq.s32.totalorder %s15, 1
    %p75 = por %p73, %p74
    %p76 = scmp.ne.s32.totalorder %s67, %s68
    %p77 = scmp.eq.s32.totalorder %s15, 0
    %p78 = por %p76, %p77
    %p79 = scmp.ne.s32.totalorder %s67, %s68
    %p80 = scmp.eq.s32.totalorder %s16, 1
    %p81 = por %p79, %p80
    %p83 = scmp.ne.s32.totalorder %s68, %s82
    %p84 = scmp.eq.s32.totalorder %s16, 0
    %p85 = por %p83, %p84
    %s87 = sadd.s32 %s86, 1
    %p90 = scmp.eq.s32.totalorder %s10, 1
    %p91 = scmp.ne.s32.totalorder %s86, %s88
    %p92 = scmp.eq.s32.totalorder %s10, 0
    %p93 = por %p91, %p92
    %p94 = scmp.ne.s32.totalorder %s86, %s88
    %p95 = scmp.eq.s32.totalorder %s15, 1
    %p96 = por %p94, %p95
    %p97 = scmp.ne.s32.totalorder %s88, %s89
    %p98 = scmp.eq.s32.totalorder %s15, 0
    %p99 = por %p97, %p98
    %p100 = scmp.ne.s32.totalorder %s88, %s89
    %p101 = scmp.eq.s32.totalorder %s16, 1
    %p102 = por %p100, %p101
    %p104 = scmp.ne.s32.totalorder %s89, %s103
    %p105 = scmp.eq.s32.totalorder %s16, 0
    %p106 = por %p104, %p105
    %s107 = ssub.s32 %s10, %s17
    %p108 = scmp.eq.s32.totalorder %s107, 0
    %s110 = sadd.s32 %s109, 1
    %s111 = scalar_select %p108, %s109, %s110
    %p114 = pneg %p108
    %p115 = scmp.eq.s32.totalorder %s10, 1
    %p116 = por %p114, %p115
    %p117 = scmp.ne.s32.totalorder %s109, %s112
    %p118 = scmp.eq.s32.totalorder %s10, 0
    %p119 = por %p117, %p118
    %p120 = scmp.ne.s32.totalorder %s109, %s112
    %p121 = scmp.eq.s32.totalorder %s15, 1
    %p122 = por %p120, %p121
    %p123 = scmp.ne.s32.totalorder %s112, %s113
    %p124 = scmp.eq.s32.totalorder %s15, 0
    %p125 = por %p123, %p124
    %p126 = scmp.ne.s32.totalorder %s112, %s113
    %p127 = scmp.eq.s32.totalorder %s16, 1
    %p128 = por %p126, %p127
    %p130 = scmp.ne.s32.totalorder %s113, %s129
    %p131 = scmp.eq.s32.totalorder %s16, 0
    %p132 = por %p130, %p131
    %p133 = scmp.le.s32.totalorder 1, %s10
    %p134 = scmp.lt.s32.totalorder %s10, 3
    %p135 = pnand %p133, %p134
    %p136 = pneg %p135
    // Predicated region
    $region9: #{down_block2d.1} parent=5 // pred_check
      _
    $region10: #{down_block2d.1} parent=5 // pred_check_branch
      %138 = sbr.rel (%p135) target = $region12
    $region11: #{down_block2d.1} parent=5 // pred_region
      %s139 = ssub.s32 %s10, 1
      // Predicated region
      $region13: #{down_block2d.1} parent=11 // pred_check
        %p140 = pneg %p57
      $region14: #{down_block2d.1} parent=11 // pred_check_branch
        %142 = sbr.rel (%p140) target = $region16
      $region15: #{down_block2d.1} parent=11 // pred_region
        _
      $region16: #{down_block2d.1} parent=11 // pred_fallthru
        _
      // Predicated region
      $region17: #{down_block2d.1} parent=11 // pred_check
        %p143 = pneg %p78
      $region18: #{down_block2d.1} parent=11 // pred_check_branch
        %145 = sbr.rel (%p143) target = $region20
      $region19: #{down_block2d.1} parent=11 // pred_region
        _
      $region20: #{down_block2d.1} parent=11 // pred_fallthru
        _
      // Predicated region
      $region21: #{down_block2d.1} parent=11 // pred_check
        %p146 = pneg %p99
      $region22: #{down_block2d.1} parent=11 // pred_check_branch
        %148 = sbr.rel (%p146) target = $region24
      $region23: #{down_block2d.1} parent=11 // pred_region
        _
      $region24: #{down_block2d.1} parent=11 // pred_fallthru
        _
    $region12: #{down_block2d.1} parent=5 // pred_fallthru
      _
    %p149 = scmp.lt.s32.totalorder %s10, 2
    // Predicated region
    $region25: #{down_block2d.1} parent=5 // pred_check
      %p150 = pneg %p149
    $region26: #{down_block2d.1} parent=5 // pred_check_branch
      %152 = sbr.rel (%p150) target = $region28
    $region27: #{down_block2d.1} parent=5 // pred_region
      // Predicated region
      $region29: #{down_block2d.1} parent=27 // pred_check
        %p153 = pneg %p30
      $region30: #{down_block2d.1} parent=27 // pred_check_branch
        %155 = sbr.rel (%p153) target = $region32
      $region31: #{down_block2d.1} parent=27 // pred_region
        %p156 = scmp.lt.s32.totalorder %s10, 1
        %s157 = scalar_select %p156, %s10, 1
        %s158 = smul.addr %s157, 76
        %s159 = smul.addr %s158, 4
        %s160 = scalar_lea.vmem %s0, %s159
      $region32: #{down_block2d.1} parent=27 // pred_fallthru
        _
    $region28: #{down_block2d.1} parent=5 // pred_fallthru
      _
    %p161 = scmp.le.s32.totalorder 1, %s10
    %p162 = scmp.lt.s32.totalorder %s10, 3
    %p163 = pnand %p161, %p162
    %p164 = pneg %p163
    // Predicated region
    $region33: #{down_block2d.1} parent=5 // pred_check
      _
    $region34: #{down_block2d.1} parent=5 // pred_check_branch
      %166 = sbr.rel (%p163) target = $region36
    $region35: #{down_block2d.1} parent=5 // pred_region
      %s167 = ssub.s32 %s10, 1
      %p168 = scmp.lt.s32.totalorder %s15, 1
      %s169 = scalar_select %p168, %s15, 1
      %s170 = smul.addr %s169, 76
      %s171 = smul.addr %s170, 4
      %s172 = scalar_lea.vmem %s0, %s171
      %p173 = pneg %p36
      %p174 = pneg %p33
      %p175 = pneg %p57
      %p176 = pneg %p54
      %p177 = pneg %p78
      %p178 = pneg %p75
      %p179 = pneg %p99
      %p180 = pneg %p96
      %p181 = pneg %p125
      %p182 = pneg %p122
      %p183 = scmp.lt.s32.totalorder %s15, 1
      %s184 = scalar_select %p183, %s15, 1
      %s185 = smul.addr %s184, 8
      %s186 = scalar_lea.vmem %s4, %s185
      %p187 = scmp.lt.s32.totalorder %s15, 1
      %s188 = scalar_select %p187, %s15, 1
      %s189 = smul.addr %s188, 76
      %s190 = smul.addr %s189, 4
      %s191 = scalar_lea.vmem %s0, %s190
      %p192 = scmp.lt.s32.totalorder %s15, 1
      %s193 = scalar_select %p192, %s15, 1
      %s194 = smul.addr %s193, 8
      %s195 = scalar_lea.vmem %s4, %s194
      %v197 = vld [vmem:[%s2] sm:$0x1]
      %v198 = vld [vmem:[%s3] sm:$0x1]
      %v199 = vld [vmem:[%s191] sm:$0xf]
      %v200 = vld [vmem:[%s191 + $0x4] sm:$0xf]
      %v201 = vld [vmem:[%s191 + $0x8] sm:$0xf]
      %v202 = vld [vmem:[%s191 + $0xc] sm:$0xf]
      %v203 = vld [vmem:[%s191 + $0x10] sm:$0xf]
      %v204 = vld [vmem:[%s191 + $0x14] sm:$0xf]
      %v205 = vld [vmem:[%s191 + $0x18] sm:$0xf]
      %v206 = vld [vmem:[%s191 + $0x1c] sm:$0xf]
      %v207 = vld [vmem:[%s191 + $0x20] sm:$0xf]
      %v208 = vld [vmem:[%s191 + $0x24] sm:$0xf]
      %v209 = vld [vmem:[%s191 + $0x28] sm:$0xf]
      %v210 = vld [vmem:[%s191 + $0x2c] sm:$0xf]
      %v211 = vld [vmem:[%s191 + $0x30] sm:$0xf]
      %v212 = vld [vmem:[%s191 + $0x34] sm:$0xf]
      %v213 = vld [vmem:[%s191 + $0x38] sm:$0xf]
      %v214 = vld [vmem:[%s191 + $0x3c] sm:$0xf]
      %v215 = vld [vmem:[%s191 + $0x40] sm:$0xf]
      %v216 = vld [vmem:[%s191 + $0x44] sm:$0xf]
      %v217 = vld [vmem:[%s191 + $0x48] sm:$0xf]
      %v218 = vld [vmem:[%s191 + $0x4c] sm:$0xf]
      %v219 = vld [vmem:[%s191 + $0x50] sm:$0xf]
      %v220 = vld [vmem:[%s191 + $0x54] sm:$0xf]
      %v221 = vld [vmem:[%s191 + $0x58] sm:$0xf]
      %v222 = vld [vmem:[%s191 + $0x5c] sm:$0xf]
      %v223 = vld [vmem:[%s191 + $0x60] sm:$0xf]
      %v224 = vld [vmem:[%s191 + $0x64] sm:$0xf]
      %v225 = vld [vmem:[%s191 + $0x68] sm:$0xf]
      %v226 = vld [vmem:[%s191 + $0x6c] sm:$0xf]
      %v227 = vld [vmem:[%s191 + $0x70] sm:$0xf]
      %v228 = vld [vmem:[%s191 + $0x74] sm:$0xf]
      %v229 = vld [vmem:[%s191 + $0x78] sm:$0xf]
      %v230 = vld [vmem:[%s191 + $0x7c] sm:$0xf]
      %v231 = vld [vmem:[%s191 + $0x80] sm:$0xf]
      %v232 = vld [vmem:[%s191 + $0x84] sm:$0xf]
      %v233 = vld [vmem:[%s191 + $0x88] sm:$0xf]
      %v234 = vld [vmem:[%s191 + $0x8c] sm:$0xf]
      %v235 = vld [vmem:[%s191 + $0x90] sm:$0xf]
      %v236 = vld [vmem:[%s191 + $0x94] sm:$0xf]
      %v237 = vld [vmem:[%s191 + $0x98] sm:$0xf]
      %v238 = vld [vmem:[%s191 + $0x9c] sm:$0xf]
      %v239 = vld [vmem:[%s191 + $0xa0] sm:$0xf]
      %v240 = vld [vmem:[%s191 + $0xa4] sm:$0xf]
      %v241 = vld [vmem:[%s191 + $0xa8] sm:$0xf]
      %v242 = vld [vmem:[%s191 + $0xac] sm:$0xf]
      %v243 = vld [vmem:[%s191 + $0xb0] sm:$0xf]
      %v244 = vld [vmem:[%s191 + $0xb4] sm:$0xf]
      %v245 = vld [vmem:[%s191 + $0xb8] sm:$0xf]
      %v246 = vld [vmem:[%s191 + $0xbc] sm:$0xf]
      %v247 = vld [vmem:[%s191 + $0xc0] sm:$0xf]
      %v248 = vld [vmem:[%s191 + $0xc4] sm:$0xf]
      %v249 = vld [vmem:[%s191 + $0xc8] sm:$0xf]
      %v250 = vld [vmem:[%s191 + $0xcc] sm:$0xf]
      %v251 = vld [vmem:[%s191 + $0xd0] sm:$0xf]
      %v252 = vld [vmem:[%s191 + $0xd4] sm:$0xf]
      %v253 = vld [vmem:[%s191 + $0xd8] sm:$0xf]
      %v254 = vld [vmem:[%s191 + $0xdc] sm:$0xf]
      %v255 = vld [vmem:[%s191 + $0xe0] sm:$0xf]
      %v256 = vld [vmem:[%s191 + $0xe4] sm:$0xf]
      %v257 = vld [vmem:[%s191 + $0xe8] sm:$0xf]
      %v258 = vld [vmem:[%s191 + $0xec] sm:$0xf]
      %v259 = vld [vmem:[%s191 + $0xf0] sm:$0xf]
      %v260 = vld [vmem:[%s191 + $0xf4] sm:$0xf]
      %v261 = vld [vmem:[%s191 + $0xf8] sm:$0xf]
      %v262 = vld [vmem:[%s191 + $0xfc] sm:$0xf]
      %v263 = vld [vmem:[%s191 + $0x100] sm:$0xf]
      %v264 = vld [vmem:[%s191 + $0x104] sm:$0xf]
      %v265 = vld [vmem:[%s191 + $0x108] sm:$0xf]
      %v266 = vld [vmem:[%s191 + $0x10c] sm:$0xf]
      %v267 = vld [vmem:[%s191 + $0x110] sm:$0xf]
      %v268 = vld [vmem:[%s191 + $0x114] sm:$0xf]
      %v269 = vld [vmem:[%s191 + $0x118] sm:$0xf]
      %v270 = vld [vmem:[%s191 + $0x11c] sm:$0xf]
      %v271 = vld [vmem:[%s191 + $0x120] sm:$0xf]
      %v272 = vld [vmem:[%s191 + $0x124] sm:$0xf]
      %v273 = vld [vmem:[%s191 + $0x128] sm:$0xf]
      %v274 = vld [vmem:[%s191 + $0x12c] sm:$0xf]
      %v275 = vld [vmem:[%s1] sm:$0x3]
      %v352 = vunpack.c.l.b16 %v199
      %v353 = vunpack.c.l.b16 %v200
      %v354 = vunpack.c.l.b16 %v201
      %v355 = vunpack.c.l.b16 %v202
      %v356 = vunpack.c.l.b16 %v203
      %v357 = vunpack.c.l.b16 %v204
      %v358 = vunpack.c.l.b16 %v205
      %v359 = vunpack.c.l.b16 %v206
      %v360 = vunpack.c.l.b16 %v207
      %v361 = vunpack.c.l.b16 %v208
      %v362 = vunpack.c.l.b16 %v209
      %v363 = vunpack.c.l.b16 %v210
      %v364 = vunpack.c.l.b16 %v211
      %v365 = vunpack.c.l.b16 %v212
      %v366 = vunpack.c.l.b16 %v213
      %v367 = vunpack.c.l.b16 %v214
      %v368 = vunpack.c.l.b16 %v215
      %v369 = vunpack.c.l.b16 %v216
      %v370 = vunpack.c.l.b16 %v217
      %v371 = vunpack.c.l.b16 %v218
      %v372 = vunpack.c.l.b16 %v219
      %v373 = vunpack.c.l.b16 %v220
      %v374 = vunpack.c.l.b16 %v221
      %v375 = vunpack.c.l.b16 %v222
      %v376 = vunpack.c.l.b16 %v223
      %v377 = vunpack.c.l.b16 %v224
      %v378 = vunpack.c.l.b16 %v225
      %v379 = vunpack.c.l.b16 %v226
      %v380 = vunpack.c.l.b16 %v227
      %v381 = vunpack.c.l.b16 %v228
      %v382 = vunpack.c.l.b16 %v229
      %v383 = vunpack.c.l.b16 %v230
      %v384 = vunpack.c.l.b16 %v231
      %v385 = vunpack.c.l.b16 %v232
      %v386 = vunpack.c.l.b16 %v233
      %v387 = vunpack.c.l.b16 %v234
      %v388 = vunpack.c.l.b16 %v235
      %v389 = vunpack.c.l.b16 %v236
      %v390 = vunpack.c.l.b16 %v237
      %v391 = vunpack.c.l.b16 %v238
      %v392 = vunpack.c.l.b16 %v239
      %v393 = vunpack.c.l.b16 %v240
      %v394 = vunpack.c.l.b16 %v241
      %v395 = vunpack.c.l.b16 %v242
      %v396 = vunpack.c.l.b16 %v243
      %v397 = vunpack.c.l.b16 %v244
      %v398 = vunpack.c.l.b16 %v245
      %v399 = vunpack.c.l.b16 %v246
      %v400 = vunpack.c.l.b16 %v247
      %v401 = vunpack.c.l.b16 %v248
      %v402 = vunpack.c.l.b16 %v249
      %v403 = vunpack.c.l.b16 %v250
      %v404 = vunpack.c.l.b16 %v251
      %v405 = vunpack.c.l.b16 %v252
      %v406 = vunpack.c.l.b16 %v253
      %v407 = vunpack.c.l.b16 %v254
      %v408 = vunpack.c.l.b16 %v255
      %v409 = vunpack.c.l.b16 %v256
      %v410 = vunpack.c.l.b16 %v257
      %v411 = vunpack.c.l.b16 %v258
      %v412 = vunpack.c.l.b16 %v259
      %v413 = vunpack.c.l.b16 %v260
      %v414 = vunpack.c.l.b16 %v261
      %v415 = vunpack.c.l.b16 %v262
      %v416 = vunpack.c.l.b16 %v263
      %v417 = vunpack.c.l.b16 %v264
      %v418 = vunpack.c.l.b16 %v265
      %v419 = vunpack.c.l.b16 %v266
      %v420 = vunpack.c.l.b16 %v267
      %v421 = vunpack.c.l.b16 %v268
      %v422 = vunpack.c.l.b16 %v269
      %v423 = vunpack.c.l.b16 %v270
      %v424 = vunpack.c.l.b16 %v271
      %v425 = vunpack.c.l.b16 %v272
      %v426 = vunpack.c.l.b16 %v273
      %v427 = vunpack.c.l.b16 %v274
      %v428 = vpack.c.b16 %v353, %v352
      %v429 = vpack.c.b16 %v355, %v354
      %v430 = vpack.c.b16 %v357, %v356
      %v431 = vpack.c.b16 %v359, %v358
      %v432 = vpack.c.b16 %v361, %v360
      %v433 = vpack.c.b16 %v363, %v362
      %v434 = vpack.c.b16 %v365, %v364
      %v435 = vpack.c.b16 %v367, %v366
      %v436 = vpack.c.b16 %v369, %v368
      %v437 = vpack.c.b16 %v371, %v370
      %v438 = vpack.c.b16 %v373, %v372
      %v439 = vpack.c.b16 %v375, %v374
      %v440 = vpack.c.b16 %v377, %v376
      %v441 = vpack.c.b16 %v379, %v378
      %v442 = vpack.c.b16 %v381, %v380
      %v443 = vpack.c.b16 %v383, %v382
      %v444 = vpack.c.b16 %v385, %v384
      %v445 = vpack.c.b16 %v387, %v386
      %v446 = vpack.c.b16 %v389, %v388
      %v447 = vpack.c.b16 %v391, %v390
      %v448 = vpack.c.b16 %v393, %v392
      %v449 = vpack.c.b16 %v395, %v394
      %v450 = vpack.c.b16 %v397, %v396
      %v451 = vpack.c.b16 %v399, %v398
      %v452 = vpack.c.b16 %v401, %v400
      %v453 = vpack.c.b16 %v403, %v402
      %v454 = vpack.c.b16 %v405, %v404
      %v455 = vpack.c.b16 %v407, %v406
      %v456 = vpack.c.b16 %v409, %v408
      %v457 = vpack.c.b16 %v411, %v410
      %v458 = vpack.c.b16 %v413, %v412
      %v459 = vpack.c.b16 %v415, %v414
      %v460 = vpack.c.b16 %v417, %v416
      %v461 = vpack.c.b16 %v419, %v418
      %v462 = vpack.c.b16 %v421, %v420
      %v463 = vpack.c.b16 %v423, %v422
      %v464 = vpack.c.b16 %v425, %v424
      %v465 = vpack.c.b16 %v427, %v426
      %vm466 = vcmask 31744
      %v468 = vsel %vm466, %v428, 0
      %v471 = vsel %vm466, %v429, 0
      %v474 = vsel %vm466, %v430, 0
      %v477 = vsel %vm466, %v431, 0
      %v480 = vsel %vm466, %v432, 0
      %v483 = vsel %vm466, %v433, 0
      %v486 = vsel %vm466, %v434, 0
      %v489 = vsel %vm466, %v435, 0
      %v492 = vsel %vm466, %v436, 0
      %v495 = vsel %vm466, %v437, 0
      %v498 = vsel %vm466, %v438, 0
      %v501 = vsel %vm466, %v439, 0
      %v504 = vsel %vm466, %v440, 0
      %v507 = vsel %vm466, %v441, 0
      %v510 = vsel %vm466, %v442, 0
      %v513 = vsel %vm466, %v443, 0
      %v516 = vsel %vm466, %v444, 0
      %v519 = vsel %vm466, %v445, 0
      %v522 = vsel %vm466, %v446, 0
      %v525 = vsel %vm466, %v447, 0
      %v528 = vsel %vm466, %v448, 0
      %v531 = vsel %vm466, %v449, 0
      %v534 = vsel %vm466, %v450, 0
      %v537 = vsel %vm466, %v451, 0
      %v540 = vsel %vm466, %v452, 0
      %v543 = vsel %vm466, %v453, 0
      %v546 = vsel %vm466, %v454, 0
      %v549 = vsel %vm466, %v455, 0
      %v552 = vsel %vm466, %v456, 0
      %v555 = vsel %vm466, %v457, 0
      %v558 = vsel %vm466, %v458, 0
      %v561 = vsel %vm466, %v459, 0
      %v564 = vsel %vm466, %v460, 0
      %v567 = vsel %vm466, %v461, 0
      %v570 = vsel %vm466, %v462, 0
      %v573 = vsel %vm466, %v463, 0
      %v576 = vsel %vm466, %v464, 0
      %v579 = vsel %vm466, %v465, 0
      %vm581 = vcmask 1041408
      %v583 = vsel %vm581, %v275, 0
      %585 = vmatprep.subr.bf16.mxu0 0
      %586 = vmatpush1.bf16.msra.mxu0 %v583
      %587 = vmatprep.subr.bf16.mxu0 0
      %588 = vmatpush1.bf16.msra.mxu0 0
      %589 = vmatprep.subr.bf16.mxu0 0
      %590 = vmatpush1.bf16.msra.mxu0 0
      %591 = vmatprep.subr.bf16.mxu0 0
      %592 = vmatpush1.bf16.msra.mxu0 0
      %593 = vmatprep.subr.bf16.mxu0 0
      %594 = vmatpush1.bf16.msra.mxu0 0
      %595 = vmatprep.subr.bf16.mxu0 0
      %596 = vmatpush1.bf16.msra.mxu0 0
      %597 = vmatprep.subr.bf16.mxu0 0
      %598 = vmatpush1.bf16.msra.mxu0 0
      %599 = vmatprep.subr.bf16.mxu0 0
      %600 = vmatpush1.bf16.msra.mxu0 0
      %601 = vmatprep.subr.bf16.mxu0 0
      %602 = vmatpush1.bf16.msra.mxu0 0
      %603 = vmatprep.subr.bf16.mxu0 0
      %604 = vmatpush1.bf16.msra.mxu0 0
      %605 = vmatprep.subr.bf16.mxu0 0
      %606 = vmatpush1.bf16.msra.mxu0 0
      %607 = vmatprep.subr.bf16.mxu0 0
      %608 = vmatpush1.bf16.msra.mxu0 0
      %609 = vmatprep.subr.bf16.mxu0 0
      %610 = vmatpush1.bf16.msra.mxu0 0
      %611 = vmatprep.subr.bf16.mxu0 0
      %612 = vmatpush1.bf16.msra.mxu0 0
      %613 = vmatprep.subr.bf16.mxu0 0
      %614 = vmatpush1.bf16.msra.mxu0 0
      %615 = vmatprep.subr.bf16.mxu0 0
      %616 = vmatpush1.bf16.msra.mxu0 0
      %617 = vmatprep.mubr.bf16.mxu0 0
      %618 = vmatmul.mubr.bf16.gmra.mrb[0].mxu0 %v468
      %v619 = vpop.f32.mrb[0].mxu0
      %v620 = vadd.f32 0.0, %v619
      %v621 = vpop.f32.mrb[0].mxu0
      %v622 = vpop.f32.mrb[0].mxu0
      %v623 = vadd.f32 0.0, %v622
      %v624 = vpop.f32.mrb[0].mxu0
      %625 = vmatprep.mubr.bf16.mxu0 0
      %626 = vmatmul.mubr.bf16.gmra.mrb[0].mxu0 %v471
      %v627 = vpop.f32.mrb[0].mxu0
      %v628 = vpop.f32.mrb[0].mxu0
      %v629 = vpop.f32.mrb[0].mxu0
      %v630 = vpop.f32.mrb[0].mxu0
      %631 = vmatprep.mubr.bf16.mxu0 0
      %632 = vmatmul.mubr.bf16.gmra.mrb[0].mxu0 %v474
      %v633 = vpop.f32.mrb[0].mxu0
      %v634 = vadd.f32 0.0, %v633
      %v635 = vpop.f32.mrb[0].mxu0
      %v636 = vpop.f32.mrb[0].mxu0
      %v637 = vadd.f32 0.0, %v636
      %v638 = vpop.f32.mrb[0].mxu0
      %639 = vmatprep.mubr.bf16.mxu0 0
      %640 = vmatmul.mubr.bf16.gmra.mrb[0].mxu0 %v477
      %v641 = vpop.f32.mrb[0].mxu0
      %v642 = vpop.f32.mrb[0].mxu0
      %v643 = vpop.f32.mrb[0].mxu0
      %v644 = vpop.f32.mrb[0].mxu0
      %645 = vmatprep.mubr.bf16.mxu0 0
      %646 = vmatmul.mubr.bf16.gmra.mrb[0].mxu0 %v480
      %v647 = vpop.f32.mrb[0].mxu0
      %v648 = vadd.f32 0.0, %v647
      %v649 = vpop.f32.mrb[0].mxu0
      %v650 = vpop.f32.mrb[0].mxu0
      %v651 = vadd.f32 0.0, %v650
      %v652 = vpop.f32.mrb[0].mxu0
      %653 = vmatprep.mubr.bf16.mxu0 0
      %654 = vmatmul.mubr.bf16.gmra.mrb[0].mxu0 %v483
      %v655 = vpop.f32.mrb[0].mxu0
      %v656 = vpop.f32.mrb[0].mxu0
      %v657 = vpop.f32.mrb[0].mxu0
      %v658 = vpop.f32.mrb[0].mxu0
      %659 = vmatprep.mubr.bf16.mxu0 0
      %660 = vmatmul.mubr.bf16.gmra.mrb[0].mxu0 %v486
      %v661 = vpop.f32.mrb[0].mxu0
      %v662 = vadd.f32 0.0, %v661
      %v663 = vpop.f32.mrb[0].mxu0
      %v664 = vpop.f32.mrb[0].mxu0
      %v665 = vadd.f32 0.0, %v664
      %v666 = vpop.f32.mrb[0].mxu0
      %667 = vmatprep.mubr.bf16.mxu0 0
      %668 = vmatmul.mubr.bf16.gmra.mrb[0].mxu0 %v489
      %v669 = vpop.f32.mrb[0].mxu0
      %v670 = vpop.f32.mrb[0].mxu0
      %v671 = vpop.f32.mrb[0].mxu0
      %v672 = vpop.f32.mrb[0].mxu0
      %673 = vmatprep.mubr.bf16.mxu0 0
      %674 = vmatmul.mubr.bf16.gmra.mrb[0].mxu0 %v492
      %v675 = vpop.f32.mrb[0].mxu0
      %v676 = vadd.f32 0.0, %v675
      %v677 = vpop.f32.mrb[0].mxu0
      %v678 = vpop.f32.mrb[0].mxu0
      %v679 = vadd.f32 0.0, %v678
      %v680 = vpop.f32.mrb[0].mxu0
      %681 = vmatprep.mubr.bf16.mxu0 0
      %682 = vmatmul.mubr.bf16.gmra.mrb[0].mxu0 %v495
      %v683 = vpop.f32.mrb[0].mxu0
      %v684 = vpop.f32.mrb[0].mxu0
      %v685 = vpop.f32.mrb[0].mxu0
      %v686 = vpop.f32.mrb[0].mxu0
      %687 = vmatprep.mubr.bf16.mxu0 0
      %688 = vmatmul.mubr.bf16.gmra.mrb[0].mxu0 %v498
      %v689 = vpop.f32.mrb[0].mxu0
      %v690 = vadd.f32 0.0, %v689
      %v691 = vpop.f32.mrb[0].mxu0
      %v692 = vpop.f32.mrb[0].mxu0
      %v693 = vadd.f32 0.0, %v692
      %v694 = vpop.f32.mrb[0].mxu0
      %695 = vmatprep.mubr.bf16.mxu0 0
      %696 = vmatmul.mubr.bf16.gmra.mrb[0].mxu0 %v501
      %v697 = vpop.f32.mrb[0].mxu0
      %v698 = vpop.f32.mrb[0].mxu0
      %v699 = vpop.f32.mrb[0].mxu0
      %v700 = vpop.f32.mrb[0].mxu0
      %701 = vmatprep.mubr.bf16.mxu0 0
      %702 = vmatmul.mubr.bf16.gmra.mrb[0].mxu0 %v504
      %v703 = vpop.f32.mrb[0].mxu0
      %v704 = vadd.f32 0.0, %v703
      %v705 = vpop.f32.mrb[0].mxu0
      %v706 = vpop.f32.mrb[0].mxu0
      %v707 = vadd.f32 0.0, %v706
      %v708 = vpop.f32.mrb[0].mxu0
      %709 = vmatprep.mubr.bf16.mxu0 0
      %710 = vmatmul.mubr.bf16.gmra.mrb[0].mxu0 %v507
      %v711 = vpop.f32.mrb[0].mxu0
      %v712 = vpop.f32.mrb[0].mxu0
      %v713 = vpop.f32.mrb[0].mxu0
      %v714 = vpop.f32.mrb[0].mxu0
      %715 = vmatprep.mubr.bf16.mxu0 0
      %716 = vmatmul.mubr.bf16.gmra.mrb[0].mxu0 %v510
      %v717 = vpop.f32.mrb[0].mxu0
      %v718 = vadd.f32 0.0, %v717
      %v719 = vpop.f32.mrb[0].mxu0
      %v720 = vpop.f32.mrb[0].mxu0
      %v721 = vadd.f32 0.0, %v720
      %v722 = vpop.f32.mrb[0].mxu0
      %723 = vmatprep.mubr.bf16.mxu0 0
      %724 = vmatmul.mubr.bf16.gmra.mrb[0].mxu0 %v513
      %v725 = vpop.f32.mrb[0].mxu0
      %v726 = vpop.f32.mrb[0].mxu0
      %v727 = vpop.f32.mrb[0].mxu0
      %v728 = vpop.f32.mrb[0].mxu0
      %729 = vmatprep.mubr.bf16.mxu0 0
      %730 = vmatmul.mubr.bf16.gmra.mrb[0].mxu0 %v516
      %v731 = vpop.f32.mrb[0].mxu0
      %v732 = vadd.f32 0.0, %v731
      %v733 = vpop.f32.mrb[0].mxu0
      %v734 = vpop.f32.mrb[0].mxu0
      %v735 = vadd.f32 0.0, %v734
      %v736 = vpop.f32.mrb[0].mxu0
      %737 = vmatprep.mubr.bf16.mxu0 0
      %738 = vmatmul.mubr.bf16.gmra.mrb[0].mxu0 %v519
      %v739 = vpop.f32.mrb[0].mxu0
      %v740 = vpop.f32.mrb[0].mxu0
      %v741 = vpop.f32.mrb[0].mxu0
      %v742 = vpop.f32.mrb[0].mxu0
      %743 = vmatprep.mubr.bf16.mxu0 0
      %744 = vmatmul.mubr.bf16.gmra.mrb[0].mxu0 %v522
      %v745 = vpop.f32.mrb[0].mxu0
      %v746 = vadd.f32 0.0, %v745
      %v747 = vpop.f32.mrb[0].mxu0
      %v748 = vpop.f32.mrb[0].mxu0
      %v749 = vadd.f32 0.0, %v748
      %v750 = vpop.f32.mrb[0].mxu0
      %751 = vmatprep.mubr.bf16.mxu0 0
      %752 = vmatmul.mubr.bf16.gmra.mrb[0].mxu0 %v525
      %v753 = vpop.f32.mrb[0].mxu0
      %v754 = vpop.f32.mrb[0].mxu0
      %v755 = vpop.f32.mrb[0].mxu0
      %v756 = vpop.f32.mrb[0].mxu0
      %757 = vmatprep.mubr.bf16.mxu0 0
      %758 = vmatmul.mubr.bf16.gmra.mrb[0].mxu0 %v528
      %v759 = vpop.f32.mrb[0].mxu0
      %v760 = vadd.f32 0.0, %v759
      %v761 = vpop.f32.mrb[0].mxu0
      %v762 = vpop.f32.mrb[0].mxu0
      %v763 = vadd.f32 0.0, %v762
      %v764 = vpop.f32.mrb[0].mxu0
      %765 = vmatprep.mubr.bf16.mxu0 0
      %766 = vmatmul.mubr.bf16.gmra.mrb[0].mxu0 %v531
      %v767 = vpop.f32.mrb[0].mxu0
      %v768 = vpop.f32.mrb[0].mxu0
      %v769 = vpop.f32.mrb[0].mxu0
      %v770 = vpop.f32.mrb[0].mxu0
      %771 = vmatprep.mubr.bf16.mxu0 0
      %772 = vmatmul.mubr.bf16.gmra.mrb[0].mxu0 %v534
      %v773 = vpop.f32.mrb[0].mxu0
      %v774 = vadd.f32 0.0, %v773
      %v775 = vpop.f32.mrb[0].mxu0
      %v776 = vpop.f32.mrb[0].mxu0
      %v777 = vadd.f32 0.0, %v776
      %v778 = vpop.f32.mrb[0].mxu0
      %779 = vmatprep.mubr.bf16.mxu0 0
      %780 = vmatmul.mubr.bf16.gmra.mrb[0].mxu0 %v537
      %v781 = vpop.f32.mrb[0].mxu0
      %v782 = vpop.f32.mrb[0].mxu0
      %v783 = vpop.f32.mrb[0].mxu0
      %v784 = vpop.f32.mrb[0].mxu0
      %785 = vmatprep.mubr.bf16.mxu0 0
      %786 = vmatmul.mubr.bf16.gmra.mrb[0].mxu0 %v540
      %v787 = vpop.f32.mrb[0].mxu0
      %v788 = vadd.f32 0.0, %v787
      %v789 = vpop.f32.mrb[0].mxu0
      %v790 = vpop.f32.mrb[0].mxu0
      %v791 = vadd.f32 0.0, %v790
      %v792 = vpop.f32.mrb[0].mxu0
      %793 = vmatprep.mubr.bf16.mxu0 0
      %794 = vmatmul.mubr.bf16.gmra.mrb[0].mxu0 %v543
      %v795 = vpop.f32.mrb[0].mxu0
      %v796 = vpop.f32.mrb[0].mxu0
      %v797 = vpop.f32.mrb[0].mxu0
      %v798 = vpop.f32.mrb[0].mxu0
      %799 = vmatprep.mubr.bf16.mxu0 0
      %800 = vmatmul.mubr.bf16.gmra.mrb[0].mxu0 %v546
      %v801 = vpop.f32.mrb[0].mxu0
      %v802 = vadd.f32 0.0, %v801
      %v803 = vpop.f32.mrb[0].mxu0
      %v804 = vpop.f32.mrb[0].mxu0
      %v805 = vadd.f32 0.0, %v804
      %v806 = vpop.f32.mrb[0].mxu0
      %807 = vmatprep.mubr.bf16.mxu0 0
      %808 = vmatmul.mubr.bf16.gmra.mrb[0].mxu0 %v549
      %v809 = vpop.f32.mrb[0].mxu0
      %v810 = vpop.f32.mrb[0].mxu0
      %v811 = vpop.f32.mrb[0].mxu0
      %v812 = vpop.f32.mrb[0].mxu0
      %813 = vmatprep.mubr.bf16.mxu0 0
      %814 = vmatmul.mubr.bf16.gmra.mrb[0].mxu0 %v552
      %v815 = vpop.f32.mrb[0].mxu0
      %v816 = vadd.f32 0.0, %v815
      %v817 = vpop.f32.mrb[0].mxu0
      %v818 = vpop.f32.mrb[0].mxu0
      %v819 = vadd.f32 0.0, %v818
      %v820 = vpop.f32.mrb[0].mxu0
      %821 = vmatprep.mubr.bf16.mxu0 0
      %822 = vmatmul.mubr.bf16.gmra.mrb[0].mxu0 %v555
      %v823 = vpop.f32.mrb[0].mxu0
      %v824 = vpop.f32.mrb[0].mxu0
      %v825 = vpop.f32.mrb[0].mxu0
      %v826 = vpop.f32.mrb[0].mxu0
      %827 = vmatprep.mubr.bf16.mxu0 0
      %828 = vmatmul.mubr.bf16.gmra.mrb[0].mxu0 %v558
      %v829 = vpop.f32.mrb[0].mxu0
      %v830 = vadd.f32 0.0, %v829
      %v831 = vpop.f32.mrb[0].mxu0
      %v832 = vpop.f32.mrb[0].mxu0
      %v833 = vadd.f32 0.0, %v832
      %v834 = vpop.f32.mrb[0].mxu0
      %835 = vmatprep.mubr.bf16.mxu0 0
      %836 = vmatmul.mubr.bf16.gmra.mrb[0].mxu0 %v561
      %v837 = vpop.f32.mrb[0].mxu0
      %v838 = vpop.f32.mrb[0].mxu0
      %v839 = vpop.f32.mrb[0].mxu0
      %v840 = vpop.f32.mrb[0].mxu0
      %841 = vmatprep.mubr.bf16.mxu0 0
      %842 = vmatmul.mubr.bf16.gmra.mrb[0].mxu0 %v564
      %v843 = vpop.f32.mrb[0].mxu0
      %v844 = vpop.f32.mrb[0].mxu0
      %v845 = vpop.f32.mrb[0].mxu0
      %v846 = vpop.f32.mrb[0].mxu0
      %847 = vmatprep.mubr.bf16.mxu0 0
      %848 = vmatmul.mubr.bf16.gmra.mrb[0].mxu0 %v567
      %v849 = vpop.f32.mrb[0].mxu0
      %v850 = vpop.f32.mrb[0].mxu0
      %v851 = vpop.f32.mrb[0].mxu0
      %v852 = vpop.f32.mrb[0].mxu0
      %853 = vmatprep.mubr.bf16.mxu0 0
      %854 = vmatmul.mubr.bf16.gmra.mrb[0].mxu0 %v570
      %v855 = vpop.f32.mrb[0].mxu0
      %v856 = vpop.f32.mrb[0].mxu0
      %v857 = vpop.f32.mrb[0].mxu0
      %v858 = vpop.f32.mrb[0].mxu0
      %859 = vmatprep.mubr.bf16.mxu0 0
      %860 = vmatmul.mubr.bf16.gmra.mrb[0].mxu0 %v573
      %v861 = vpop.f32.mrb[0].mxu0
      %v862 = vpop.f32.mrb[0].mxu0
      %v863 = vpop.f32.mrb[0].mxu0
      %v864 = vpop.f32.mrb[0].mxu0
      %865 = vmatprep.mubr.bf16.mxu0 0
      %866 = vmatmul.mubr.bf16.gmra.mrb[0].mxu0 %v576
      %v867 = vpop.f32.mrb[0].mxu0
      %v868 = vpop.f32.mrb[0].mxu0
      %v869 = vpop.f32.mrb[0].mxu0
      %v870 = vpop.f32.mrb[0].mxu0
      %871 = vmatprep.mubr.bf16.mxu0 0
      %872 = vmatmul.mubr.bf16.gmra.mrb[0].mxu0 %v579
      %v873 = vpop.f32.mrb[0].mxu0
      %v874 = vpop.f32.mrb[0].mxu0
      %v875 = vpop.f32.mrb[0].mxu0
      %v876 = vpop.f32.mrb[0].mxu0
      %877 = vdwg.mxu0
      %s878 = scalar_lea.vmem %s1, 2
      %v879 = vld [vmem:[%s878] sm:$0x3]
      %v881 = vsel %vm581, %v879, 0
      %883 = vmatprep.subr.bf16.mxu0 0
      %884 = vmatpush1.bf16.msra.mxu0 %v881
      %885 = vmatprep.subr.bf16.mxu0 0
      %886 = vmatpush1.bf16.msra.mxu0 0
      %887 = vmatprep.subr.bf16.mxu0 0
      %888 = vmatpush1.bf16.msra.mxu0 0
      %889 = vmatprep.subr.bf16.mxu0 0
      %890 = vmatpush1.bf16.msra.mxu0 0
      %891 = vmatprep.subr.bf16.mxu0 0
      %892 = vmatpush1.bf16.msra.mxu0 0
      %893 = vmatprep.subr.bf16.mxu0 0
      %894 = vmatpush1.bf16.msra.mxu0 0
      %895 = vmatprep.subr.bf16.mxu0 0
      %896 = vmatpush1.bf16.msra.mxu0 0
      %897 = vmatprep.subr.bf16.mxu0 0
      %898 = vmatpush1.bf16.msra.mxu0 0
      %899 = vmatprep.subr.bf16.mxu0 0
      %900 = vmatpush1.bf16.msra.mxu0 0
      %901 = vmatprep.subr.bf16.mxu0 0
      %902 = vmatpush1.bf16.msra.mxu0 0
      %903 = vmatprep.subr.bf16.mxu0 0
      %904 = vmatpush1.bf16.msra.mxu0 0
      %905 = vmatprep.subr.bf16.mxu0 0
      %906 = vmatpush1.bf16.msra.mxu0 0
      %907 = vmatprep.subr.bf16.mxu0 0
      %908 = vmatpush1.bf16.msra.mxu0 0
      %909 = vmatprep.subr.bf16.mxu0 0
      %910 = vmatpush1.bf16.msra.mxu0 0
      %911 = vmatprep.subr.bf16.mxu0 0
      %912 = vmatpush1.bf16.msra.mxu0 0
      %913 = vmatprep.subr.bf16.mxu0 0
      %914 = vmatpush1.bf16.msra.mxu0 0
      %915 = vmatprep.mubr.bf16.mxu0 0
      %916 = vmatmul.mubr.bf16.gmra.mrb[0].mxu0 %v468
      %v917 = vpop.f32.mrb[0].mxu0
      %v918 = vadd.f32 0.0, %v917
      %v919 = vpop.f32.mrb[0].mxu0
      %v920 = vpop.f32.mrb[0].mxu0
      %v921 = vadd.f32 0.0, %v920
      %v922 = vpop.f32.mrb[0].mxu0
      %923 = vmatprep.mubr.bf16.mxu0 0
      %924 = vmatmul.mubr.bf16.gmra.mrb[0].mxu0 %v471
      %v925 = vpop.f32.mrb[0].mxu0
      %v926 = vadd.f32 0.0, %v925
      %v927 = vpop.f32.mrb[0].mxu0
      %v928 = vpop.f32.mrb[0].mxu0
      %v929 = vpop.f32.mrb[0].mxu0
      %930 = vmatprep.mubr.bf16.mxu0 0
      %931 = vmatmul.mubr.bf16.gmra.mrb[0].mxu0 %v474
      %v932 = vpop.f32.mrb[0].mxu0
      %v933 = vadd.f32 0.0, %v932
      %v934 = vpop.f32.mrb[0].mxu0
      %v935 = vpop.f32.mrb[0].mxu0
      %v936 = vadd.f32 0.0, %v935
      %v937 = vpop.f32.mrb[0].mxu0
      %938 = vmatprep.mubr.bf16.mxu0 0
      %939 = vmatmul.mubr.bf16.gmra.mrb[0].mxu0 %v477
      %v940 = vpop.f32.mrb[0].mxu0
      %v941 = vadd.f32 0.0, %v940
      %v942 = vpop.f32.mrb[0].mxu0
      %v943 = vpop.f32.mrb[0].mxu0
      %v944 = vpop.f32.mrb[0].mxu0
      %945 = vmatprep.mubr.bf16.mxu0 0
      %946 = vmatmul.mubr.bf16.gmra.mrb[0].mxu0 %v480
      %v947 = vpop.f32.mrb[0].mxu0
      %v948 = vadd.f32 0.0, %v947
      %v949 = vpop.f32.mrb[0].mxu0
      %v950 = vpop.f32.mrb[0].mxu0
      %v951 = vadd.f32 0.0, %v950
      %v952 = vpop.f32.mrb[0].mxu0
      %953 = vmatprep.mubr.bf16.mxu0 0
      %954 = vmatmul.mubr.bf16.gmra.mrb[0].mxu0 %v483
      %v955 = vpop.f32.mrb[0].mxu0
      %v956 = vadd.f32 0.0, %v955
      %v957 = vpop.f32.mrb[0].mxu0
      %v958 = vpop.f32.mrb[0].mxu0
      %v959 = vpop.f32.mrb[0].mxu0
      %960 = vmatprep.mubr.bf16.mxu0 0
      %961 = vmatmul.mubr.bf16.gmra.mrb[0].mxu0 %v486
      %v962 = vpop.f32.mrb[0].mxu0
      %v963 = vadd.f32 0.0, %v962
      %v964 = vpop.f32.mrb[0].mxu0
      %v965 = vpop.f32.mrb[0].mxu0
      %v966 = vadd.f32 0.0, %v965
      %v967 = vpop.f32.mrb[0].mxu0
      %968 = vmatprep.mubr.bf16.mxu0 0
      %969 = vmatmul.mubr.bf16.gmra.mrb[0].mxu0 %v489
      %v970 = vpop.f32.mrb[0].mxu0
      %v971 = vadd.f32 0.0, %v970
      %v972 = vpop.f32.mrb[0].mxu0
      %v973 = vpop.f32.mrb[0].mxu0
      %v974 = vpop.f32.mrb[0].mxu0
      %975 = vmatprep.mubr.bf16.mxu0 0
      %976 = vmatmul.mubr.bf16.gmra.mrb[0].mxu0 %v492
      %v977 = vpop.f32.mrb[0].mxu0
      %v978 = vadd.f32 0.0, %v977
      %v979 = vpop.f32.mrb[0].mxu0
      %v980 = vpop.f32.mrb[0].mxu0
      %v981 = vadd.f32 0.0, %v980
      %v982 = vpop.f32.mrb[0].mxu0
      %983 = vmatprep.mubr.bf16.mxu0 0
      %984 = vmatmul.mubr.bf16.gmra.mrb[0].mxu0 %v495
      %v985 = vpop.f32.mrb[0].mxu0
      %v986 = vadd.f32 0.0, %v985
      %v987 = vpop.f32.mrb[0].mxu0
      %v988 = vpop.f32.mrb[0].mxu0
      %v989 = vpop.f32.mrb[0].mxu0
      %990 = vmatprep.mubr.bf16.mxu0 0
      %991 = vmatmul.mubr.bf16.gmra.mrb[0].mxu0 %v498
      %v992 = vpop.f32.mrb[0].mxu0
      %v993 = vadd.f32 0.0, %v992
      %v994 = vpop.f32.mrb[0].mxu0
      %v995 = vpop.f32.mrb[0].mxu0
      %v996 = vadd.f32 0.0, %v995
      %v997 = vpop.f32.mrb[0].mxu0
      %998 = vmatprep.mubr.bf16.mxu0 0
      %999 = vmatmul.mubr.bf16.gmra.mrb[0].mxu0 %v501
      %v1000 = vpop.f32.mrb[0].mxu0
      %v1001 = vadd.f32 0.0, %v1000
      %v1002 = vpop.f32.mrb[0].mxu0
      %v1003 = vpop.f32.mrb[0].mxu0
      %v1004 = vpop.f32.mrb[0].mxu0
      %1005 = vmatprep.mubr.bf16.mxu0 0
      %1006 = vmatmul.mubr.bf16.gmra.mrb[0].mxu0 %v504
      %v1007 = vpop.f32.mrb[0].mxu0
      %v1008 = vadd.f32 0.0, %v1007
      %v1009 = vpop.f32.mrb[0].mxu0
      %v1010 = vpop.f32.mrb[0].mxu0
      %v1011 = vadd.f32 0.0, %v1010
      %v1012 = vpop.f32.mrb[0].mxu0
      %1013 = vmatprep.mubr.bf16.mxu0 0
      %1014 = vmatmul.mubr.bf16.gmra.mrb[0].mxu0 %v507
      %v1015 = vpop.f32.mrb[0].mxu0
      %v1016 = vadd.f32 0.0, %v1015
      %v1017 = vpop.f32.mrb[0].mxu0
      %v1018 = vpop.f32.mrb[0].mxu0
      %v1019 = vpop.f32.mrb[0].mxu0
      %1020 = vmatprep.mubr.bf16.mxu0 0
      %1021 = vmatmul.mubr.bf16.gmra.mrb[0].mxu0 %v510
      %v1022 = vpop.f32.mrb[0].mxu0
      %v1023 = vadd.f32 0.0, %v1022
      %v1024 = vpop.f32.mrb[0].mxu0
      %v1025 = vpop.f32.mrb[0].mxu0
      %v1026 = vadd.f32 0.0, %v1025
      %v1027 = vpop.f32.mrb[0].mxu0
      %1028 = vmatprep.mubr.bf16.mxu0 0
      %1029 = vmatmul.mubr.bf16.gmra.mrb[0].mxu0 %v513
      %v1030 = vpop.f32.mrb[0].mxu0
      %v1031 = vadd.f32 0.0, %v1030
      %v1032 = vpop.f32.mrb[0].mxu0
      %v1033 = vpop.f32.mrb[0].mxu0
      %v1034 = vpop.f32.mrb[0].mxu0
      %1035 = vmatprep.mubr.bf16.mxu0 0
      %1036 = vmatmul.mubr.bf16.gmra.mrb[0].mxu0 %v516
      %v1037 = vpop.f32.mrb[0].mxu0
      %v1038 = vadd.f32 0.0, %v1037
      %v1039 = vpop.f32.mrb[0].mxu0
      %v1040 = vpop.f32.mrb[0].mxu0
      %v1041 = vadd.f32 0.0, %v1040
      %v1042 = vpop.f32.mrb[0].mxu0
      %1043 = vmatprep.mubr.bf16.mxu0 0
      %1044 = vmatmul.mubr.bf16.gmra.mrb[0].mxu0 %v519
      %v1045 = vpop.f32.mrb[0].mxu0
      %v1046 = vadd.f32 0.0, %v1045
      %v1047 = vpop.f32.mrb[0].mxu0
      %v1048 = vpop.f32.mrb[0].mxu0
      %v1049 = vpop.f32.mrb[0].mxu0
      %1050 = vmatprep.mubr.bf16.mxu0 0
      %1051 = vmatmul.mubr.bf16.gmra.mrb[0].mxu0 %v522
      %v1052 = vpop.f32.mrb[0].mxu0
      %v1053 = vadd.f32 0.0, %v1052
      %v1054 = vpop.f32.mrb[0].mxu0
      %v1055 = vpop.f32.mrb[0].mxu0
      %v1056 = vadd.f32 0.0, %v1055
      %v1057 = vpop.f32.mrb[0].mxu0
      %1058 = vmatprep.mubr.bf16.mxu0 0
      %1059 = vmatmul.mubr.bf16.gmra.mrb[0].mxu0 %v525
      %v1060 = vpop.f32.mrb[0].mxu0
      %v1061 = vadd.f32 0.0, %v1060
      %v1062 = vpop.f32.mrb[0].mxu0
      %v1063 = vpop.f32.mrb[0].mxu0
      %v1064 = vpop.f32.mrb[0].mxu0
      %1065 = vmatprep.mubr.bf16.mxu0 0
      %1066 = vmatmul.mubr.bf16.gmra.mrb[0].mxu0 %v528
      %v1067 = vpop.f32.mrb[0].mxu0
      %v1068 = vadd.f32 0.0, %v1067
      %v1069 = vpop.f32.mrb[0].mxu0
      %v1070 = vpop.f32.mrb[0].mxu0
      %v1071 = vadd.f32 0.0, %v1070
      %v1072 = vpop.f32.mrb[0].mxu0
      %1073 = vmatprep.mubr.bf16.mxu0 0
      %1074 = vmatmul.mubr.bf16.gmra.mrb[0].mxu0 %v531
      %v1075 = vpop.f32.mrb[0].mxu0
      %v1076 = vadd.f32 0.0, %v1075
      %v1077 = vpop.f32.mrb[0].mxu0
      %v1078 = vpop.f32.mrb[0].mxu0
      %v1079 = vpop.f32.mrb[0].mxu0
      %1080 = vmatprep.mubr.bf16.mxu0 0
      %1081 = vmatmul.mubr.bf16.gmra.mrb[0].mxu0 %v534
      %v1082 = vpop.f32.mrb[0].mxu0
      %v1083 = vadd.f32 0.0, %v1082
      %v1084 = vpop.f32.mrb[0].mxu0
      %v1085 = vpop.f32.mrb[0].mxu0
      %v1086 = vadd.f32 0.0, %v1085
      %v1087 = vpop.f32.mrb[0].mxu0
      %1088 = vmatprep.mubr.bf16.mxu0 0
      %1089 = vmatmul.mubr.bf16.gmra.mrb[0].mxu0 %v537
      %v1090 = vpop.f32.mrb[0].mxu0
      %v1091 = vadd.f32 0.0, %v1090
      %v1092 = vpop.f32.mrb[0].mxu0
      %v1093 = vpop.f32.mrb[0].mxu0
      %v1094 = vpop.f32.mrb[0].mxu0
      %1095 = vmatprep.mubr.bf16.mxu0 0
      %1096 = vmatmul.mubr.bf16.gmra.mrb[0].mxu0 %v540
      %v1097 = vpop.f32.mrb[0].mxu0
      %v1098 = vadd.f32 0.0, %v1097
      %v1099 = vpop.f32.mrb[0].mxu0
      %v1100 = vpop.f32.mrb[0].mxu0
      %v1101 = vadd.f32 0.0, %v1100
      %v1102 = vpop.f32.mrb[0].mxu0
      %1103 = vmatprep.mubr.bf16.mxu0 0
      %1104 = vmatmul.mubr.bf16.gmra.mrb[0].mxu0 %v543
      %v1105 = vpop.f32.mrb[0].mxu0
      %v1106 = vadd.f32 0.0, %v1105
      %v1107 = vpop.f32.mrb[0].mxu0
      %v1108 = vpop.f32.mrb[0].mxu0
      %v1109 = vpop.f32.mrb[0].mxu0
      %1110 = vmatprep.mubr.bf16.mxu0 0
      %1111 = vmatmul.mubr.bf16.gmra.mrb[0].mxu0 %v546
      %v1112 = vpop.f32.mrb[0].mxu0
      %v1113 = vadd.f32 0.0, %v1112
      %v1114 = vpop.f32.mrb[0].mxu0
      %v1115 = vpop.f32.mrb[0].mxu0
      %v1116 = vadd.f32 0.0, %v1115
      %v1117 = vpop.f32.mrb[0].mxu0
      %1118 = vmatprep.mubr.bf16.mxu0 0
      %1119 = vmatmul.mubr.bf16.gmra.mrb[0].mxu0 %v549
      %v1120 = vpop.f32.mrb[0].mxu0
      %v1121 = vadd.f32 0.0, %v1120
      %v1122 = vpop.f32.mrb[0].mxu0
      %v1123 = vpop.f32.mrb[0].mxu0
      %v1124 = vpop.f32.mrb[0].mxu0
      %1125 = vmatprep.mubr.bf16.mxu0 0
      %1126 = vmatmul.mubr.bf16.gmra.mrb[0].mxu0 %v552
      %v1127 = vpop.f32.mrb[0].mxu0
      %v1128 = vadd.f32 0.0, %v1127
      %v1129 = vpop.f32.mrb[0].mxu0
      %v1130 = vpop.f32.mrb[0].mxu0
      %v1131 = vadd.f32 0.0, %v1130
      %v1132 = vpop.f32.mrb[0].mxu0
      %1133 = vmatprep.mubr.bf16.mxu0 0
      %1134 = vmatmul.mubr.bf16.gmra.mrb[0].mxu0 %v555
      %v1135 = vpop.f32.mrb[0].mxu0
      %v1136 = vadd.f32 0.0, %v1135
      %v1137 = vpop.f32.mrb[0].mxu0
      %v1138 = vpop.f32.mrb[0].mxu0
      %v1139 = vpop.f32.mrb[0].mxu0
      %1140 = vmatprep.mubr.bf16.mxu0 0
      %1141 = vmatmul.mubr.bf16.gmra.mrb[0].mxu0 %v558
      %v1142 = vpop.f32.mrb[0].mxu0
      %v1143 = vadd.f32 0.0, %v1142
      %v1144 = vpop.f32.mrb[0].mxu0
      %v1145 = vpop.f32.mrb[0].mxu0
      %v1146 = vadd.f32 0.0, %v1145
      %v1147 = vpop.f32.mrb[0].mxu0
      %1148 = vmatprep.mubr.bf16.mxu0 0
      %1149 = vmatmul.mubr.bf16.gmra.mrb[0].mxu0 %v561
      %v1150 = vpop.f32.mrb[0].mxu0
      %v1151 = vadd.f32 0.0, %v1150
      %v1152 = vpop.f32.mrb[0].mxu0
      %v1153 = vpop.f32.mrb[0].mxu0
      %v1154 = vpop.f32.mrb[0].mxu0
      %1155 = vmatprep.mubr.bf16.mxu0 0
      %1156 = vmatmul.mubr.bf16.gmra.mrb[0].mxu0 %v564
      %v1157 = vpop.f32.mrb[0].mxu0
      %v1158 = vpop.f32.mrb[0].mxu0
      %v1159 = vpop.f32.mrb[0].mxu0
      %v1160 = vpop.f32.mrb[0].mxu0
      %1161 = vmatprep.mubr.bf16.mxu0 0
      %1162 = vmatmul.mubr.bf16.gmra.mrb[0].mxu0 %v567
      %v1163 = vpop.f32.mrb[0].mxu0
      %v1164 = vpop.f32.mrb[0].mxu0
      %v1165 = vpop.f32.mrb[0].mxu0
      %v1166 = vpop.f32.mrb[0].mxu0
      %1167 = vmatprep.mubr.bf16.mxu0 0
      %1168 = vmatmul.mubr.bf16.gmra.mrb[0].mxu0 %v570
      %v1169 = vpop.f32.mrb[0].mxu0
      %v1170 = vpop.f32.mrb[0].mxu0
      %v1171 = vpop.f32.mrb[0].mxu0
      %v1172 = vpop.f32.mrb[0].mxu0
      %1173 = vmatprep.mubr.bf16.mxu0 0
      %1174 = vmatmul.mubr.bf16.gmra.mrb[0].mxu0 %v573
      %v1175 = vpop.f32.mrb[0].mxu0
      %v1176 = vpop.f32.mrb[0].mxu0
      %v1177 = vpop.f32.mrb[0].mxu0
      %v1178 = vpop.f32.mrb[0].mxu0
      %1179 = vmatprep.mubr.bf16.mxu0 0
      %1180 = vmatmul.mubr.bf16.gmra.mrb[0].mxu0 %v576
      %v1181 = vpop.f32.mrb[0].mxu0
      %v1182 = vpop.f32.mrb[0].mxu0
      %v1183 = vpop.f32.mrb[0].mxu0
      %v1184 = vpop.f32.mrb[0].mxu0
      %1185 = vmatprep.mubr.bf16.mxu0 0
      %1186 = vmatmul.mubr.bf16.gmra.mrb[0].mxu0 %v579
      %v1187 = vpop.f32.mrb[0].mxu0
      %v1188 = vpop.f32.mrb[0].mxu0
      %v1189 = vpop.f32.mrb[0].mxu0
      %v1190 = vpop.f32.mrb[0].mxu0
      %1191 = vdwg.mxu0
      %vm1240 = vcmask 1046528
      %v1241 = vrot.slane %v918, 1
      %v1242 = vrot.slane %v921, 1
      %v1243 = vsel %vm1240, %v1241, %v1242
      %v1244 = vrot.slane %v926, 1
      %v1245 = vsel %vm1240, %v1242, %v1244
      %v1246 = vrot.slane %v933, 1
      %v1247 = vrot.slane %v936, 1
      %v1248 = vsel %vm1240, %v1246, %v1247
      %v1249 = vrot.slane %v941, 1
      %v1250 = vsel %vm1240, %v1247, %v1249
      %v1251 = vrot.slane %v948, 1
      %v1252 = vrot.slane %v951, 1
      %v1253 = vsel %vm1240, %v1251, %v1252
      %v1254 = vrot.slane %v956, 1
      %v1255 = vsel %vm1240, %v1252, %v1254
      %v1256 = vrot.slane %v963, 1
      %v1257 = vrot.slane %v966, 1
      %v1258 = vsel %vm1240, %v1256, %v1257
      %v1259 = vrot.slane %v971, 1
      %v1260 = vsel %vm1240, %v1257, %v1259
      %v1261 = vrot.slane %v978, 1
      %v1262 = vrot.slane %v981, 1
      %v1263 = vsel %vm1240, %v1261, %v1262
      %v1264 = vrot.slane %v986, 1
      %v1265 = vsel %vm1240, %v1262, %v1264
      %v1266 = vrot.slane %v993, 1
      %v1267 = vrot.slane %v996, 1
      %v1268 = vsel %vm1240, %v1266, %v1267
      %v1269 = vrot.slane %v1001, 1
      %v1270 = vsel %vm1240, %v1267, %v1269
      %v1271 = vrot.slane %v1008, 1
      %v1272 = vrot.slane %v1011, 1
      %v1273 = vsel %vm1240, %v1271, %v1272
      %v1274 = vrot.slane %v1016, 1
      %v1275 = vsel %vm1240, %v1272, %v1274
      %v1276 = vrot.slane %v1023, 1
      %v1277 = vrot.slane %v1026, 1
      %v1278 = vsel %vm1240, %v1276, %v1277
      %v1279 = vrot.slane %v1031, 1
      %v1280 = vsel %vm1240, %v1277, %v1279
      %v1281 = vrot.slane %v1038, 1
      %v1282 = vrot.slane %v1041, 1
      %v1283 = vsel %vm1240, %v1281, %v1282
      %v1284 = vrot.slane %v1046, 1
      %v1285 = vsel %vm1240, %v1282, %v1284
      %v1286 = vrot.slane %v1053, 1
      %v1287 = vrot.slane %v1056, 1
      %v1288 = vsel %vm1240, %v1286, %v1287
      %v1289 = vrot.slane %v1061, 1
      %v1290 = vsel %vm1240, %v1287, %v1289
      %v1291 = vrot.slane %v1068, 1
      %v1292 = vrot.slane %v1071, 1
      %v1293 = vsel %vm1240, %v1291, %v1292
      %v1294 = vrot.slane %v1076, 1
      %v1295 = vsel %vm1240, %v1292, %v1294
      %v1296 = vrot.slane %v1083, 1
      %v1297 = vrot.slane %v1086, 1
      %v1298 = vsel %vm1240, %v1296, %v1297
      %v1299 = vrot.slane %v1091, 1
      %v1300 = vsel %vm1240, %v1297, %v1299
      %v1301 = vrot.slane %v1098, 1
      %v1302 = vrot.slane %v1101, 1
      %v1303 = vsel %vm1240, %v1301, %v1302
      %v1304 = vrot.slane %v1106, 1
      %v1305 = vsel %vm1240, %v1302, %v1304
      %v1306 = vrot.slane %v1113, 1
      %v1307 = vrot.slane %v1116, 1
      %v1308 = vsel %vm1240, %v1306, %v1307
      %v1309 = vrot.slane %v1121, 1
      %v1310 = vsel %vm1240, %v1307, %v1309
      %v1311 = vrot.slane %v1128, 1
      %v1312 = vrot.slane %v1131, 1
      %v1313 = vsel %vm1240, %v1311, %v1312
      %v1314 = vrot.slane %v1136, 1
      %v1315 = vsel %vm1240, %v1312, %v1314
      %v1316 = vrot.slane %v1143, 1
      %v1317 = vrot.slane %v1146, 1
      %v1318 = vsel %vm1240, %v1316, %v1317
      %v1319 = vrot.slane %v1151, 1
      %v1320 = vsel %vm1240, %v1317, %v1319
      %v1353 = vadd.f32 %v620, %v1243
      %v1354 = vadd.f32 %v623, %v1245
      %v1355 = vadd.f32 %v634, %v1248
      %v1356 = vadd.f32 %v637, %v1250
      %v1357 = vadd.f32 %v648, %v1253
      %v1358 = vadd.f32 %v651, %v1255
      %v1359 = vadd.f32 %v662, %v1258
      %v1360 = vadd.f32 %v665, %v1260
      %v1361 = vadd.f32 %v676, %v1263
      %v1362 = vadd.f32 %v679, %v1265
      %v1363 = vadd.f32 %v690, %v1268
      %v1364 = vadd.f32 %v693, %v1270
      %v1365 = vadd.f32 %v704, %v1273
      %v1366 = vadd.f32 %v707, %v1275
      %v1367 = vadd.f32 %v718, %v1278
      %v1368 = vadd.f32 %v721, %v1280
      %v1369 = vadd.f32 %v732, %v1283
      %v1370 = vadd.f32 %v735, %v1285
      %v1371 = vadd.f32 %v746, %v1288
      %v1372 = vadd.f32 %v749, %v1290
      %v1373 = vadd.f32 %v760, %v1293
      %v1374 = vadd.f32 %v763, %v1295
      %v1375 = vadd.f32 %v774, %v1298
      %v1376 = vadd.f32 %v777, %v1300
      %v1377 = vadd.f32 %v788, %v1303
      %v1378 = vadd.f32 %v791, %v1305
      %v1379 = vadd.f32 %v802, %v1308
      %v1380 = vadd.f32 %v805, %v1310
      %v1381 = vadd.f32 %v816, %v1313
      %v1382 = vadd.f32 %v819, %v1315
      %v1383 = vadd.f32 %v830, %v1318
      %v1384 = vadd.f32 %v833, %v1320
      %s1385 = scalar_lea.vmem %s1, 4
      %v1386 = vld [vmem:[%s1385] sm:$0x3]
      %v1388 = vsel %vm581, %v1386, 0
      %1390 = vmatprep.subr.bf16.mxu0 0
      %1391 = vmatpush1.bf16.msra.mxu0 %v1388
      %1392 = vmatprep.subr.bf16.mxu0 0
      %1393 = vmatpush1.bf16.msra.mxu0 0
      %1394 = vmatprep.subr.bf16.mxu0 0
      %1395 = vmatpush1.bf16.msra.mxu0 0
      %1396 = vmatprep.subr.bf16.mxu0 0
      %1397 = vmatpush1.bf16.msra.mxu0 0
      %1398 = vmatprep.subr.bf16.mxu0 0
      %1399 = vmatpush1.bf16.msra.mxu0 0
      %1400 = vmatprep.subr.bf16.mxu0 0
      %1401 = vmatpush1.bf16.msra.mxu0 0
      %1402 = vmatprep.subr.bf16.mxu0 0
      %1403 = vmatpush1.bf16.msra.mxu0 0
      %1404 = vmatprep.subr.bf16.mxu0 0
      %1405 = vmatpush1.bf16.msra.mxu0 0
      %1406 = vmatprep.subr.bf16.mxu0 0
      %1407 = vmatpush1.bf16.msra.mxu0 0
      %1408 = vmatprep.subr.bf16.mxu0 0
      %1409 = vmatpush1.bf16.msra.mxu0 0
      %1410 = vmatprep.subr.bf16.mxu0 0
      %1411 = vmatpush1.bf16.msra.mxu0 0
      %1412 = vmatprep.subr.bf16.mxu0 0
      %1413 = vmatpush1.bf16.msra.mxu0 0
      %1414 = vmatprep.subr.bf16.mxu0 0
      %1415 = vmatpush1.bf16.msra.mxu0 0
      %1416 = vmatprep.subr.bf16.mxu0 0
      %1417 = vmatpush1.bf16.msra.mxu0 0
      %1418 = vmatprep.subr.bf16.mxu0 0
      %1419 = vmatpush1.bf16.msra.mxu0 0
      %1420 = vmatprep.subr.bf16.mxu0 0
      %1421 = vmatpush1.bf16.msra.mxu0 0
      %1422 = vmatprep.mubr.bf16.mxu0 0
      %1423 = vmatmul.mubr.bf16.gmra.mrb[0].mxu0 %v468
      %v1424 = vpop.f32.mrb[0].mxu0
      %v1425 = vadd.f32 0.0, %v1424
      %v1426 = vpop.f32.mrb[0].mxu0
      %v1427 = vpop.f32.mrb[0].mxu0
      %v1428 = vadd.f32 0.0, %v1427
      %v1429 = vpop.f32.mrb[0].mxu0
      %1430 = vmatprep.mubr.bf16.mxu0 0
      %1431 = vmatmul.mubr.bf16.gmra.mrb[0].mxu0 %v471
      %v1432 = vpop.f32.mrb[0].mxu0
      %v1433 = vadd.f32 0.0, %v1432
      %v1434 = vpop.f32.mrb[0].mxu0
      %v1435 = vpop.f32.mrb[0].mxu0
      %v1436 = vpop.f32.mrb[0].mxu0
      %1437 = vmatprep.mubr.bf16.mxu0 0
      %1438 = vmatmul.mubr.bf16.gmra.mrb[0].mxu0 %v474
      %v1439 = vpop.f32.mrb[0].mxu0
      %v1440 = vadd.f32 0.0, %v1439
      %v1441 = vpop.f32.mrb[0].mxu0
      %v1442 = vpop.f32.mrb[0].mxu0
      %v1443 = vadd.f32 0.0, %v1442
      %v1444 = vpop.f32.mrb[0].mxu0
      %1445 = vmatprep.mubr.bf16.mxu0 0
      %1446 = vmatmul.mubr.bf16.gmra.mrb[0].mxu0 %v477
      %v1447 = vpop.f32.mrb[0].mxu0
      %v1448 = vadd.f32 0.0, %v1447
      %v1449 = vpop.f32.mrb[0].mxu0
      %v1450 = vpop.f32.mrb[0].mxu0
      %v1451 = vpop.f32.mrb[0].mxu0
      %1452 = vmatprep.mubr.bf16.mxu0 0
      %1453 = vmatmul.mubr.bf16.gmra.mrb[0].mxu0 %v480
      %v1454 = vpop.f32.mrb[0].mxu0
      %v1455 = vadd.f32 0.0, %v1454
      %v1456 = vpop.f32.mrb[0].mxu0
      %v1457 = vpop.f32.mrb[0].mxu0
      %v1458 = vadd.f32 0.0, %v1457
      %v1459 = vpop.f32.mrb[0].mxu0
      %1460 = vmatprep.mubr.bf16.mxu0 0
      %1461 = vmatmul.mubr.bf16.gmra.mrb[0].mxu0 %v483
      %v1462 = vpop.f32.mrb[0].mxu0
      %v1463 = vadd.f32 0.0, %v1462
      %v1464 = vpop.f32.mrb[0].mxu0
      %v1465 = vpop.f32.mrb[0].mxu0
      %v1466 = vpop.f32.mrb[0].mxu0
      %1467 = vmatprep.mubr.bf16.mxu0 0
      %1468 = vmatmul.mubr.bf16.gmra.mrb[0].mxu0 %v486
      %v1469 = vpop.f32.mrb[0].mxu0
      %v1470 = vadd.f32 0.0, %v1469
      %v1471 = vpop.f32.mrb[0].mxu0
      %v1472 = vpop.f32.mrb[0].mxu0
      %v1473 = vadd.f32 0.0, %v1472
      %v1474 = vpop.f32.mrb[0].mxu0
      %1475 = vmatprep.mubr.bf16.mxu0 0
      %1476 = vmatmul.mubr.bf16.gmra.mrb[0].mxu0 %v489
      %v1477 = vpop.f32.mrb[0].mxu0
      %v1478 = vadd.f32 0.0, %v1477
      %v1479 = vpop.f32.mrb[0].mxu0
      %v1480 = vpop.f32.mrb[0].mxu0
      %v1481 = vpop.f32.mrb[0].mxu0
      %1482 = vmatprep.mubr.bf16.mxu0 0
      %1483 = vmatmul.mubr.bf16.gmra.mrb[0].mxu0 %v492
      %v1484 = vpop.f32.mrb[0].mxu0
      %v1485 = vadd.f32 0.0, %v1484
      %v1486 = vpop.f32.mrb[0].mxu0
      %v1487 = vpop.f32.mrb[0].mxu0
      %v1488 = vadd.f32 0.0, %v1487
      %v1489 = vpop.f32.mrb[0].mxu0
      %1490 = vmatprep.mubr.bf16.mxu0 0
      %1491 = vmatmul.mubr.bf16.gmra.mrb[0].mxu0 %v495
      %v1492 = vpop.f32.mrb[0].mxu0
      %v1493 = vadd.f32 0.0, %v1492
      %v1494 = vpop.f32.mrb[0].mxu0
      %v1495 = vpop.f32.mrb[0].mxu0
      %v1496 = vpop.f32.mrb[0].mxu0
      %1497 = vmatprep.mubr.bf16.mxu0 0
      %1498 = vmatmul.mubr.bf16.gmra.mrb[0].mxu0 %v498
      %v1499 = vpop.f32.mrb[0].mxu0
      %v1500 = vadd.f32 0.0, %v1499
      %v1501 = vpop.f32.mrb[0].mxu0
      %v1502 = vpop.f32.mrb[0].mxu0
      %v1503 = vadd.f32 0.0, %v1502
      %v1504 = vpop.f32.mrb[0].mxu0
      %1505 = vmatprep.mubr.bf16.mxu0 0
      %1506 = vmatmul.mubr.bf16.gmra.mrb[0].mxu0 %v501
      %v1507 = vpop.f32.mrb[0].mxu0
      %v1508 = vadd.f32 0.0, %v1507
      %v1509 = vpop.f32.mrb[0].mxu0
      %v1510 = vpop.f32.mrb[0].mxu0
      %v1511 = vpop.f32.mrb[0].mxu0
      %1512 = vmatprep.mubr.bf16.mxu0 0
      %1513 = vmatmul.mubr.bf16.gmra.mrb[0].mxu0 %v504
      %v1514 = vpop.f32.mrb[0].mxu0
      %v1515 = vadd.f32 0.0, %v1514
      %v1516 = vpop.f32.mrb[0].mxu0
      %v1517 = vpop.f32.mrb[0].mxu0
      %v1518 = vadd.f32 0.0, %v1517
      %v1519 = vpop.f32.mrb[0].mxu0
      %1520 = vmatprep.mubr.bf16.mxu0 0
      %1521 = vmatmul.mubr.bf16.gmra.mrb[0].mxu0 %v507
      %v1522 = vpop.f32.mrb[0].mxu0
      %v1523 = vadd.f32 0.0, %v1522
      %v1524 = vpop.f32.mrb[0].mxu0
      %v1525 = vpop.f32.mrb[0].mxu0
      %v1526 = vpop.f32.mrb[0].mxu0
      %1527 = vmatprep.mubr.bf16.mxu0 0
      %1528 = vmatmul.mubr.bf16.gmra.mrb[0].mxu0 %v510
      %v1529 = vpop.f32.mrb[0].mxu0
      %v1530 = vadd.f32 0.0, %v1529
      %v1531 = vpop.f32.mrb[0].mxu0
      %v1532 = vpop.f32.mrb[0].mxu0
      %v1533 = vadd.f32 0.0, %v1532
      %v1534 = vpop.f32.mrb[0].mxu0
      %1535 = vmatprep.mubr.bf16.mxu0 0
      %1536 = vmatmul.mubr.bf16.gmra.mrb[0].mxu0 %v513
      %v1537 = vpop.f32.mrb[0].mxu0
      %v1538 = vadd.f32 0.0, %v1537
      %v1539 = vpop.f32.mrb[0].mxu0
      %v1540 = vpop.f32.mrb[0].mxu0
      %v1541 = vpop.f32.mrb[0].mxu0
      %1542 = vmatprep.mubr.bf16.mxu0 0
      %1543 = vmatmul.mubr.bf16.gmra.mrb[0].mxu0 %v516
      %v1544 = vpop.f32.mrb[0].mxu0
      %v1545 = vadd.f32 0.0, %v1544
      %v1546 = vpop.f32.mrb[0].mxu0
      %v1547 = vpop.f32.mrb[0].mxu0
      %v1548 = vadd.f32 0.0, %v1547
      %v1549 = vpop.f32.mrb[0].mxu0
      %1550 = vmatprep.mubr.bf16.mxu0 0
      %1551 = vmatmul.mubr.bf16.gmra.mrb[0].mxu0 %v519
      %v1552 = vpop.f32.mrb[0].mxu0
      %v1553 = vadd.f32 0.0, %v1552
      %v1554 = vpop.f32.mrb[0].mxu0
      %v1555 = vpop.f32.mrb[0].mxu0
      %v1556 = vpop.f32.mrb[0].mxu0
      %1557 = vmatprep.mubr.bf16.mxu0 0
      %1558 = vmatmul.mubr.bf16.gmra.mrb[0].mxu0 %v522
      %v1559 = vpop.f32.mrb[0].mxu0
      %v1560 = vadd.f32 0.0, %v1559
      %v1561 = vpop.f32.mrb[0].mxu0
      %v1562 = vpop.f32.mrb[0].mxu0
      %v1563 = vadd.f32 0.0, %v1562
      %v1564 = vpop.f32.mrb[0].mxu0
      %1565 = vmatprep.mubr.bf16.mxu0 0
      %1566 = vmatmul.mubr.bf16.gmra.mrb[0].mxu0 %v525
      %v1567 = vpop.f32.mrb[0].mxu0
      %v1568 = vadd.f32 0.0, %v1567
      %v1569 = vpop.f32.mrb[0].mxu0
      %v1570 = vpop.f32.mrb[0].mxu0
      %v1571 = vpop.f32.mrb[0].mxu0
      %1572 = vmatprep.mubr.bf16.mxu0 0
      %1573 = vmatmul.mubr.bf16.gmra.mrb[0].mxu0 %v528
      %v1574 = vpop.f32.mrb[0].mxu0
      %v1575 = vadd.f32 0.0, %v1574
      %v1576 = vpop.f32.mrb[0].mxu0
      %v1577 = vpop.f32.mrb[0].mxu0
      %v1578 = vadd.f32 0.0, %v1577
      %v1579 = vpop.f32.mrb[0].mxu0
      %1580 = vmatprep.mubr.bf16.mxu0 0
      %1581 = vmatmul.mubr.bf16.gmra.mrb[0].mxu0 %v531
      %v1582 = vpop.f32.mrb[0].mxu0
      %v1583 = vadd.f32 0.0, %v1582
      %v1584 = vpop.f32.mrb[0].mxu0
      %v1585 = vpop.f32.mrb[0].mxu0
      %v1586 = vpop.f32.mrb[0].mxu0
      %1587 = vmatprep.mubr.bf16.mxu0 0
      %1588 = vmatmul.mubr.bf16.gmra.mrb[0].mxu0 %v534
      %v1589 = vpop.f32.mrb[0].mxu0
      %v1590 = vadd.f32 0.0, %v1589
      %v1591 = vpop.f32.mrb[0].mxu0
      %v1592 = vpop.f32.mrb[0].mxu0
      %v1593 = vadd.f32 0.0, %v1592
      %v1594 = vpop.f32.mrb[0].mxu0
      %1595 = vmatprep.mubr.bf16.mxu0 0
      %1596 = vmatmul.mubr.bf16.gmra.mrb[0].mxu0 %v537
      %v1597 = vpop.f32.mrb[0].mxu0
      %v1598 = vadd.f32 0.0, %v1597
      %v1599 = vpop.f32.mrb[0].mxu0
      %v1600 = vpop.f32.mrb[0].mxu0
      %v1601 = vpop.f32.mrb[0].mxu0
      %1602 = vmatprep.mubr.bf16.mxu0 0
      %1603 = vmatmul.mubr.bf16.gmra.mrb[0].mxu0 %v540
      %v1604 = vpop.f32.mrb[0].mxu0
      %v1605 = vadd.f32 0.0, %v1604
      %v1606 = vpop.f32.mrb[0].mxu0
      %v1607 = vpop.f32.mrb[0].mxu0
      %v1608 = vadd.f32 0.0, %v1607
      %v1609 = vpop.f32.mrb[0].mxu0
      %1610 = vmatprep.mubr.bf16.mxu0 0
      %1611 = vmatmul.mubr.bf16.gmra.mrb[0].mxu0 %v543
      %v1612 = vpop.f32.mrb[0].mxu0
      %v1613 = vadd.f32 0.0, %v1612
      %v1614 = vpop.f32.mrb[0].mxu0
      %v1615 = vpop.f32.mrb[0].mxu0
      %v1616 = vpop.f32.mrb[0].mxu0
      %1617 = vmatprep.mubr.bf16.mxu0 0
      %1618 = vmatmul.mubr.bf16.gmra.mrb[0].mxu0 %v546
      %v1619 = vpop.f32.mrb[0].mxu0
      %v1620 = vadd.f32 0.0, %v1619
      %v1621 = vpop.f32.mrb[0].mxu0
      %v1622 = vpop.f32.mrb[0].mxu0
      %v1623 = vadd.f32 0.0, %v1622
      %v1624 = vpop.f32.mrb[0].mxu0
      %1625 = vmatprep.mubr.bf16.mxu0 0
      %1626 = vmatmul.mubr.bf16.gmra.mrb[0].mxu0 %v549
      %v1627 = vpop.f32.mrb[0].mxu0
      %v1628 = vadd.f32 0.0, %v1627
      %v1629 = vpop.f32.mrb[0].mxu0
      %v1630 = vpop.f32.mrb[0].mxu0
      %v1631 = vpop.f32.mrb[0].mxu0
      %1632 = vmatprep.mubr.bf16.mxu0 0
      %1633 = vmatmul.mubr.bf16.gmra.mrb[0].mxu0 %v552
      %v1634 = vpop.f32.mrb[0].mxu0
      %v1635 = vadd.f32 0.0, %v1634
      %v1636 = vpop.f32.mrb[0].mxu0
      %v1637 = vpop.f32.mrb[0].mxu0
      %v1638 = vadd.f32 0.0, %v1637
      %v1639 = vpop.f32.mrb[0].mxu0
      %1640 = vmatprep.mubr.bf16.mxu0 0
      %1641 = vmatmul.mubr.bf16.gmra.mrb[0].mxu0 %v555
      %v1642 = vpop.f32.mrb[0].mxu0
      %v1643 = vadd.f32 0.0, %v1642
      %v1644 = vpop.f32.mrb[0].mxu0
      %v1645 = vpop.f32.mrb[0].mxu0
      %v1646 = vpop.f32.mrb[0].mxu0
      %1647 = vmatprep.mubr.bf16.mxu0 0
      %1648 = vmatmul.mubr.bf16.gmra.mrb[0].mxu0 %v558
      %v1649 = vpop.f32.mrb[0].mxu0
      %v1650 = vadd.f32 0.0, %v1649
      %v1651 = vpop.f32.mrb[0].mxu0
      %v1652 = vpop.f32.mrb[0].mxu0
      %v1653 = vadd.f32 0.0, %v1652
      %v1654 = vpop.f32.mrb[0].mxu0
      %1655 = vmatprep.mubr.bf16.mxu0 0
      %1656 = vmatmul.mubr.bf16.gmra.mrb[0].mxu0 %v561
      %v1657 = vpop.f32.mrb[0].mxu0
      %v1658 = vadd.f32 0.0, %v1657
      %v1659 = vpop.f32.mrb[0].mxu0
      %v1660 = vpop.f32.mrb[0].mxu0
      %v1661 = vpop.f32.mrb[0].mxu0
      %1662 = vmatprep.mubr.bf16.mxu0 0
      %1663 = vmatmul.mubr.bf16.gmra.mrb[0].mxu0 %v564
      %v1664 = vpop.f32.mrb[0].mxu0
      %v1665 = vpop.f32.mrb[0].mxu0
      %v1666 = vpop.f32.mrb[0].mxu0
      %v1667 = vpop.f32.mrb[0].mxu0
      %1668 = vmatprep.mubr.bf16.mxu0 0
      %1669 = vmatmul.mubr.bf16.gmra.mrb[0].mxu0 %v567
      %v1670 = vpop.f32.mrb[0].mxu0
      %v1671 = vpop.f32.mrb[0].mxu0
      %v1672 = vpop.f32.mrb[0].mxu0
      %v1673 = vpop.f32.mrb[0].mxu0
      %1674 = vmatprep.mubr.bf16.mxu0 0
      %1675 = vmatmul.mubr.bf16.gmra.mrb[0].mxu0 %v570
      %v1676 = vpop.f32.mrb[0].mxu0
      %v1677 = vpop.f32.mrb[0].mxu0
      %v1678 = vpop.f32.mrb[0].mxu0
      %v1679 = vpop.f32.mrb[0].mxu0
      %1680 = vmatprep.mubr.bf16.mxu0 0
      %1681 = vmatmul.mubr.bf16.gmra.mrb[0].mxu0 %v573
      %v1682 = vpop.f32.mrb[0].mxu0
      %v1683 = vpop.f32.mrb[0].mxu0
      %v1684 = vpop.f32.mrb[0].mxu0
      %v1685 = vpop.f32.mrb[0].mxu0
      %1686 = vmatprep.mubr.bf16.mxu0 0
      %1687 = vmatmul.mubr.bf16.gmra.mrb[0].mxu0 %v576
      %v1688 = vpop.f32.mrb[0].mxu0
      %v1689 = vpop.f32.mrb[0].mxu0
      %v1690 = vpop.f32.mrb[0].mxu0
      %v1691 = vpop.f32.mrb[0].mxu0
      %1692 = vmatprep.mubr.bf16.mxu0 0
      %1693 = vmatmul.mubr.bf16.gmra.mrb[0].mxu0 %v579
      %v1694 = vpop.f32.mrb[0].mxu0
      %v1695 = vpop.f32.mrb[0].mxu0
      %v1696 = vpop.f32.mrb[0].mxu0
      %v1697 = vpop.f32.mrb[0].mxu0
      %1698 = vdwg.mxu0
      %vm1747 = vcmask 1045504
      %v1748 = vrot.slane %v1425, 2
      %v1749 = vrot.slane %v1428, 2
      %v1750 = vsel %vm1747, %v1748, %v1749
      %v1751 = vrot.slane %v1433, 2
      %v1752 = vsel %vm1747, %v1749, %v1751
      %v1753 = vrot.slane %v1440, 2
      %v1754 = vrot.slane %v1443, 2
      %v1755 = vsel %vm1747, %v1753, %v1754
      %v1756 = vrot.slane %v1448, 2
      %v1757 = vsel %vm1747, %v1754, %v1756
      %v1758 = vrot.slane %v1455, 2
      %v1759 = vrot.slane %v1458, 2
      %v1760 = vsel %vm1747, %v1758, %v1759
      %v1761 = vrot.slane %v1463, 2
      %v1762 = vsel %vm1747, %v1759, %v1761
      %v1763 = vrot.slane %v1470, 2
      %v1764 = vrot.slane %v1473, 2
      %v1765 = vsel %vm1747, %v1763, %v1764
      %v1766 = vrot.slane %v1478, 2
      %v1767 = vsel %vm1747, %v1764, %v1766
      %v1768 = vrot.slane %v1485, 2
      %v1769 = vrot.slane %v1488, 2
      %v1770 = vsel %vm1747, %v1768, %v1769
      %v1771 = vrot.slane %v1493, 2
      %v1772 = vsel %vm1747, %v1769, %v1771
      %v1773 = vrot.slane %v1500, 2
      %v1774 = vrot.slane %v1503, 2
      %v1775 = vsel %vm1747, %v1773, %v1774
      %v1776 = vrot.slane %v1508, 2
      %v1777 = vsel %vm1747, %v1774, %v1776
      %v1778 = vrot.slane %v1515, 2
      %v1779 = vrot.slane %v1518, 2
      %v1780 = vsel %vm1747, %v1778, %v1779
      %v1781 = vrot.slane %v1523, 2
      %v1782 = vsel %vm1747, %v1779, %v1781
      %v1783 = vrot.slane %v1530, 2
      %v1784 = vrot.slane %v1533, 2
      %v1785 = vsel %vm1747, %v1783, %v1784
      %v1786 = vrot.slane %v1538, 2
      %v1787 = vsel %vm1747, %v1784, %v1786
      %v1788 = vrot.slane %v1545, 2
      %v1789 = vrot.slane %v1548, 2
      %v1790 = vsel %vm1747, %v1788, %v1789
      %v1791 = vrot.slane %v1553, 2
      %v1792 = vsel %vm1747, %v1789, %v1791
      %v1793 = vrot.slane %v1560, 2
      %v1794 = vrot.slane %v1563, 2
      %v1795 = vsel %vm1747, %v1793, %v1794
      %v1796 = vrot.slane %v1568, 2
      %v1797 = vsel %vm1747, %v1794, %v1796
      %v1798 = vrot.slane %v1575, 2
      %v1799 = vrot.slane %v1578, 2
      %v1800 = vsel %vm1747, %v1798, %v1799
      %v1801 = vrot.slane %v1583, 2
      %v1802 = vsel %vm1747, %v1799, %v1801
      %v1803 = vrot.slane %v1590, 2
      %v1804 = vrot.slane %v1593, 2
      %v1805 = vsel %vm1747, %v1803, %v1804
      %v1806 = vrot.slane %v1598, 2
      %v1807 = vsel %vm1747, %v1804, %v1806
      %v1808 = vrot.slane %v1605, 2
      %v1809 = vrot.slane %v1608, 2
      %v1810 = vsel %vm1747, %v1808, %v1809
      %v1811 = vrot.slane %v1613, 2
      %v1812 = vsel %vm1747, %v1809, %v1811
      %v1813 = vrot.slane %v1620, 2
      %v1814 = vrot.slane %v1623, 2
      %v1815 = vsel %vm1747, %v1813, %v1814
      %v1816 = vrot.slane %v1628, 2
      %v1817 = vsel %vm1747, %v1814, %v1816
      %v1818 = vrot.slane %v1635, 2
      %v1819 = vrot.slane %v1638, 2
      %v1820 = vsel %vm1747, %v1818, %v1819
      %v1821 = vrot.slane %v1643, 2
      %v1822 = vsel %vm1747, %v1819, %v1821
      %v1823 = vrot.slane %v1650, 2
      %v1824 = vrot.slane %v1653, 2
      %v1825 = vsel %vm1747, %v1823, %v1824
      %v1826 = vrot.slane %v1658, 2
      %v1827 = vsel %vm1747, %v1824, %v1826
      %v1860 = vadd.f32 %v1353, %v1750
      %v1861 = vadd.f32 %v1354, %v1752
      %v1862 = vadd.f32 %v1355, %v1755
      %v1863 = vadd.f32 %v1356, %v1757
      %v1864 = vadd.f32 %v1357, %v1760
      %v1865 = vadd.f32 %v1358, %v1762
      %v1866 = vadd.f32 %v1359, %v1765
      %v1867 = vadd.f32 %v1360, %v1767
      %v1868 = vadd.f32 %v1361, %v1770
      %v1869 = vadd.f32 %v1362, %v1772
      %v1870 = vadd.f32 %v1363, %v1775
      %v1871 = vadd.f32 %v1364, %v1777
      %v1872 = vadd.f32 %v1365, %v1780
      %v1873 = vadd.f32 %v1366, %v1782
      %v1874 = vadd.f32 %v1367, %v1785
      %v1875 = vadd.f32 %v1368, %v1787
      %v1876 = vadd.f32 %v1369, %v1790
      %v1877 = vadd.f32 %v1370, %v1792
      %v1878 = vadd.f32 %v1371, %v1795
      %v1879 = vadd.f32 %v1372, %v1797
      %v1880 = vadd.f32 %v1373, %v1800
      %v1881 = vadd.f32 %v1374, %v1802
      %v1882 = vadd.f32 %v1375, %v1805
      %v1883 = vadd.f32 %v1376, %v1807
      %v1884 = vadd.f32 %v1377, %v1810
      %v1885 = vadd.f32 %v1378, %v1812
      %v1886 = vadd.f32 %v1379, %v1815
      %v1887 = vadd.f32 %v1380, %v1817
      %v1888 = vadd.f32 %v1381, %v1820
      %v1889 = vadd.f32 %v1382, %v1822
      %v1890 = vadd.f32 %v1383, %v1825
      %v1891 = vadd.f32 %v1384, %v1827
      %s1892 = scalar_lea.vmem %s1, 6
      %v1893 = vld [vmem:[%s1892] sm:$0x3]
      %v1895 = vsel %vm581, %v1893, 0
      %1897 = vmatprep.subr.bf16.mxu0 0
      %1898 = vmatpush1.bf16.msra.mxu0 %v1895
      %1899 = vmatprep.subr.bf16.mxu0 0
      %1900 = vmatpush1.bf16.msra.mxu0 0
      %1901 = vmatprep.subr.bf16.mxu0 0
      %1902 = vmatpush1.bf16.msra.mxu0 0
      %1903 = vmatprep.subr.bf16.mxu0 0
      %1904 = vmatpush1.bf16.msra.mxu0 0
      %1905 = vmatprep.subr.bf16.mxu0 0
      %1906 = vmatpush1.bf16.msra.mxu0 0
      %1907 = vmatprep.subr.bf16.mxu0 0
      %1908 = vmatpush1.bf16.msra.mxu0 0
      %1909 = vmatprep.subr.bf16.mxu0 0
      %1910 = vmatpush1.bf16.msra.mxu0 0
      %1911 = vmatprep.subr.bf16.mxu0 0
      %1912 = vmatpush1.bf16.msra.mxu0 0
      %1913 = vmatprep.subr.bf16.mxu0 0
      %1914 = vmatpush1.bf16.msra.mxu0 0
      %1915 = vmatprep.subr.bf16.mxu0 0
      %1916 = vmatpush1.bf16.msra.mxu0 0
      %1917 = vmatprep.subr.bf16.mxu0 0
      %1918 = vmatpush1.bf16.msra.mxu0 0
      %1919 = vmatprep.subr.bf16.mxu0 0
      %1920 = vmatpush1.bf16.msra.mxu0 0
      %1921 = vmatprep.subr.bf16.mxu0 0
      %1922 = vmatpush1.bf16.msra.mxu0 0
      %1923 = vmatprep.subr.bf16.mxu0 0
      %1924 = vmatpush1.bf16.msra.mxu0 0
      %1925 = vmatprep.subr.bf16.mxu0 0
      %1926 = vmatpush1.bf16.msra.mxu0 0
      %1927 = vmatprep.subr.bf16.mxu0 0
      %1928 = vmatpush1.bf16.msra.mxu0 0
      %1929 = vmatprep.mubr.bf16.mxu0 0
      %1930 = vmatmul.mubr.bf16.gmra.mrb[0].mxu0 %v468
      %v1931 = vpop.f32.mrb[0].mxu0
      %v1932 = vpop.f32.mrb[0].mxu0
      %v1933 = vpop.f32.mrb[0].mxu0
      %v1934 = vpop.f32.mrb[0].mxu0
      %1935 = vmatprep.mubr.bf16.mxu0 0
      %1936 = vmatmul.mubr.bf16.gmra.mrb[0].mxu0 %v471
      %v1937 = vpop.f32.mrb[0].mxu0
      %v1938 = vpop.f32.mrb[0].mxu0
      %v1939 = vpop.f32.mrb[0].mxu0
      %v1940 = vpop.f32.mrb[0].mxu0
      %1941 = vmatprep.mubr.bf16.mxu0 0
      %1942 = vmatmul.mubr.bf16.gmra.mrb[0].mxu0 %v474
      %v1943 = vpop.f32.mrb[0].mxu0
      %v1944 = vadd.f32 0.0, %v1943
      %v1945 = vpop.f32.mrb[0].mxu0
      %v1946 = vpop.f32.mrb[0].mxu0
      %v1947 = vadd.f32 0.0, %v1946
      %v1948 = vpop.f32.mrb[0].mxu0
      %1949 = vmatprep.mubr.bf16.mxu0 0
      %1950 = vmatmul.mubr.bf16.gmra.mrb[0].mxu0 %v477
      %v1951 = vpop.f32.mrb[0].mxu0
      %v1952 = vpop.f32.mrb[0].mxu0
      %v1953 = vpop.f32.mrb[0].mxu0
      %v1954 = vpop.f32.mrb[0].mxu0
      %1955 = vmatprep.mubr.bf16.mxu0 0
      %1956 = vmatmul.mubr.bf16.gmra.mrb[0].mxu0 %v480
      %v1957 = vpop.f32.mrb[0].mxu0
      %v1958 = vadd.f32 0.0, %v1957
      %v1959 = vpop.f32.mrb[0].mxu0
      %v1960 = vpop.f32.mrb[0].mxu0
      %v1961 = vadd.f32 0.0, %v1960
      %v1962 = vpop.f32.mrb[0].mxu0
      %1963 = vmatprep.mubr.bf16.mxu0 0
      %1964 = vmatmul.mubr.bf16.gmra.mrb[0].mxu0 %v483
      %v1965 = vpop.f32.mrb[0].mxu0
      %v1966 = vpop.f32.mrb[0].mxu0
      %v1967 = vpop.f32.mrb[0].mxu0
      %v1968 = vpop.f32.mrb[0].mxu0
      %1969 = vmatprep.mubr.bf16.mxu0 0
      %1970 = vmatmul.mubr.bf16.gmra.mrb[0].mxu0 %v486
      %v1971 = vpop.f32.mrb[0].mxu0
      %v1972 = vadd.f32 0.0, %v1971
      %v1973 = vpop.f32.mrb[0].mxu0
      %v1974 = vpop.f32.mrb[0].mxu0
      %v1975 = vadd.f32 0.0, %v1974
      %v1976 = vpop.f32.mrb[0].mxu0
      %1977 = vmatprep.mubr.bf16.mxu0 0
      %1978 = vmatmul.mubr.bf16.gmra.mrb[0].mxu0 %v489
      %v1979 = vpop.f32.mrb[0].mxu0
      %v1980 = vpop.f32.mrb[0].mxu0
      %v1981 = vpop.f32.mrb[0].mxu0
      %v1982 = vpop.f32.mrb[0].mxu0
      %1983 = vmatprep.mubr.bf16.mxu0 0
      %1984 = vmatmul.mubr.bf16.gmra.mrb[0].mxu0 %v492
      %v1985 = vpop.f32.mrb[0].mxu0
      %v1986 = vadd.f32 0.0, %v1985
      %v1987 = vpop.f32.mrb[0].mxu0
      %v1988 = vpop.f32.mrb[0].mxu0
      %v1989 = vadd.f32 0.0, %v1988
      %v1990 = vpop.f32.mrb[0].mxu0
      %1991 = vmatprep.mubr.bf16.mxu0 0
      %1992 = vmatmul.mubr.bf16.gmra.mrb[0].mxu0 %v495
      %v1993 = vpop.f32.mrb[0].mxu0
      %v1994 = vpop.f32.mrb[0].mxu0
      %v1995 = vpop.f32.mrb[0].mxu0
      %v1996 = vpop.f32.mrb[0].mxu0
      %1997 = vmatprep.mubr.bf16.mxu0 0
      %1998 = vmatmul.mubr.bf16.gmra.mrb[0].mxu0 %v498
      %v1999 = vpop.f32.mrb[0].mxu0
      %v2000 = vadd.f32 0.0, %v1999
      %v2001 = vpop.f32.mrb[0].mxu0
      %v2002 = vpop.f32.mrb[0].mxu0
      %v2003 = vadd.f32 0.0, %v2002
      %v2004 = vpop.f32.mrb[0].mxu0
      %2005 = vmatprep.mubr.bf16.mxu0 0
      %2006 = vmatmul.mubr.bf16.gmra.mrb[0].mxu0 %v501
      %v2007 = vpop.f32.mrb[0].mxu0
      %v2008 = vpop.f32.mrb[0].mxu0
      %v2009 = vpop.f32.mrb[0].mxu0
      %v2010 = vpop.f32.mrb[0].mxu0
      %2011 = vmatprep.mubr.bf16.mxu0 0
      %2012 = vmatmul.mubr.bf16.gmra.mrb[0].mxu0 %v504
      %v2013 = vpop.f32.mrb[0].mxu0
      %v2014 = vadd.f32 0.0, %v2013
      %v2015 = vpop.f32.mrb[0].mxu0
      %v2016 = vpop.f32.mrb[0].mxu0
      %v2017 = vadd.f32 0.0, %v2016
      %v2018 = vpop.f32.mrb[0].mxu0
      %2019 = vmatprep.mubr.bf16.mxu0 0
      %2020 = vmatmul.mubr.bf16.gmra.mrb[0].mxu0 %v507
      %v2021 = vpop.f32.mrb[0].mxu0
      %v2022 = vpop.f32.mrb[0].mxu0
      %v2023 = vpop.f32.mrb[0].mxu0
      %v2024 = vpop.f32.mrb[0].mxu0
      %2025 = vmatprep.mubr.bf16.mxu0 0
      %2026 = vmatmul.mubr.bf16.gmra.mrb[0].mxu0 %v510
      %v2027 = vpop.f32.mrb[0].mxu0
      %v2028 = vadd.f32 0.0, %v2027
      %v2029 = vpop.f32.mrb[0].mxu0
      %v2030 = vpop.f32.mrb[0].mxu0
      %v2031 = vadd.f32 0.0, %v2030
      %v2032 = vpop.f32.mrb[0].mxu0
      %2033 = vmatprep.mubr.bf16.mxu0 0
      %2034 = vmatmul.mubr.bf16.gmra.mrb[0].mxu0 %v513
      %v2035 = vpop.f32.mrb[0].mxu0
      %v2036 = vpop.f32.mrb[0].mxu0
      %v2037 = vpop.f32.mrb[0].mxu0
      %v2038 = vpop.f32.mrb[0].mxu0
      %2039 = vmatprep.mubr.bf16.mxu0 0
      %2040 = vmatmul.mubr.bf16.gmra.mrb[0].mxu0 %v516
      %v2041 = vpop.f32.mrb[0].mxu0
      %v2042 = vadd.f32 0.0, %v2041
      %v2043 = vpop.f32.mrb[0].mxu0
      %v2044 = vpop.f32.mrb[0].mxu0
      %v2045 = vadd.f32 0.0, %v2044
      %v2046 = vpop.f32.mrb[0].mxu0
      %2047 = vmatprep.mubr.bf16.mxu0 0
      %2048 = vmatmul.mubr.bf16.gmra.mrb[0].mxu0 %v519
      %v2049 = vpop.f32.mrb[0].mxu0
      %v2050 = vpop.f32.mrb[0].mxu0
      %v2051 = vpop.f32.mrb[0].mxu0
      %v2052 = vpop.f32.mrb[0].mxu0
      %2053 = vmatprep.mubr.bf16.mxu0 0
      %2054 = vmatmul.mubr.bf16.gmra.mrb[0].mxu0 %v522
      %v2055 = vpop.f32.mrb[0].mxu0
      %v2056 = vadd.f32 0.0, %v2055
      %v2057 = vpop.f32.mrb[0].mxu0
      %v2058 = vpop.f32.mrb[0].mxu0
      %v2059 = vadd.f32 0.0, %v2058
      %v2060 = vpop.f32.mrb[0].mxu0
      %2061 = vmatprep.mubr.bf16.mxu0 0
      %2062 = vmatmul.mubr.bf16.gmra.mrb[0].mxu0 %v525
      %v2063 = vpop.f32.mrb[0].mxu0
      %v2064 = vpop.f32.mrb[0].mxu0
      %v2065 = vpop.f32.mrb[0].mxu0
      %v2066 = vpop.f32.mrb[0].mxu0
      %2067 = vmatprep.mubr.bf16.mxu0 0
      %2068 = vmatmul.mubr.bf16.gmra.mrb[0].mxu0 %v528
      %v2069 = vpop.f32.mrb[0].mxu0
      %v2070 = vadd.f32 0.0, %v2069
      %v2071 = vpop.f32.mrb[0].mxu0
      %v2072 = vpop.f32.mrb[0].mxu0
      %v2073 = vadd.f32 0.0, %v2072
      %v2074 = vpop.f32.mrb[0].mxu0
      %2075 = vmatprep.mubr.bf16.mxu0 0
      %2076 = vmatmul.mubr.bf16.gmra.mrb[0].mxu0 %v531
      %v2077 = vpop.f32.mrb[0].mxu0
      %v2078 = vpop.f32.mrb[0].mxu0
      %v2079 = vpop.f32.mrb[0].mxu0
      %v2080 = vpop.f32.mrb[0].mxu0
      %2081 = vmatprep.mubr.bf16.mxu0 0
      %2082 = vmatmul.mubr.bf16.gmra.mrb[0].mxu0 %v534
      %v2083 = vpop.f32.mrb[0].mxu0
      %v2084 = vadd.f32 0.0, %v2083
      %v2085 = vpop.f32.mrb[0].mxu0
      %v2086 = vpop.f32.mrb[0].mxu0
      %v2087 = vadd.f32 0.0, %v2086
      %v2088 = vpop.f32.mrb[0].mxu0
      %2089 = vmatprep.mubr.bf16.mxu0 0
      %2090 = vmatmul.mubr.bf16.gmra.mrb[0].mxu0 %v537
      %v2091 = vpop.f32.mrb[0].mxu0
      %v2092 = vpop.f32.mrb[0].mxu0
      %v2093 = vpop.f32.mrb[0].mxu0
      %v2094 = vpop.f32.mrb[0].mxu0
      %2095 = vmatprep.mubr.bf16.mxu0 0
      %2096 = vmatmul.mubr.bf16.gmra.mrb[0].mxu0 %v540
      %v2097 = vpop.f32.mrb[0].mxu0
      %v2098 = vadd.f32 0.0, %v2097
      %v2099 = vpop.f32.mrb[0].mxu0
      %v2100 = vpop.f32.mrb[0].mxu0
      %v2101 = vadd.f32 0.0, %v2100
      %v2102 = vpop.f32.mrb[0].mxu0
      %2103 = vmatprep.mubr.bf16.mxu0 0
      %2104 = vmatmul.mubr.bf16.gmra.mrb[0].mxu0 %v543
      %v2105 = vpop.f32.mrb[0].mxu0
      %v2106 = vpop.f32.mrb[0].mxu0
      %v2107 = vpop.f32.mrb[0].mxu0
      %v2108 = vpop.f32.mrb[0].mxu0
      %2109 = vmatprep.mubr.bf16.mxu0 0
      %2110 = vmatmul.mubr.bf16.gmra.mrb[0].mxu0 %v546
      %v2111 = vpop.f32.mrb[0].mxu0
      %v2112 = vadd.f32 0.0, %v2111
      %v2113 = vpop.f32.mrb[0].mxu0
      %v2114 = vpop.f32.mrb[0].mxu0
      %v2115 = vadd.f32 0.0, %v2114
      %v2116 = vpop.f32.mrb[0].mxu0
      %2117 = vmatprep.mubr.bf16.mxu0 0
      %2118 = vmatmul.mubr.bf16.gmra.mrb[0].mxu0 %v549
      %v2119 = vpop.f32.mrb[0].mxu0
      %v2120 = vpop.f32.mrb[0].mxu0
      %v2121 = vpop.f32.mrb[0].mxu0
      %v2122 = vpop.f32.mrb[0].mxu0
      %2123 = vmatprep.mubr.bf16.mxu0 0
      %2124 = vmatmul.mubr.bf16.gmra.mrb[0].mxu0 %v552
      %v2125 = vpop.f32.mrb[0].mxu0
      %v2126 = vadd.f32 0.0, %v2125
      %v2127 = vpop.f32.mrb[0].mxu0
      %v2128 = vpop.f32.mrb[0].mxu0
      %v2129 = vadd.f32 0.0, %v2128
      %v2130 = vpop.f32.mrb[0].mxu0
      %2131 = vmatprep.mubr.bf16.mxu0 0
      %2132 = vmatmul.mubr.bf16.gmra.mrb[0].mxu0 %v555
      %v2133 = vpop.f32.mrb[0].mxu0
      %v2134 = vpop.f32.mrb[0].mxu0
      %v2135 = vpop.f32.mrb[0].mxu0
      %v2136 = vpop.f32.mrb[0].mxu0
      %2137 = vmatprep.mubr.bf16.mxu0 0
      %2138 = vmatmul.mubr.bf16.gmra.mrb[0].mxu0 %v558
      %v2139 = vpop.f32.mrb[0].mxu0
      %v2140 = vadd.f32 0.0, %v2139
      %v2141 = vpop.f32.mrb[0].mxu0
      %v2142 = vpop.f32.mrb[0].mxu0
      %v2143 = vadd.f32 0.0, %v2142
      %v2144 = vpop.f32.mrb[0].mxu0
      %2145 = vmatprep.mubr.bf16.mxu0 0
      %2146 = vmatmul.mubr.bf16.gmra.mrb[0].mxu0 %v561
      %v2147 = vpop.f32.mrb[0].mxu0
      %v2148 = vpop.f32.mrb[0].mxu0
      %v2149 = vpop.f32.mrb[0].mxu0
      %v2150 = vpop.f32.mrb[0].mxu0
      %2151 = vmatprep.mubr.bf16.mxu0 0
      %2152 = vmatmul.mubr.bf16.gmra.mrb[0].mxu0 %v564
      %v2153 = vpop.f32.mrb[0].mxu0
      %v2154 = vadd.f32 0.0, %v2153
      %v2155 = vpop.f32.mrb[0].mxu0
      %v2156 = vpop.f32.mrb[0].mxu0
      %v2157 = vadd.f32 0.0, %v2156
      %v2158 = vpop.f32.mrb[0].mxu0
      %2159 = vmatprep.mubr.bf16.mxu0 0
      %2160 = vmatmul.mubr.bf16.gmra.mrb[0].mxu0 %v567
      %v2161 = vpop.f32.mrb[0].mxu0
      %v2162 = vpop.f32.mrb[0].mxu0
      %v2163 = vpop.f32.mrb[0].mxu0
      %v2164 = vpop.f32.mrb[0].mxu0
      %2165 = vmatprep.mubr.bf16.mxu0 0
      %2166 = vmatmul.mubr.bf16.gmra.mrb[0].mxu0 %v570
      %v2167 = vpop.f32.mrb[0].mxu0
      %v2168 = vpop.f32.mrb[0].mxu0
      %v2169 = vpop.f32.mrb[0].mxu0
      %v2170 = vpop.f32.mrb[0].mxu0
      %2171 = vmatprep.mubr.bf16.mxu0 0
      %2172 = vmatmul.mubr.bf16.gmra.mrb[0].mxu0 %v573
      %v2173 = vpop.f32.mrb[0].mxu0
      %v2174 = vpop.f32.mrb[0].mxu0
      %v2175 = vpop.f32.mrb[0].mxu0
      %v2176 = vpop.f32.mrb[0].mxu0
      %2177 = vmatprep.mubr.bf16.mxu0 0
      %2178 = vmatmul.mubr.bf16.gmra.mrb[0].mxu0 %v576
      %v2179 = vpop.f32.mrb[0].mxu0
      %v2180 = vpop.f32.mrb[0].mxu0
      %v2181 = vpop.f32.mrb[0].mxu0
      %v2182 = vpop.f32.mrb[0].mxu0
      %2183 = vmatprep.mubr.bf16.mxu0 0
      %2184 = vmatmul.mubr.bf16.gmra.mrb[0].mxu0 %v579
      %v2185 = vpop.f32.mrb[0].mxu0
      %v2186 = vpop.f32.mrb[0].mxu0
      %v2187 = vpop.f32.mrb[0].mxu0
      %v2188 = vpop.f32.mrb[0].mxu0
      %2189 = vdwg.mxu0
      %v2190 = vadd.f32 %v1860, %v1944
      %v2191 = vadd.f32 %v1861, %v1947
      %v2192 = vadd.f32 %v1862, %v1958
      %v2193 = vadd.f32 %v1863, %v1961
      %v2194 = vadd.f32 %v1864, %v1972
      %v2195 = vadd.f32 %v1865, %v1975
      %v2196 = vadd.f32 %v1866, %v1986
      %v2197 = vadd.f32 %v1867, %v1989
      %v2198 = vadd.f32 %v1868, %v2000
      %v2199 = vadd.f32 %v1869, %v2003
      %v2200 = vadd.f32 %v1870, %v2014
      %v2201 = vadd.f32 %v1871, %v2017
      %v2202 = vadd.f32 %v1872, %v2028
      %v2203 = vadd.f32 %v1873, %v2031
      %v2204 = vadd.f32 %v1874, %v2042
      %v2205 = vadd.f32 %v1875, %v2045
      %v2206 = vadd.f32 %v1876, %v2056
      %v2207 = vadd.f32 %v1877, %v2059
      %v2208 = vadd.f32 %v1878, %v2070
      %v2209 = vadd.f32 %v1879, %v2073
      %v2210 = vadd.f32 %v1880, %v2084
      %v2211 = vadd.f32 %v1881, %v2087
      %v2212 = vadd.f32 %v1882, %v2098
      %v2213 = vadd.f32 %v1883, %v2101
      %v2214 = vadd.f32 %v1884, %v2112
      %v2215 = vadd.f32 %v1885, %v2115
      %v2216 = vadd.f32 %v1886, %v2126
      %v2217 = vadd.f32 %v1887, %v2129
      %v2218 = vadd.f32 %v1888, %v2140
      %v2219 = vadd.f32 %v1889, %v2143
      %v2220 = vadd.f32 %v1890, %v2154
      %v2221 = vadd.f32 %v1891, %v2157
      %s2222 = scalar_lea.vmem %s1, 8
      %v2223 = vld [vmem:[%s2222] sm:$0x3]
      %v2225 = vsel %vm581, %v2223, 0
      %2227 = vmatprep.subr.bf16.mxu0 0
      %2228 = vmatpush1.bf16.msra.mxu0 %v2225
      %2229 = vmatprep.subr.bf16.mxu0 0
      %2230 = vmatpush1.bf16.msra.mxu0 0
      %2231 = vmatprep.subr.bf16.mxu0 0
      %2232 = vmatpush1.bf16.msra.mxu0 0
      %2233 = vmatprep.subr.bf16.mxu0 0
      %2234 = vmatpush1.bf16.msra.mxu0 0
      %2235 = vmatprep.subr.bf16.mxu0 0
      %2236 = vmatpush1.bf16.msra.mxu0 0
      %2237 = vmatprep.subr.bf16.mxu0 0
      %2238 = vmatpush1.bf16.msra.mxu0 0
      %2239 = vmatprep.subr.bf16.mxu0 0
      %2240 = vmatpush1.bf16.msra.mxu0 0
      %2241 = vmatprep.subr.bf16.mxu0 0
      %2242 = vmatpush1.bf16.msra.mxu0 0
      %2243 = vmatprep.subr.bf16.mxu0 0
      %2244 = vmatpush1.bf16.msra.mxu0 0
      %2245 = vmatprep.subr.bf16.mxu0 0
      %2246 = vmatpush1.bf16.msra.mxu0 0
      %2247 = vmatprep.subr.bf16.mxu0 0
      %2248 = vmatpush1.bf16.msra.mxu0 0
      %2249 = vmatprep.subr.bf16.mxu0 0
      %2250 = vmatpush1.bf16.msra.mxu0 0
      %2251 = vmatprep.subr.bf16.mxu0 0
      %2252 = vmatpush1.bf16.msra.mxu0 0
      %2253 = vmatprep.subr.bf16.mxu0 0
      %2254 = vmatpush1.bf16.msra.mxu0 0
      %2255 = vmatprep.subr.bf16.mxu0 0
      %2256 = vmatpush1.bf16.msra.mxu0 0
      %2257 = vmatprep.subr.bf16.mxu0 0
      %2258 = vmatpush1.bf16.msra.mxu0 0
      %2259 = vmatprep.mubr.bf16.mxu0 0
      %2260 = vmatmul.mubr.bf16.gmra.mrb[0].mxu0 %v468
      %v2261 = vpop.f32.mrb[0].mxu0
      %v2262 = vpop.f32.mrb[0].mxu0
      %v2263 = vpop.f32.mrb[0].mxu0
      %v2264 = vpop.f32.mrb[0].mxu0
      %2265 = vmatprep.mubr.bf16.mxu0 0
      %2266 = vmatmul.mubr.bf16.gmra.mrb[0].mxu0 %v471
      %v2267 = vpop.f32.mrb[0].mxu0
      %v2268 = vpop.f32.mrb[0].mxu0
      %v2269 = vpop.f32.mrb[0].mxu0
      %v2270 = vpop.f32.mrb[0].mxu0
      %2271 = vmatprep.mubr.bf16.mxu0 0
      %2272 = vmatmul.mubr.bf16.gmra.mrb[0].mxu0 %v474
      %v2273 = vpop.f32.mrb[0].mxu0
      %v2274 = vadd.f32 0.0, %v2273
      %v2275 = vpop.f32.mrb[0].mxu0
      %v2276 = vpop.f32.mrb[0].mxu0
      %v2277 = vadd.f32 0.0, %v2276
      %v2278 = vpop.f32.mrb[0].mxu0
      %2279 = vmatprep.mubr.bf16.mxu0 0
      %2280 = vmatmul.mubr.bf16.gmra.mrb[0].mxu0 %v477
      %v2281 = vpop.f32.mrb[0].mxu0
      %v2282 = vadd.f32 0.0, %v2281
      %v2283 = vpop.f32.mrb[0].mxu0
      %v2284 = vpop.f32.mrb[0].mxu0
      %v2285 = vpop.f32.mrb[0].mxu0
      %2286 = vmatprep.mubr.bf16.mxu0 0
      %2287 = vmatmul.mubr.bf16.gmra.mrb[0].mxu0 %v480
      %v2288 = vpop.f32.mrb[0].mxu0
      %v2289 = vadd.f32 0.0, %v2288
      %v2290 = vpop.f32.mrb[0].mxu0
      %v2291 = vpop.f32.mrb[0].mxu0
      %v2292 = vadd.f32 0.0, %v2291
      %v2293 = vpop.f32.mrb[0].mxu0
      %2294 = vmatprep.mubr.bf16.mxu0 0
      %2295 = vmatmul.mubr.bf16.gmra.mrb[0].mxu0 %v483
      %v2296 = vpop.f32.mrb[0].mxu0
      %v2297 = vadd.f32 0.0, %v2296
      %v2298 = vpop.f32.mrb[0].mxu0
      %v2299 = vpop.f32.mrb[0].mxu0
      %v2300 = vpop.f32.mrb[0].mxu0
      %2301 = vmatprep.mubr.bf16.mxu0 0
      %2302 = vmatmul.mubr.bf16.gmra.mrb[0].mxu0 %v486
      %v2303 = vpop.f32.mrb[0].mxu0
      %v2304 = vadd.f32 0.0, %v2303
      %v2305 = vpop.f32.mrb[0].mxu0
      %v2306 = vpop.f32.mrb[0].mxu0
      %v2307 = vadd.f32 0.0, %v2306
      %v2308 = vpop.f32.mrb[0].mxu0
      %2309 = vmatprep.mubr.bf16.mxu0 0
      %2310 = vmatmul.mubr.bf16.gmra.mrb[0].mxu0 %v489
      %v2311 = vpop.f32.mrb[0].mxu0
      %v2312 = vadd.f32 0.0, %v2311
      %v2313 = vpop.f32.mrb[0].mxu0
      %v2314 = vpop.f32.mrb[0].mxu0
      %v2315 = vpop.f32.mrb[0].mxu0
      %2316 = vmatprep.mubr.bf16.mxu0 0
      %2317 = vmatmul.mubr.bf16.gmra.mrb[0].mxu0 %v492
      %v2318 = vpop.f32.mrb[0].mxu0
      %v2319 = vadd.f32 0.0, %v2318
      %v2320 = vpop.f32.mrb[0].mxu0
      %v2321 = vpop.f32.mrb[0].mxu0
      %v2322 = vadd.f32 0.0, %v2321
      %v2323 = vpop.f32.mrb[0].mxu0
      %2324 = vmatprep.mubr.bf16.mxu0 0
      %2325 = vmatmul.mubr.bf16.gmra.mrb[0].mxu0 %v495
      %v2326 = vpop.f32.mrb[0].mxu0
      %v2327 = vadd.f32 0.0, %v2326
      %v2328 = vpop.f32.mrb[0].mxu0
      %v2329 = vpop.f32.mrb[0].mxu0
      %v2330 = vpop.f32.mrb[0].mxu0
      %2331 = vmatprep.mubr.bf16.mxu0 0
      %2332 = vmatmul.mubr.bf16.gmra.mrb[0].mxu0 %v498
      %v2333 = vpop.f32.mrb[0].mxu0
      %v2334 = vadd.f32 0.0, %v2333
      %v2335 = vpop.f32.mrb[0].mxu0
      %v2336 = vpop.f32.mrb[0].mxu0
      %v2337 = vadd.f32 0.0, %v2336
      %v2338 = vpop.f32.mrb[0].mxu0
      %2339 = vmatprep.mubr.bf16.mxu0 0
      %2340 = vmatmul.mubr.bf16.gmra.mrb[0].mxu0 %v501
      %v2341 = vpop.f32.mrb[0].mxu0
      %v2342 = vadd.f32 0.0, %v2341
      %v2343 = vpop.f32.mrb[0].mxu0
      %v2344 = vpop.f32.mrb[0].mxu0
      %v2345 = vpop.f32.mrb[0].mxu0
      %2346 = vmatprep.mubr.bf16.mxu0 0
      %2347 = vmatmul.mubr.bf16.gmra.mrb[0].mxu0 %v504
      %v2348 = vpop.f32.mrb[0].mxu0
      %v2349 = vadd.f32 0.0, %v2348
      %v2350 = vpop.f32.mrb[0].mxu0
      %v2351 = vpop.f32.mrb[0].mxu0
      %v2352 = vadd.f32 0.0, %v2351
      %v2353 = vpop.f32.mrb[0].mxu0
      %2354 = vmatprep.mubr.bf16.mxu0 0
      %2355 = vmatmul.mubr.bf16.gmra.mrb[0].mxu0 %v507
      %v2356 = vpop.f32.mrb[0].mxu0
      %v2357 = vadd.f32 0.0, %v2356
      %v2358 = vpop.f32.mrb[0].mxu0
      %v2359 = vpop.f32.mrb[0].mxu0
      %v2360 = vpop.f32.mrb[0].mxu0
      %2361 = vmatprep.mubr.bf16.mxu0 0
      %2362 = vmatmul.mubr.bf16.gmra.mrb[0].mxu0 %v510
      %v2363 = vpop.f32.mrb[0].mxu0
      %v2364 = vadd.f32 0.0, %v2363
      %v2365 = vpop.f32.mrb[0].mxu0
      %v2366 = vpop.f32.mrb[0].mxu0
      %v2367 = vadd.f32 0.0, %v2366
      %v2368 = vpop.f32.mrb[0].mxu0
      %2369 = vmatprep.mubr.bf16.mxu0 0
      %2370 = vmatmul.mubr.bf16.gmra.mrb[0].mxu0 %v513
      %v2371 = vpop.f32.mrb[0].mxu0
      %v2372 = vadd.f32 0.0, %v2371
      %v2373 = vpop.f32.mrb[0].mxu0
      %v2374 = vpop.f32.mrb[0].mxu0
      %v2375 = vpop.f32.mrb[0].mxu0
      %2376 = vmatprep.mubr.bf16.mxu0 0
      %2377 = vmatmul.mubr.bf16.gmra.mrb[0].mxu0 %v516
      %v2378 = vpop.f32.mrb[0].mxu0
      %v2379 = vadd.f32 0.0, %v2378
      %v2380 = vpop.f32.mrb[0].mxu0
      %v2381 = vpop.f32.mrb[0].mxu0
      %v2382 = vadd.f32 0.0, %v2381
      %v2383 = vpop.f32.mrb[0].mxu0
      %2384 = vmatprep.mubr.bf16.mxu0 0
      %2385 = vmatmul.mubr.bf16.gmra.mrb[0].mxu0 %v519
      %v2386 = vpop.f32.mrb[0].mxu0
      %v2387 = vadd.f32 0.0, %v2386
      %v2388 = vpop.f32.mrb[0].mxu0
      %v2389 = vpop.f32.mrb[0].mxu0
      %v2390 = vpop.f32.mrb[0].mxu0
      %2391 = vmatprep.mubr.bf16.mxu0 0
      %2392 = vmatmul.mubr.bf16.gmra.mrb[0].mxu0 %v522
      %v2393 = vpop.f32.mrb[0].mxu0
      %v2394 = vadd.f32 0.0, %v2393
      %v2395 = vpop.f32.mrb[0].mxu0
      %v2396 = vpop.f32.mrb[0].mxu0
      %v2397 = vadd.f32 0.0, %v2396
      %v2398 = vpop.f32.mrb[0].mxu0
      %2399 = vmatprep.mubr.bf16.mxu0 0
      %2400 = vmatmul.mubr.bf16.gmra.mrb[0].mxu0 %v525
      %v2401 = vpop.f32.mrb[0].mxu0
      %v2402 = vadd.f32 0.0, %v2401
      %v2403 = vpop.f32.mrb[0].mxu0
      %v2404 = vpop.f32.mrb[0].mxu0
      %v2405 = vpop.f32.mrb[0].mxu0
      %2406 = vmatprep.mubr.bf16.mxu0 0
      %2407 = vmatmul.mubr.bf16.gmra.mrb[0].mxu0 %v528
      %v2408 = vpop.f32.mrb[0].mxu0
      %v2409 = vadd.f32 0.0, %v2408
      %v2410 = vpop.f32.mrb[0].mxu0
      %v2411 = vpop.f32.mrb[0].mxu0
      %v2412 = vadd.f32 0.0, %v2411
      %v2413 = vpop.f32.mrb[0].mxu0
      %2414 = vmatprep.mubr.bf16.mxu0 0
      %2415 = vmatmul.mubr.bf16.gmra.mrb[0].mxu0 %v531
      %v2416 = vpop.f32.mrb[0].mxu0
      %v2417 = vadd.f32 0.0, %v2416
      %v2418 = vpop.f32.mrb[0].mxu0
      %v2419 = vpop.f32.mrb[0].mxu0
      %v2420 = vpop.f32.mrb[0].mxu0
      %2421 = vmatprep.mubr.bf16.mxu0 0
      %2422 = vmatmul.mubr.bf16.gmra.mrb[0].mxu0 %v534
      %v2423 = vpop.f32.mrb[0].mxu0
      %v2424 = vadd.f32 0.0, %v2423
      %v2425 = vpop.f32.mrb[0].mxu0
      %v2426 = vpop.f32.mrb[0].mxu0
      %v2427 = vadd.f32 0.0, %v2426
      %v2428 = vpop.f32.mrb[0].mxu0
      %2429 = vmatprep.mubr.bf16.mxu0 0
      %2430 = vmatmul.mubr.bf16.gmra.mrb[0].mxu0 %v537
      %v2431 = vpop.f32.mrb[0].mxu0
      %v2432 = vadd.f32 0.0, %v2431
      %v2433 = vpop.f32.mrb[0].mxu0
      %v2434 = vpop.f32.mrb[0].mxu0
      %v2435 = vpop.f32.mrb[0].mxu0
      %2436 = vmatprep.mubr.bf16.mxu0 0
      %2437 = vmatmul.mubr.bf16.gmra.mrb[0].mxu0 %v540
      %v2438 = vpop.f32.mrb[0].mxu0
      %v2439 = vadd.f32 0.0, %v2438
      %v2440 = vpop.f32.mrb[0].mxu0
      %v2441 = vpop.f32.mrb[0].mxu0
      %v2442 = vadd.f32 0.0, %v2441
      %v2443 = vpop.f32.mrb[0].mxu0
      %2444 = vmatprep.mubr.bf16.mxu0 0
      %2445 = vmatmul.mubr.bf16.gmra.mrb[0].mxu0 %v543
      %v2446 = vpop.f32.mrb[0].mxu0
      %v2447 = vadd.f32 0.0, %v2446
      %v2448 = vpop.f32.mrb[0].mxu0
      %v2449 = vpop.f32.mrb[0].mxu0
      %v2450 = vpop.f32.mrb[0].mxu0
      %2451 = vmatprep.mubr.bf16.mxu0 0
      %2452 = vmatmul.mubr.bf16.gmra.mrb[0].mxu0 %v546
      %v2453 = vpop.f32.mrb[0].mxu0
      %v2454 = vadd.f32 0.0, %v2453
      %v2455 = vpop.f32.mrb[0].mxu0
      %v2456 = vpop.f32.mrb[0].mxu0
      %v2457 = vadd.f32 0.0, %v2456
      %v2458 = vpop.f32.mrb[0].mxu0
      %2459 = vmatprep.mubr.bf16.mxu0 0
      %2460 = vmatmul.mubr.bf16.gmra.mrb[0].mxu0 %v549
      %v2461 = vpop.f32.mrb[0].mxu0
      %v2462 = vadd.f32 0.0, %v2461
      %v2463 = vpop.f32.mrb[0].mxu0
      %v2464 = vpop.f32.mrb[0].mxu0
      %v2465 = vpop.f32.mrb[0].mxu0
      %2466 = vmatprep.mubr.bf16.mxu0 0
      %2467 = vmatmul.mubr.bf16.gmra.mrb[0].mxu0 %v552
      %v2468 = vpop.f32.mrb[0].mxu0
      %v2469 = vadd.f32 0.0, %v2468
      %v2470 = vpop.f32.mrb[0].mxu0
      %v2471 = vpop.f32.mrb[0].mxu0
      %v2472 = vadd.f32 0.0, %v2471
      %v2473 = vpop.f32.mrb[0].mxu0
      %2474 = vmatprep.mubr.bf16.mxu0 0
      %2475 = vmatmul.mubr.bf16.gmra.mrb[0].mxu0 %v555
      %v2476 = vpop.f32.mrb[0].mxu0
      %v2477 = vadd.f32 0.0, %v2476
      %v2478 = vpop.f32.mrb[0].mxu0
      %v2479 = vpop.f32.mrb[0].mxu0
      %v2480 = vpop.f32.mrb[0].mxu0
      %2481 = vmatprep.mubr.bf16.mxu0 0
      %2482 = vmatmul.mubr.bf16.gmra.mrb[0].mxu0 %v558
      %v2483 = vpop.f32.mrb[0].mxu0
      %v2484 = vadd.f32 0.0, %v2483
      %v2485 = vpop.f32.mrb[0].mxu0
      %v2486 = vpop.f32.mrb[0].mxu0
      %v2487 = vadd.f32 0.0, %v2486
      %v2488 = vpop.f32.mrb[0].mxu0
      %2489 = vmatprep.mubr.bf16.mxu0 0
      %2490 = vmatmul.mubr.bf16.gmra.mrb[0].mxu0 %v561
      %v2491 = vpop.f32.mrb[0].mxu0
      %v2492 = vadd.f32 0.0, %v2491
      %v2493 = vpop.f32.mrb[0].mxu0
      %v2494 = vpop.f32.mrb[0].mxu0
      %v2495 = vpop.f32.mrb[0].mxu0
      %2496 = vmatprep.mubr.bf16.mxu0 0
      %2497 = vmatmul.mubr.bf16.gmra.mrb[0].mxu0 %v564
      %v2498 = vpop.f32.mrb[0].mxu0
      %v2499 = vadd.f32 0.0, %v2498
      %v2500 = vpop.f32.mrb[0].mxu0
      %v2501 = vpop.f32.mrb[0].mxu0
      %v2502 = vadd.f32 0.0, %v2501
      %v2503 = vpop.f32.mrb[0].mxu0
      %2504 = vmatprep.mubr.bf16.mxu0 0
      %2505 = vmatmul.mubr.bf16.gmra.mrb[0].mxu0 %v567
      %v2506 = vpop.f32.mrb[0].mxu0
      %v2507 = vadd.f32 0.0, %v2506
      %v2508 = vpop.f32.mrb[0].mxu0
      %v2509 = vpop.f32.mrb[0].mxu0
      %v2510 = vpop.f32.mrb[0].mxu0
      %2511 = vmatprep.mubr.bf16.mxu0 0
      %2512 = vmatmul.mubr.bf16.gmra.mrb[0].mxu0 %v570
      %v2513 = vpop.f32.mrb[0].mxu0
      %v2514 = vpop.f32.mrb[0].mxu0
      %v2515 = vpop.f32.mrb[0].mxu0
      %v2516 = vpop.f32.mrb[0].mxu0
      %2517 = vmatprep.mubr.bf16.mxu0 0
      %2518 = vmatmul.mubr.bf16.gmra.mrb[0].mxu0 %v573
      %v2519 = vpop.f32.mrb[0].mxu0
      %v2520 = vpop.f32.mrb[0].mxu0
      %v2521 = vpop.f32.mrb[0].mxu0
      %v2522 = vpop.f32.mrb[0].mxu0
      %2523 = vmatprep.mubr.bf16.mxu0 0
      %2524 = vmatmul.mubr.bf16.gmra.mrb[0].mxu0 %v576
      %v2525 = vpop.f32.mrb[0].mxu0
      %v2526 = vpop.f32.mrb[0].mxu0
      %v2527 = vpop.f32.mrb[0].mxu0
      %v2528 = vpop.f32.mrb[0].mxu0
      %2529 = vmatprep.mubr.bf16.mxu0 0
      %2530 = vmatmul.mubr.bf16.gmra.mrb[0].mxu0 %v579
      %v2531 = vpop.f32.mrb[0].mxu0
      %v2532 = vpop.f32.mrb[0].mxu0
      %v2533 = vpop.f32.mrb[0].mxu0
      %v2534 = vpop.f32.mrb[0].mxu0
      %2535 = vdwg.mxu0
      %v2584 = vrot.slane %v2274, 1
      %v2585 = vrot.slane %v2277, 1
      %v2586 = vsel %vm1240, %v2584, %v2585
      %v2587 = vrot.slane %v2282, 1
      %v2588 = vsel %vm1240, %v2585, %v2587
      %v2589 = vrot.slane %v2289, 1
      %v2590 = vrot.slane %v2292, 1
      %v2591 = vsel %vm1240, %v2589, %v2590
      %v2592 = vrot.slane %v2297, 1
      %v2593 = vsel %vm1240, %v2590, %v2592
      %v2594 = vrot.slane %v2304, 1
      %v2595 = vrot.slane %v2307, 1
      %v2596 = vsel %vm1240, %v2594, %v2595
      %v2597 = vrot.slane %v2312, 1
      %v2598 = vsel %vm1240, %v2595, %v2597
      %v2599 = vrot.slane %v2319, 1
      %v2600 = vrot.slane %v2322, 1
      %v2601 = vsel %vm1240, %v2599, %v2600
      %v2602 = vrot.slane %v2327, 1
      %v2603 = vsel %vm1240, %v2600, %v2602
      %v2604 = vrot.slane %v2334, 1
      %v2605 = vrot.slane %v2337, 1
      %v2606 = vsel %vm1240, %v2604, %v2605
      %v2607 = vrot.slane %v2342, 1
      %v2608 = vsel %vm1240, %v2605, %v2607
      %v2609 = vrot.slane %v2349, 1
      %v2610 = vrot.slane %v2352, 1
      %v2611 = vsel %vm1240, %v2609, %v2610
      %v2612 = vrot.slane %v2357, 1
      %v2613 = vsel %vm1240, %v2610, %v2612
      %v2614 = vrot.slane %v2364, 1
      %v2615 = vrot.slane %v2367, 1
      %v2616 = vsel %vm1240, %v2614, %v2615
      %v2617 = vrot.slane %v2372, 1
      %v2618 = vsel %vm1240, %v2615, %v2617
      %v2619 = vrot.slane %v2379, 1
      %v2620 = vrot.slane %v2382, 1
      %v2621 = vsel %vm1240, %v2619, %v2620
      %v2622 = vrot.slane %v2387, 1
      %v2623 = vsel %vm1240, %v2620, %v2622
      %v2624 = vrot.slane %v2394, 1
      %v2625 = vrot.slane %v2397, 1
      %v2626 = vsel %vm1240, %v2624, %v2625
      %v2627 = vrot.slane %v2402, 1
      %v2628 = vsel %vm1240, %v2625, %v2627
      %v2629 = vrot.slane %v2409, 1
      %v2630 = vrot.slane %v2412, 1
      %v2631 = vsel %vm1240, %v2629, %v2630
      %v2632 = vrot.slane %v2417, 1
      %v2633 = vsel %vm1240, %v2630, %v2632
      %v2634 = vrot.slane %v2424, 1
      %v2635 = vrot.slane %v2427, 1
      %v2636 = vsel %vm1240, %v2634, %v2635
      %v2637 = vrot.slane %v2432, 1
      %v2638 = vsel %vm1240, %v2635, %v2637
      %v2639 = vrot.slane %v2439, 1
      %v2640 = vrot.slane %v2442, 1
      %v2641 = vsel %vm1240, %v2639, %v2640
      %v2642 = vrot.slane %v2447, 1
      %v2643 = vsel %vm1240, %v2640, %v2642
      %v2644 = vrot.slane %v2454, 1
      %v2645 = vrot.slane %v2457, 1
      %v2646 = vsel %vm1240, %v2644, %v2645
      %v2647 = vrot.slane %v2462, 1
      %v2648 = vsel %vm1240, %v2645, %v2647
      %v2649 = vrot.slane %v2469, 1
      %v2650 = vrot.slane %v2472, 1
      %v2651 = vsel %vm1240, %v2649, %v2650
      %v2652 = vrot.slane %v2477, 1
      %v2653 = vsel %vm1240, %v2650, %v2652
      %v2654 = vrot.slane %v2484, 1
      %v2655 = vrot.slane %v2487, 1
      %v2656 = vsel %vm1240, %v2654, %v2655
      %v2657 = vrot.slane %v2492, 1
      %v2658 = vsel %vm1240, %v2655, %v2657
      %v2659 = vrot.slane %v2499, 1
      %v2660 = vrot.slane %v2502, 1
      %v2661 = vsel %vm1240, %v2659, %v2660
      %v2662 = vrot.slane %v2507, 1
      %v2663 = vsel %vm1240, %v2660, %v2662
      %v2696 = vadd.f32 %v2190, %v2586
      %v2697 = vadd.f32 %v2191, %v2588
      %v2698 = vadd.f32 %v2192, %v2591
      %v2699 = vadd.f32 %v2193, %v2593
      %v2700 = vadd.f32 %v2194, %v2596
      %v2701 = vadd.f32 %v2195, %v2598
      %v2702 = vadd.f32 %v2196, %v2601
      %v2703 = vadd.f32 %v2197, %v2603
      %v2704 = vadd.f32 %v2198, %v2606
      %v2705 = vadd.f32 %v2199, %v2608
      %v2706 = vadd.f32 %v2200, %v2611
      %v2707 = vadd.f32 %v2201, %v2613
      %v2708 = vadd.f32 %v2202, %v2616
      %v2709 = vadd.f32 %v2203, %v2618
      %v2710 = vadd.f32 %v2204, %v2621
      %v2711 = vadd.f32 %v2205, %v2623
      %v2712 = vadd.f32 %v2206, %v2626
      %v2713 = vadd.f32 %v2207, %v2628
      %v2714 = vadd.f32 %v2208, %v2631
      %v2715 = vadd.f32 %v2209, %v2633
      %v2716 = vadd.f32 %v2210, %v2636
      %v2717 = vadd.f32 %v2211, %v2638
      %v2718 = vadd.f32 %v2212, %v2641
      %v2719 = vadd.f32 %v2213, %v2643
      %v2720 = vadd.f32 %v2214, %v2646
      %v2721 = vadd.f32 %v2215, %v2648
      %v2722 = vadd.f32 %v2216, %v2651
      %v2723 = vadd.f32 %v2217, %v2653
      %v2724 = vadd.f32 %v2218, %v2656
      %v2725 = vadd.f32 %v2219, %v2658
      %v2726 = vadd.f32 %v2220, %v2661
      %v2727 = vadd.f32 %v2221, %v2663
      %s2728 = scalar_lea.vmem %s1, 10
      %v2729 = vld [vmem:[%s2728] sm:$0x3]
      %v2731 = vsel %vm581, %v2729, 0
      %2733 = vmatprep.subr.bf16.mxu0 0
      %2734 = vmatpush1.bf16.msra.mxu0 %v2731
      %2735 = vmatprep.subr.bf16.mxu0 0
      %2736 = vmatpush1.bf16.msra.mxu0 0
      %2737 = vmatprep.subr.bf16.mxu0 0
      %2738 = vmatpush1.bf16.msra.mxu0 0
      %2739 = vmatprep.subr.bf16.mxu0 0
      %2740 = vmatpush1.bf16.msra.mxu0 0
      %2741 = vmatprep.subr.bf16.mxu0 0
      %2742 = vmatpush1.bf16.msra.mxu0 0
      %2743 = vmatprep.subr.bf16.mxu0 0
      %2744 = vmatpush1.bf16.msra.mxu0 0
      %2745 = vmatprep.subr.bf16.mxu0 0
      %2746 = vmatpush1.bf16.msra.mxu0 0
      %2747 = vmatprep.subr.bf16.mxu0 0
      %2748 = vmatpush1.bf16.msra.mxu0 0
      %2749 = vmatprep.subr.bf16.mxu0 0
      %2750 = vmatpush1.bf16.msra.mxu0 0
      %2751 = vmatprep.subr.bf16.mxu0 0
      %2752 = vmatpush1.bf16.msra.mxu0 0
      %2753 = vmatprep.subr.bf16.mxu0 0
      %2754 = vmatpush1.bf16.msra.mxu0 0
      %2755 = vmatprep.subr.bf16.mxu0 0
      %2756 = vmatpush1.bf16.msra.mxu0 0
      %2757 = vmatprep.subr.bf16.mxu0 0
      %2758 = vmatpush1.bf16.msra.mxu0 0
      %2759 = vmatprep.subr.bf16.mxu0 0
      %2760 = vmatpush1.bf16.msra.mxu0 0
      %2761 = vmatprep.subr.bf16.mxu0 0
      %2762 = vmatpush1.bf16.msra.mxu0 0
      %2763 = vmatprep.subr.bf16.mxu0 0
      %2764 = vmatpush1.bf16.msra.mxu0 0
      %2765 = vmatprep.mubr.bf16.mxu0 0
      %2766 = vmatmul.mubr.bf16.gmra.mrb[0].mxu0 %v468
      %v2767 = vpop.f32.mrb[0].mxu0
      %v2768 = vpop.f32.mrb[0].mxu0
      %v2769 = vpop.f32.mrb[0].mxu0
      %v2770 = vpop.f32.mrb[0].mxu0
      %2771 = vmatprep.mubr.bf16.mxu0 0
      %2772 = vmatmul.mubr.bf16.gmra.mrb[0].mxu0 %v471
      %v2773 = vpop.f32.mrb[0].mxu0
      %v2774 = vpop.f32.mrb[0].mxu0
      %v2775 = vpop.f32.mrb[0].mxu0
      %v2776 = vpop.f32.mrb[0].mxu0
      %2777 = vmatprep.mubr.bf16.mxu0 0
      %2778 = vmatmul.mubr.bf16.gmra.mrb[0].mxu0 %v474
      %v2779 = vpop.f32.mrb[0].mxu0
      %v2780 = vadd.f32 0.0, %v2779
      %v2781 = vpop.f32.mrb[0].mxu0
      %v2782 = vpop.f32.mrb[0].mxu0
      %v2783 = vadd.f32 0.0, %v2782
      %v2784 = vpop.f32.mrb[0].mxu0
      %2785 = vmatprep.mubr.bf16.mxu0 0
      %2786 = vmatmul.mubr.bf16.gmra.mrb[0].mxu0 %v477
      %v2787 = vpop.f32.mrb[0].mxu0
      %v2788 = vadd.f32 0.0, %v2787
      %v2789 = vpop.f32.mrb[0].mxu0
      %v2790 = vpop.f32.mrb[0].mxu0
      %v2791 = vpop.f32.mrb[0].mxu0
      %2792 = vmatprep.mubr.bf16.mxu0 0
      %2793 = vmatmul.mubr.bf16.gmra.mrb[0].mxu0 %v480
      %v2794 = vpop.f32.mrb[0].mxu0
      %v2795 = vadd.f32 0.0, %v2794
      %v2796 = vpop.f32.mrb[0].mxu0
      %v2797 = vpop.f32.mrb[0].mxu0
      %v2798 = vadd.f32 0.0, %v2797
      %v2799 = vpop.f32.mrb[0].mxu0
      %2800 = vmatprep.mubr.bf16.mxu0 0
      %2801 = vmatmul.mubr.bf16.gmra.mrb[0].mxu0 %v483
      %v2802 = vpop.f32.mrb[0].mxu0
      %v2803 = vadd.f32 0.0, %v2802
      %v2804 = vpop.f32.mrb[0].mxu0
      %v2805 = vpop.f32.mrb[0].mxu0
      %v2806 = vpop.f32.mrb[0].mxu0
      %2807 = vmatprep.mubr.bf16.mxu0 0
      %2808 = vmatmul.mubr.bf16.gmra.mrb[0].mxu0 %v486
      %v2809 = vpop.f32.mrb[0].mxu0
      %v2810 = vadd.f32 0.0, %v2809
      %v2811 = vpop.f32.mrb[0].mxu0
      %v2812 = vpop.f32.mrb[0].mxu0
      %v2813 = vadd.f32 0.0, %v2812
      %v2814 = vpop.f32.mrb[0].mxu0
      %2815 = vmatprep.mubr.bf16.mxu0 0
      %2816 = vmatmul.mubr.bf16.gmra.mrb[0].mxu0 %v489
      %v2817 = vpop.f32.mrb[0].mxu0
      %v2818 = vadd.f32 0.0, %v2817
      %v2819 = vpop.f32.mrb[0].mxu0
      %v2820 = vpop.f32.mrb[0].mxu0
      %v2821 = vpop.f32.mrb[0].mxu0
      %2822 = vmatprep.mubr.bf16.mxu0 0
      %2823 = vmatmul.mubr.bf16.gmra.mrb[0].mxu0 %v492
      %v2824 = vpop.f32.mrb[0].mxu0
      %v2825 = vadd.f32 0.0, %v2824
      %v2826 = vpop.f32.mrb[0].mxu0
      %v2827 = vpop.f32.mrb[0].mxu0
      %v2828 = vadd.f32 0.0, %v2827
      %v2829 = vpop.f32.mrb[0].mxu0
      %2830 = vmatprep.mubr.bf16.mxu0 0
      %2831 = vmatmul.mubr.bf16.gmra.mrb[0].mxu0 %v495
      %v2832 = vpop.f32.mrb[0].mxu0
      %v2833 = vadd.f32 0.0, %v2832
      %v2834 = vpop.f32.mrb[0].mxu0
      %v2835 = vpop.f32.mrb[0].mxu0
      %v2836 = vpop.f32.mrb[0].mxu0
      %2837 = vmatprep.mubr.bf16.mxu0 0
      %2838 = vmatmul.mubr.bf16.gmra.mrb[0].mxu0 %v498
      %v2839 = vpop.f32.mrb[0].mxu0
      %v2840 = vadd.f32 0.0, %v2839
      %v2841 = vpop.f32.mrb[0].mxu0
      %v2842 = vpop.f32.mrb[0].mxu0
      %v2843 = vadd.f32 0.0, %v2842
      %v2844 = vpop.f32.mrb[0].mxu0
      %2845 = vmatprep.mubr.bf16.mxu0 0
      %2846 = vmatmul.mubr.bf16.gmra.mrb[0].mxu0 %v501
      %v2847 = vpop.f32.mrb[0].mxu0
      %v2848 = vadd.f32 0.0, %v2847
      %v2849 = vpop.f32.mrb[0].mxu0
      %v2850 = vpop.f32.mrb[0].mxu0
      %v2851 = vpop.f32.mrb[0].mxu0
      %2852 = vmatprep.mubr.bf16.mxu0 0
      %2853 = vmatmul.mubr.bf16.gmra.mrb[0].mxu0 %v504
      %v2854 = vpop.f32.mrb[0].mxu0
      %v2855 = vadd.f32 0.0, %v2854
      %v2856 = vpop.f32.mrb[0].mxu0
      %v2857 = vpop.f32.mrb[0].mxu0
      %v2858 = vadd.f32 0.0, %v2857
      %v2859 = vpop.f32.mrb[0].mxu0
      %2860 = vmatprep.mubr.bf16.mxu0 0
      %2861 = vmatmul.mubr.bf16.gmra.mrb[0].mxu0 %v507
      %v2862 = vpop.f32.mrb[0].mxu0
      %v2863 = vadd.f32 0.0, %v2862
      %v2864 = vpop.f32.mrb[0].mxu0
      %v2865 = vpop.f32.mrb[0].mxu0
      %v2866 = vpop.f32.mrb[0].mxu0
      %2867 = vmatprep.mubr.bf16.mxu0 0
      %2868 = vmatmul.mubr.bf16.gmra.mrb[0].mxu0 %v510
      %v2869 = vpop.f32.mrb[0].mxu0
      %v2870 = vadd.f32 0.0, %v2869
      %v2871 = vpop.f32.mrb[0].mxu0
      %v2872 = vpop.f32.mrb[0].mxu0
      %v2873 = vadd.f32 0.0, %v2872
      %v2874 = vpop.f32.mrb[0].mxu0
      %2875 = vmatprep.mubr.bf16.mxu0 0
      %2876 = vmatmul.mubr.bf16.gmra.mrb[0].mxu0 %v513
      %v2877 = vpop.f32.mrb[0].mxu0
      %v2878 = vadd.f32 0.0, %v2877
      %v2879 = vpop.f32.mrb[0].mxu0
      %v2880 = vpop.f32.mrb[0].mxu0
      %v2881 = vpop.f32.mrb[0].mxu0
      %2882 = vmatprep.mubr.bf16.mxu0 0
      %2883 = vmatmul.mubr.bf16.gmra.mrb[0].mxu0 %v516
      %v2884 = vpop.f32.mrb[0].mxu0
      %v2885 = vadd.f32 0.0, %v2884
      %v2886 = vpop.f32.mrb[0].mxu0
      %v2887 = vpop.f32.mrb[0].mxu0
      %v2888 = vadd.f32 0.0, %v2887
      %v2889 = vpop.f32.mrb[0].mxu0
      %2890 = vmatprep.mubr.bf16.mxu0 0
      %2891 = vmatmul.mubr.bf16.gmra.mrb[0].mxu0 %v519
      %v2892 = vpop.f32.mrb[0].mxu0
      %v2893 = vadd.f32 0.0, %v2892
      %v2894 = vpop.f32.mrb[0].mxu0
      %v2895 = vpop.f32.mrb[0].mxu0
      %v2896 = vpop.f32.mrb[0].mxu0
      %2897 = vmatprep.mubr.bf16.mxu0 0
      %2898 = vmatmul.mubr.bf16.gmra.mrb[0].mxu0 %v522
      %v2899 = vpop.f32.mrb[0].mxu0
      %v2900 = vadd.f32 0.0, %v2899
      %v2901 = vpop.f32.mrb[0].mxu0
      %v2902 = vpop.f32.mrb[0].mxu0
      %v2903 = vadd.f32 0.0, %v2902
      %v2904 = vpop.f32.mrb[0].mxu0
      %2905 = vmatprep.mubr.bf16.mxu0 0
      %2906 = vmatmul.mubr.bf16.gmra.mrb[0].mxu0 %v525
      %v2907 = vpop.f32.mrb[0].mxu0
      %v2908 = vadd.f32 0.0, %v2907
      %v2909 = vpop.f32.mrb[0].mxu0
      %v2910 = vpop.f32.mrb[0].mxu0
      %v2911 = vpop.f32.mrb[0].mxu0
      %2912 = vmatprep.mubr.bf16.mxu0 0
      %2913 = vmatmul.mubr.bf16.gmra.mrb[0].mxu0 %v528
      %v2914 = vpop.f32.mrb[0].mxu0
      %v2915 = vadd.f32 0.0, %v2914
      %v2916 = vpop.f32.mrb[0].mxu0
      %v2917 = vpop.f32.mrb[0].mxu0
      %v2918 = vadd.f32 0.0, %v2917
      %v2919 = vpop.f32.mrb[0].mxu0
      %2920 = vmatprep.mubr.bf16.mxu0 0
      %2921 = vmatmul.mubr.bf16.gmra.mrb[0].mxu0 %v531
      %v2922 = vpop.f32.mrb[0].mxu0
      %v2923 = vadd.f32 0.0, %v2922
      %v2924 = vpop.f32.mrb[0].mxu0
      %v2925 = vpop.f32.mrb[0].mxu0
      %v2926 = vpop.f32.mrb[0].mxu0
      %2927 = vmatprep.mubr.bf16.mxu0 0
      %2928 = vmatmul.mubr.bf16.gmra.mrb[0].mxu0 %v534
      %v2929 = vpop.f32.mrb[0].mxu0
      %v2930 = vadd.f32 0.0, %v2929
      %v2931 = vpop.f32.mrb[0].mxu0
      %v2932 = vpop.f32.mrb[0].mxu0
      %v2933 = vadd.f32 0.0, %v2932
      %v2934 = vpop.f32.mrb[0].mxu0
      %2935 = vmatprep.mubr.bf16.mxu0 0
      %2936 = vmatmul.mubr.bf16.gmra.mrb[0].mxu0 %v537
      %v2937 = vpop.f32.mrb[0].mxu0
      %v2938 = vadd.f32 0.0, %v2937
      %v2939 = vpop.f32.mrb[0].mxu0
      %v2940 = vpop.f32.mrb[0].mxu0
      %v2941 = vpop.f32.mrb[0].mxu0
      %2942 = vmatprep.mubr.bf16.mxu0 0
      %2943 = vmatmul.mubr.bf16.gmra.mrb[0].mxu0 %v540
      %v2944 = vpop.f32.mrb[0].mxu0
      %v2945 = vadd.f32 0.0, %v2944
      %v2946 = vpop.f32.mrb[0].mxu0
      %v2947 = vpop.f32.mrb[0].mxu0
      %v2948 = vadd.f32 0.0, %v2947
      %v2949 = vpop.f32.mrb[0].mxu0
      %2950 = vmatprep.mubr.bf16.mxu0 0
      %2951 = vmatmul.mubr.bf16.gmra.mrb[0].mxu0 %v543
      %v2952 = vpop.f32.mrb[0].mxu0
      %v2953 = vadd.f32 0.0, %v2952
      %v2954 = vpop.f32.mrb[0].mxu0
      %v2955 = vpop.f32.mrb[0].mxu0
      %v2956 = vpop.f32.mrb[0].mxu0
      %2957 = vmatprep.mubr.bf16.mxu0 0
      %2958 = vmatmul.mubr.bf16.gmra.mrb[0].mxu0 %v546
      %v2959 = vpop.f32.mrb[0].mxu0
      %v2960 = vadd.f32 0.0, %v2959
      %v2961 = vpop.f32.mrb[0].mxu0
      %v2962 = vpop.f32.mrb[0].mxu0
      %v2963 = vadd.f32 0.0, %v2962
      %v2964 = vpop.f32.mrb[0].mxu0
      %2965 = vmatprep.mubr.bf16.mxu0 0
      %2966 = vmatmul.mubr.bf16.gmra.mrb[0].mxu0 %v549
      %v2967 = vpop.f32.mrb[0].mxu0
      %v2968 = vadd.f32 0.0, %v2967
      %v2969 = vpop.f32.mrb[0].mxu0
      %v2970 = vpop.f32.mrb[0].mxu0
      %v2971 = vpop.f32.mrb[0].mxu0
      %2972 = vmatprep.mubr.bf16.mxu0 0
      %2973 = vmatmul.mubr.bf16.gmra.mrb[0].mxu0 %v552
      %v2974 = vpop.f32.mrb[0].mxu0
      %v2975 = vadd.f32 0.0, %v2974
      %v2976 = vpop.f32.mrb[0].mxu0
      %v2977 = vpop.f32.mrb[0].mxu0
      %v2978 = vadd.f32 0.0, %v2977
      %v2979 = vpop.f32.mrb[0].mxu0
      %2980 = vmatprep.mubr.bf16.mxu0 0
      %2981 = vmatmul.mubr.bf16.gmra.mrb[0].mxu0 %v555
      %v2982 = vpop.f32.mrb[0].mxu0
      %v2983 = vadd.f32 0.0, %v2982
      %v2984 = vpop.f32.mrb[0].mxu0
      %v2985 = vpop.f32.mrb[0].mxu0
      %v2986 = vpop.f32.mrb[0].mxu0
      %2987 = vmatprep.mubr.bf16.mxu0 0
      %2988 = vmatmul.mubr.bf16.gmra.mrb[0].mxu0 %v558
      %v2989 = vpop.f32.mrb[0].mxu0
      %v2990 = vadd.f32 0.0, %v2989
      %v2991 = vpop.f32.mrb[0].mxu0
      %v2992 = vpop.f32.mrb[0].mxu0
      %v2993 = vadd.f32 0.0, %v2992
      %v2994 = vpop.f32.mrb[0].mxu0
      %2995 = vmatprep.mubr.bf16.mxu0 0
      %2996 = vmatmul.mubr.bf16.gmra.mrb[0].mxu0 %v561
      %v2997 = vpop.f32.mrb[0].mxu0
      %v2998 = vadd.f32 0.0, %v2997
      %v2999 = vpop.f32.mrb[0].mxu0
      %v3000 = vpop.f32.mrb[0].mxu0
      %v3001 = vpop.f32.mrb[0].mxu0
      %3002 = vmatprep.mubr.bf16.mxu0 0
      %3003 = vmatmul.mubr.bf16.gmra.mrb[0].mxu0 %v564
      %v3004 = vpop.f32.mrb[0].mxu0
      %v3005 = vadd.f32 0.0, %v3004
      %v3006 = vpop.f32.mrb[0].mxu0
      %v3007 = vpop.f32.mrb[0].mxu0
      %v3008 = vadd.f32 0.0, %v3007
      %v3009 = vpop.f32.mrb[0].mxu0
      %3010 = vmatprep.mubr.bf16.mxu0 0
      %3011 = vmatmul.mubr.bf16.gmra.mrb[0].mxu0 %v567
      %v3012 = vpop.f32.mrb[0].mxu0
      %v3013 = vadd.f32 0.0, %v3012
      %v3014 = vpop.f32.mrb[0].mxu0
      %v3015 = vpop.f32.mrb[0].mxu0
      %v3016 = vpop.f32.mrb[0].mxu0
      %3017 = vmatprep.mubr.bf16.mxu0 0
      %3018 = vmatmul.mubr.bf16.gmra.mrb[0].mxu0 %v570
      %v3019 = vpop.f32.mrb[0].mxu0
      %v3020 = vpop.f32.mrb[0].mxu0
      %v3021 = vpop.f32.mrb[0].mxu0
      %v3022 = vpop.f32.mrb[0].mxu0
      %3023 = vmatprep.mubr.bf16.mxu0 0
      %3024 = vmatmul.mubr.bf16.gmra.mrb[0].mxu0 %v573
      %v3025 = vpop.f32.mrb[0].mxu0
      %v3026 = vpop.f32.mrb[0].mxu0
      %v3027 = vpop.f32.mrb[0].mxu0
      %v3028 = vpop.f32.mrb[0].mxu0
      %3029 = vmatprep.mubr.bf16.mxu0 0
      %3030 = vmatmul.mubr.bf16.gmra.mrb[0].mxu0 %v576
      %v3031 = vpop.f32.mrb[0].mxu0
      %v3032 = vpop.f32.mrb[0].mxu0
      %v3033 = vpop.f32.mrb[0].mxu0
      %v3034 = vpop.f32.mrb[0].mxu0
      %3035 = vmatprep.mubr.bf16.mxu0 0
      %3036 = vmatmul.mubr.bf16.gmra.mrb[0].mxu0 %v579
      %v3037 = vpop.f32.mrb[0].mxu0
      %v3038 = vpop.f32.mrb[0].mxu0
      %v3039 = vpop.f32.mrb[0].mxu0
      %v3040 = vpop.f32.mrb[0].mxu0
      %3041 = vdwg.mxu0
      %v3090 = vrot.slane %v2780, 2
      %v3091 = vrot.slane %v2783, 2
      %v3092 = vsel %vm1747, %v3090, %v3091
      %v3093 = vrot.slane %v2788, 2
      %v3094 = vsel %vm1747, %v3091, %v3093
      %v3095 = vrot.slane %v2795, 2
      %v3096 = vrot.slane %v2798, 2
      %v3097 = vsel %vm1747, %v3095, %v3096
      %v3098 = vrot.slane %v2803, 2
      %v3099 = vsel %vm1747, %v3096, %v3098
      %v3100 = vrot.slane %v2810, 2
      %v3101 = vrot.slane %v2813, 2
      %v3102 = vsel %vm1747, %v3100, %v3101
      %v3103 = vrot.slane %v2818, 2
      %v3104 = vsel %vm1747, %v3101, %v3103
      %v3105 = vrot.slane %v2825, 2
      %v3106 = vrot.slane %v2828, 2
      %v3107 = vsel %vm1747, %v3105, %v3106
      %v3108 = vrot.slane %v2833, 2
      %v3109 = vsel %vm1747, %v3106, %v3108
      %v3110 = vrot.slane %v2840, 2
      %v3111 = vrot.slane %v2843, 2
      %v3112 = vsel %vm1747, %v3110, %v3111
      %v3113 = vrot.slane %v2848, 2
      %v3114 = vsel %vm1747, %v3111, %v3113
      %v3115 = vrot.slane %v2855, 2
      %v3116 = vrot.slane %v2858, 2
      %v3117 = vsel %vm1747, %v3115, %v3116
      %v3118 = vrot.slane %v2863, 2
      %v3119 = vsel %vm1747, %v3116, %v3118
      %v3120 = vrot.slane %v2870, 2
      %v3121 = vrot.slane %v2873, 2
      %v3122 = vsel %vm1747, %v3120, %v3121
      %v3123 = vrot.slane %v2878, 2
      %v3124 = vsel %vm1747, %v3121, %v3123
      %v3125 = vrot.slane %v2885, 2
      %v3126 = vrot.slane %v2888, 2
      %v3127 = vsel %vm1747, %v3125, %v3126
      %v3128 = vrot.slane %v2893, 2
      %v3129 = vsel %vm1747, %v3126, %v3128
      %v3130 = vrot.slane %v2900, 2
      %v3131 = vrot.slane %v2903, 2
      %v3132 = vsel %vm1747, %v3130, %v3131
      %v3133 = vrot.slane %v2908, 2
      %v3134 = vsel %vm1747, %v3131, %v3133
      %v3135 = vrot.slane %v2915, 2
      %v3136 = vrot.slane %v2918, 2
      %v3137 = vsel %vm1747, %v3135, %v3136
      %v3138 = vrot.slane %v2923, 2
      %v3139 = vsel %vm1747, %v3136, %v3138
      %v3140 = vrot.slane %v2930, 2
      %v3141 = vrot.slane %v2933, 2
      %v3142 = vsel %vm1747, %v3140, %v3141
      %v3143 = vrot.slane %v2938, 2
      %v3144 = vsel %vm1747, %v3141, %v3143
      %v3145 = vrot.slane %v2945, 2
      %v3146 = vrot.slane %v2948, 2
      %v3147 = vsel %vm1747, %v3145, %v3146
      %v3148 = vrot.slane %v2953, 2
      %v3149 = vsel %vm1747, %v3146, %v3148
      %v3150 = vrot.slane %v2960, 2
      %v3151 = vrot.slane %v2963, 2
      %v3152 = vsel %vm1747, %v3150, %v3151
      %v3153 = vrot.slane %v2968, 2
      %v3154 = vsel %vm1747, %v3151, %v3153
      %v3155 = vrot.slane %v2975, 2
      %v3156 = vrot.slane %v2978, 2
      %v3157 = vsel %vm1747, %v3155, %v3156
      %v3158 = vrot.slane %v2983, 2
      %v3159 = vsel %vm1747, %v3156, %v3158
      %v3160 = vrot.slane %v2990, 2
      %v3161 = vrot.slane %v2993, 2
      %v3162 = vsel %vm1747, %v3160, %v3161
      %v3163 = vrot.slane %v2998, 2
      %v3164 = vsel %vm1747, %v3161, %v3163
      %v3165 = vrot.slane %v3005, 2
      %v3166 = vrot.slane %v3008, 2
      %v3167 = vsel %vm1747, %v3165, %v3166
      %v3168 = vrot.slane %v3013, 2
      %v3169 = vsel %vm1747, %v3166, %v3168
      %v3202 = vadd.f32 %v2696, %v3092
      %v3203 = vadd.f32 %v2697, %v3094
      %v3204 = vadd.f32 %v2698, %v3097
      %v3205 = vadd.f32 %v2699, %v3099
      %v3206 = vadd.f32 %v2700, %v3102
      %v3207 = vadd.f32 %v2701, %v3104
      %v3208 = vadd.f32 %v2702, %v3107
      %v3209 = vadd.f32 %v2703, %v3109
      %v3210 = vadd.f32 %v2704, %v3112
      %v3211 = vadd.f32 %v2705, %v3114
      %v3212 = vadd.f32 %v2706, %v3117
      %v3213 = vadd.f32 %v2707, %v3119
      %v3214 = vadd.f32 %v2708, %v3122
      %v3215 = vadd.f32 %v2709, %v3124
      %v3216 = vadd.f32 %v2710, %v3127
      %v3217 = vadd.f32 %v2711, %v3129
      %v3218 = vadd.f32 %v2712, %v3132
      %v3219 = vadd.f32 %v2713, %v3134
      %v3220 = vadd.f32 %v2714, %v3137
      %v3221 = vadd.f32 %v2715, %v3139
      %v3222 = vadd.f32 %v2716, %v3142
      %v3223 = vadd.f32 %v2717, %v3144
      %v3224 = vadd.f32 %v2718, %v3147
      %v3225 = vadd.f32 %v2719, %v3149
      %v3226 = vadd.f32 %v2720, %v3152
      %v3227 = vadd.f32 %v2721, %v3154
      %v3228 = vadd.f32 %v2722, %v3157
      %v3229 = vadd.f32 %v2723, %v3159
      %v3230 = vadd.f32 %v2724, %v3162
      %v3231 = vadd.f32 %v2725, %v3164
      %v3232 = vadd.f32 %v2726, %v3167
      %v3233 = vadd.f32 %v2727, %v3169
      %s3234 = scalar_lea.vmem %s1, 12
      %v3235 = vld [vmem:[%s3234] sm:$0x3]
      %v3237 = vsel %vm581, %v3235, 0
      %3239 = vmatprep.subr.bf16.mxu0 0
      %3240 = vmatpush1.bf16.msra.mxu0 %v3237
      %3241 = vmatprep.subr.bf16.mxu0 0
      %3242 = vmatpush1.bf16.msra.mxu0 0
      %3243 = vmatprep.subr.bf16.mxu0 0
      %3244 = vmatpush1.bf16.msra.mxu0 0
      %3245 = vmatprep.subr.bf16.mxu0 0
      %3246 = vmatpush1.bf16.msra.mxu0 0
      %3247 = vmatprep.subr.bf16.mxu0 0
      %3248 = vmatpush1.bf16.msra.mxu0 0
      %3249 = vmatprep.subr.bf16.mxu0 0
      %3250 = vmatpush1.bf16.msra.mxu0 0
      %3251 = vmatprep.subr.bf16.mxu0 0
      %3252 = vmatpush1.bf16.msra.mxu0 0
      %3253 = vmatprep.subr.bf16.mxu0 0
      %3254 = vmatpush1.bf16.msra.mxu0 0
      %3255 = vmatprep.subr.bf16.mxu0 0
      %3256 = vmatpush1.bf16.msra.mxu0 0
      %3257 = vmatprep.subr.bf16.mxu0 0
      %3258 = vmatpush1.bf16.msra.mxu0 0
      %3259 = vmatprep.subr.bf16.mxu0 0
      %3260 = vmatpush1.bf16.msra.mxu0 0
      %3261 = vmatprep.subr.bf16.mxu0 0
      %3262 = vmatpush1.bf16.msra.mxu0 0
      %3263 = vmatprep.subr.bf16.mxu0 0
      %3264 = vmatpush1.bf16.msra.mxu0 0
      %3265 = vmatprep.subr.bf16.mxu0 0
      %3266 = vmatpush1.bf16.msra.mxu0 0
      %3267 = vmatprep.subr.bf16.mxu0 0
      %3268 = vmatpush1.bf16.msra.mxu0 0
      %3269 = vmatprep.subr.bf16.mxu0 0
      %3270 = vmatpush1.bf16.msra.mxu0 0
      %3271 = vmatprep.mubr.bf16.mxu0 0
      %3272 = vmatmul.mubr.bf16.gmra.mrb[0].mxu0 %v468
      %v3273 = vpop.f32.mrb[0].mxu0
      %v3274 = vpop.f32.mrb[0].mxu0
      %v3275 = vpop.f32.mrb[0].mxu0
      %v3276 = vpop.f32.mrb[0].mxu0
      %3277 = vmatprep.mubr.bf16.mxu0 0
      %3278 = vmatmul.mubr.bf16.gmra.mrb[0].mxu0 %v471
      %v3279 = vpop.f32.mrb[0].mxu0
      %v3280 = vpop.f32.mrb[0].mxu0
      %v3281 = vpop.f32.mrb[0].mxu0
      %v3282 = vpop.f32.mrb[0].mxu0
      %3283 = vmatprep.mubr.bf16.mxu0 0
      %3284 = vmatmul.mubr.bf16.gmra.mrb[0].mxu0 %v474
      %v3285 = vpop.f32.mrb[0].mxu0
      %v3286 = vpop.f32.mrb[0].mxu0
      %v3287 = vpop.f32.mrb[0].mxu0
      %v3288 = vpop.f32.mrb[0].mxu0
      %3289 = vmatprep.mubr.bf16.mxu0 0
      %3290 = vmatmul.mubr.bf16.gmra.mrb[0].mxu0 %v477
      %v3291 = vpop.f32.mrb[0].mxu0
      %v3292 = vpop.f32.mrb[0].mxu0
      %v3293 = vpop.f32.mrb[0].mxu0
      %v3294 = vpop.f32.mrb[0].mxu0
      %3295 = vmatprep.mubr.bf16.mxu0 0
      %3296 = vmatmul.mubr.bf16.gmra.mrb[0].mxu0 %v480
      %v3297 = vpop.f32.mrb[0].mxu0
      %v3298 = vadd.f32 0.0, %v3297
      %v3299 = vpop.f32.mrb[0].mxu0
      %v3300 = vpop.f32.mrb[0].mxu0
      %v3301 = vadd.f32 0.0, %v3300
      %v3302 = vpop.f32.mrb[0].mxu0
      %3303 = vmatprep.mubr.bf16.mxu0 0
      %3304 = vmatmul.mubr.bf16.gmra.mrb[0].mxu0 %v483
      %v3305 = vpop.f32.mrb[0].mxu0
      %v3306 = vpop.f32.mrb[0].mxu0
      %v3307 = vpop.f32.mrb[0].mxu0
      %v3308 = vpop.f32.mrb[0].mxu0
      %3309 = vmatprep.mubr.bf16.mxu0 0
      %3310 = vmatmul.mubr.bf16.gmra.mrb[0].mxu0 %v486
      %v3311 = vpop.f32.mrb[0].mxu0
      %v3312 = vadd.f32 0.0, %v3311
      %v3313 = vpop.f32.mrb[0].mxu0
      %v3314 = vpop.f32.mrb[0].mxu0
      %v3315 = vadd.f32 0.0, %v3314
      %v3316 = vpop.f32.mrb[0].mxu0
      %3317 = vmatprep.mubr.bf16.mxu0 0
      %3318 = vmatmul.mubr.bf16.gmra.mrb[0].mxu0 %v489
      %v3319 = vpop.f32.mrb[0].mxu0
      %v3320 = vpop.f32.mrb[0].mxu0
      %v3321 = vpop.f32.mrb[0].mxu0
      %v3322 = vpop.f32.mrb[0].mxu0
      %3323 = vmatprep.mubr.bf16.mxu0 0
      %3324 = vmatmul.mubr.bf16.gmra.mrb[0].mxu0 %v492
      %v3325 = vpop.f32.mrb[0].mxu0
      %v3326 = vadd.f32 0.0, %v3325
      %v3327 = vpop.f32.mrb[0].mxu0
      %v3328 = vpop.f32.mrb[0].mxu0
      %v3329 = vadd.f32 0.0, %v3328
      %v3330 = vpop.f32.mrb[0].mxu0
      %3331 = vmatprep.mubr.bf16.mxu0 0
      %3332 = vmatmul.mubr.bf16.gmra.mrb[0].mxu0 %v495
      %v3333 = vpop.f32.mrb[0].mxu0
      %v3334 = vpop.f32.mrb[0].mxu0
      %v3335 = vpop.f32.mrb[0].mxu0
      %v3336 = vpop.f32.mrb[0].mxu0
      %3337 = vmatprep.mubr.bf16.mxu0 0
      %3338 = vmatmul.mubr.bf16.gmra.mrb[0].mxu0 %v498
      %v3339 = vpop.f32.mrb[0].mxu0
      %v3340 = vadd.f32 0.0, %v3339
      %v3341 = vpop.f32.mrb[0].mxu0
      %v3342 = vpop.f32.mrb[0].mxu0
      %v3343 = vadd.f32 0.0, %v3342
      %v3344 = vpop.f32.mrb[0].mxu0
      %3345 = vmatprep.mubr.bf16.mxu0 0
      %3346 = vmatmul.mubr.bf16.gmra.mrb[0].mxu0 %v501
      %v3347 = vpop.f32.mrb[0].mxu0
      %v3348 = vpop.f32.mrb[0].mxu0
      %v3349 = vpop.f32.mrb[0].mxu0
      %v3350 = vpop.f32.mrb[0].mxu0
      %3351 = vmatprep.mubr.bf16.mxu0 0
      %3352 = vmatmul.mubr.bf16.gmra.mrb[0].mxu0 %v504
      %v3353 = vpop.f32.mrb[0].mxu0
      %v3354 = vadd.f32 0.0, %v3353
      %v3355 = vpop.f32.mrb[0].mxu0
      %v3356 = vpop.f32.mrb[0].mxu0
      %v3357 = vadd.f32 0.0, %v3356
      %v3358 = vpop.f32.mrb[0].mxu0
      %3359 = vmatprep.mubr.bf16.mxu0 0
      %3360 = vmatmul.mubr.bf16.gmra.mrb[0].mxu0 %v507
      %v3361 = vpop.f32.mrb[0].mxu0
      %v3362 = vpop.f32.mrb[0].mxu0
      %v3363 = vpop.f32.mrb[0].mxu0
      %v3364 = vpop.f32.mrb[0].mxu0
      %3365 = vmatprep.mubr.bf16.mxu0 0
      %3366 = vmatmul.mubr.bf16.gmra.mrb[0].mxu0 %v510
      %v3367 = vpop.f32.mrb[0].mxu0
      %v3368 = vadd.f32 0.0, %v3367
      %v3369 = vpop.f32.mrb[0].mxu0
      %v3370 = vpop.f32.mrb[0].mxu0
      %v3371 = vadd.f32 0.0, %v3370
      %v3372 = vpop.f32.mrb[0].mxu0
      %3373 = vmatprep.mubr.bf16.mxu0 0
      %3374 = vmatmul.mubr.bf16.gmra.mrb[0].mxu0 %v513
      %v3375 = vpop.f32.mrb[0].mxu0
      %v3376 = vpop.f32.mrb[0].mxu0
      %v3377 = vpop.f32.mrb[0].mxu0
      %v3378 = vpop.f32.mrb[0].mxu0
      %3379 = vmatprep.mubr.bf16.mxu0 0
      %3380 = vmatmul.mubr.bf16.gmra.mrb[0].mxu0 %v516
      %v3381 = vpop.f32.mrb[0].mxu0
      %v3382 = vadd.f32 0.0, %v3381
      %v3383 = vpop.f32.mrb[0].mxu0
      %v3384 = vpop.f32.mrb[0].mxu0
      %v3385 = vadd.f32 0.0, %v3384
      %v3386 = vpop.f32.mrb[0].mxu0
      %3387 = vmatprep.mubr.bf16.mxu0 0
      %3388 = vmatmul.mubr.bf16.gmra.mrb[0].mxu0 %v519
      %v3389 = vpop.f32.mrb[0].mxu0
      %v3390 = vpop.f32.mrb[0].mxu0
      %v3391 = vpop.f32.mrb[0].mxu0
      %v3392 = vpop.f32.mrb[0].mxu0
      %3393 = vmatprep.mubr.bf16.mxu0 0
      %3394 = vmatmul.mubr.bf16.gmra.mrb[0].mxu0 %v522
      %v3395 = vpop.f32.mrb[0].mxu0
      %v3396 = vadd.f32 0.0, %v3395
      %v3397 = vpop.f32.mrb[0].mxu0
      %v3398 = vpop.f32.mrb[0].mxu0
      %v3399 = vadd.f32 0.0, %v3398
      %v3400 = vpop.f32.mrb[0].mxu0
      %3401 = vmatprep.mubr.bf16.mxu0 0
      %3402 = vmatmul.mubr.bf16.gmra.mrb[0].mxu0 %v525
      %v3403 = vpop.f32.mrb[0].mxu0
      %v3404 = vpop.f32.mrb[0].mxu0
      %v3405 = vpop.f32.mrb[0].mxu0
      %v3406 = vpop.f32.mrb[0].mxu0
      %3407 = vmatprep.mubr.bf16.mxu0 0
      %3408 = vmatmul.mubr.bf16.gmra.mrb[0].mxu0 %v528
      %v3409 = vpop.f32.mrb[0].mxu0
      %v3410 = vadd.f32 0.0, %v3409
      %v3411 = vpop.f32.mrb[0].mxu0
      %v3412 = vpop.f32.mrb[0].mxu0
      %v3413 = vadd.f32 0.0, %v3412
      %v3414 = vpop.f32.mrb[0].mxu0
      %3415 = vmatprep.mubr.bf16.mxu0 0
      %3416 = vmatmul.mubr.bf16.gmra.mrb[0].mxu0 %v531
      %v3417 = vpop.f32.mrb[0].mxu0
      %v3418 = vpop.f32.mrb[0].mxu0
      %v3419 = vpop.f32.mrb[0].mxu0
      %v3420 = vpop.f32.mrb[0].mxu0
      %3421 = vmatprep.mubr.bf16.mxu0 0
      %3422 = vmatmul.mubr.bf16.gmra.mrb[0].mxu0 %v534
      %v3423 = vpop.f32.mrb[0].mxu0
      %v3424 = vadd.f32 0.0, %v3423
      %v3425 = vpop.f32.mrb[0].mxu0
      %v3426 = vpop.f32.mrb[0].mxu0
      %v3427 = vadd.f32 0.0, %v3426
      %v3428 = vpop.f32.mrb[0].mxu0
      %3429 = vmatprep.mubr.bf16.mxu0 0
      %3430 = vmatmul.mubr.bf16.gmra.mrb[0].mxu0 %v537
      %v3431 = vpop.f32.mrb[0].mxu0
      %v3432 = vpop.f32.mrb[0].mxu0
      %v3433 = vpop.f32.mrb[0].mxu0
      %v3434 = vpop.f32.mrb[0].mxu0
      %3435 = vmatprep.mubr.bf16.mxu0 0
      %3436 = vmatmul.mubr.bf16.gmra.mrb[0].mxu0 %v540
      %v3437 = vpop.f32.mrb[0].mxu0
      %v3438 = vadd.f32 0.0, %v3437
      %v3439 = vpop.f32.mrb[0].mxu0
      %v3440 = vpop.f32.mrb[0].mxu0
      %v3441 = vadd.f32 0.0, %v3440
      %v3442 = vpop.f32.mrb[0].mxu0
      %3443 = vmatprep.mubr.bf16.mxu0 0
      %3444 = vmatmul.mubr.bf16.gmra.mrb[0].mxu0 %v543
      %v3445 = vpop.f32.mrb[0].mxu0
      %v3446 = vpop.f32.mrb[0].mxu0
      %v3447 = vpop.f32.mrb[0].mxu0
      %v3448 = vpop.f32.mrb[0].mxu0
      %3449 = vmatprep.mubr.bf16.mxu0 0
      %3450 = vmatmul.mubr.bf16.gmra.mrb[0].mxu0 %v546
      %v3451 = vpop.f32.mrb[0].mxu0
      %v3452 = vadd.f32 0.0, %v3451
      %v3453 = vpop.f32.mrb[0].mxu0
      %v3454 = vpop.f32.mrb[0].mxu0
      %v3455 = vadd.f32 0.0, %v3454
      %v3456 = vpop.f32.mrb[0].mxu0
      %3457 = vmatprep.mubr.bf16.mxu0 0
      %3458 = vmatmul.mubr.bf16.gmra.mrb[0].mxu0 %v549
      %v3459 = vpop.f32.mrb[0].mxu0
      %v3460 = vpop.f32.mrb[0].mxu0
      %v3461 = vpop.f32.mrb[0].mxu0
      %v3462 = vpop.f32.mrb[0].mxu0
      %3463 = vmatprep.mubr.bf16.mxu0 0
      %3464 = vmatmul.mubr.bf16.gmra.mrb[0].mxu0 %v552
      %v3465 = vpop.f32.mrb[0].mxu0
      %v3466 = vadd.f32 0.0, %v3465
      %v3467 = vpop.f32.mrb[0].mxu0
      %v3468 = vpop.f32.mrb[0].mxu0
      %v3469 = vadd.f32 0.0, %v3468
      %v3470 = vpop.f32.mrb[0].mxu0
      %3471 = vmatprep.mubr.bf16.mxu0 0
      %3472 = vmatmul.mubr.bf16.gmra.mrb[0].mxu0 %v555
      %v3473 = vpop.f32.mrb[0].mxu0
      %v3474 = vpop.f32.mrb[0].mxu0
      %v3475 = vpop.f32.mrb[0].mxu0
      %v3476 = vpop.f32.mrb[0].mxu0
      %3477 = vmatprep.mubr.bf16.mxu0 0
      %3478 = vmatmul.mubr.bf16.gmra.mrb[0].mxu0 %v558
      %v3479 = vpop.f32.mrb[0].mxu0
      %v3480 = vadd.f32 0.0, %v3479
      %v3481 = vpop.f32.mrb[0].mxu0
      %v3482 = vpop.f32.mrb[0].mxu0
      %v3483 = vadd.f32 0.0, %v3482
      %v3484 = vpop.f32.mrb[0].mxu0
      %3485 = vmatprep.mubr.bf16.mxu0 0
      %3486 = vmatmul.mubr.bf16.gmra.mrb[0].mxu0 %v561
      %v3487 = vpop.f32.mrb[0].mxu0
      %v3488 = vpop.f32.mrb[0].mxu0
      %v3489 = vpop.f32.mrb[0].mxu0
      %v3490 = vpop.f32.mrb[0].mxu0
      %3491 = vmatprep.mubr.bf16.mxu0 0
      %3492 = vmatmul.mubr.bf16.gmra.mrb[0].mxu0 %v564
      %v3493 = vpop.f32.mrb[0].mxu0
      %v3494 = vadd.f32 0.0, %v3493
      %v3495 = vpop.f32.mrb[0].mxu0
      %v3496 = vpop.f32.mrb[0].mxu0
      %v3497 = vadd.f32 0.0, %v3496
      %v3498 = vpop.f32.mrb[0].mxu0
      %3499 = vmatprep.mubr.bf16.mxu0 0
      %3500 = vmatmul.mubr.bf16.gmra.mrb[0].mxu0 %v567
      %v3501 = vpop.f32.mrb[0].mxu0
      %v3502 = vpop.f32.mrb[0].mxu0
      %v3503 = vpop.f32.mrb[0].mxu0
      %v3504 = vpop.f32.mrb[0].mxu0
      %3505 = vmatprep.mubr.bf16.mxu0 0
      %3506 = vmatmul.mubr.bf16.gmra.mrb[0].mxu0 %v570
      %v3507 = vpop.f32.mrb[0].mxu0
      %v3508 = vadd.f32 0.0, %v3507
      %v3509 = vpop.f32.mrb[0].mxu0
      %v3510 = vpop.f32.mrb[0].mxu0
      %v3511 = vadd.f32 0.0, %v3510
      %v3512 = vpop.f32.mrb[0].mxu0
      %3513 = vmatprep.mubr.bf16.mxu0 0
      %3514 = vmatmul.mubr.bf16.gmra.mrb[0].mxu0 %v573
      %v3515 = vpop.f32.mrb[0].mxu0
      %v3516 = vpop.f32.mrb[0].mxu0
      %v3517 = vpop.f32.mrb[0].mxu0
      %v3518 = vpop.f32.mrb[0].mxu0
      %3519 = vmatprep.mubr.bf16.mxu0 0
      %3520 = vmatmul.mubr.bf16.gmra.mrb[0].mxu0 %v576
      %v3521 = vpop.f32.mrb[0].mxu0
      %v3522 = vpop.f32.mrb[0].mxu0
      %v3523 = vpop.f32.mrb[0].mxu0
      %v3524 = vpop.f32.mrb[0].mxu0
      %3525 = vmatprep.mubr.bf16.mxu0 0
      %3526 = vmatmul.mubr.bf16.gmra.mrb[0].mxu0 %v579
      %v3527 = vpop.f32.mrb[0].mxu0
      %v3528 = vpop.f32.mrb[0].mxu0
      %v3529 = vpop.f32.mrb[0].mxu0
      %v3530 = vpop.f32.mrb[0].mxu0
      %3531 = vdwg.mxu0
      %v3532 = vadd.f32 %v3202, %v3298
      %v3533 = vadd.f32 %v3203, %v3301
      %v3534 = vadd.f32 %v3204, %v3312
      %v3535 = vadd.f32 %v3205, %v3315
      %v3536 = vadd.f32 %v3206, %v3326
      %v3537 = vadd.f32 %v3207, %v3329
      %v3538 = vadd.f32 %v3208, %v3340
      %v3539 = vadd.f32 %v3209, %v3343
      %v3540 = vadd.f32 %v3210, %v3354
      %v3541 = vadd.f32 %v3211, %v3357
      %v3542 = vadd.f32 %v3212, %v3368
      %v3543 = vadd.f32 %v3213, %v3371
      %v3544 = vadd.f32 %v3214, %v3382
      %v3545 = vadd.f32 %v3215, %v3385
      %v3546 = vadd.f32 %v3216, %v3396
      %v3547 = vadd.f32 %v3217, %v3399
      %v3548 = vadd.f32 %v3218, %v3410
      %v3549 = vadd.f32 %v3219, %v3413
      %v3550 = vadd.f32 %v3220, %v3424
      %v3551 = vadd.f32 %v3221, %v3427
      %v3552 = vadd.f32 %v3222, %v3438
      %v3553 = vadd.f32 %v3223, %v3441
      %v3554 = vadd.f32 %v3224, %v3452
      %v3555 = vadd.f32 %v3225, %v3455
      %v3556 = vadd.f32 %v3226, %v3466
      %v3557 = vadd.f32 %v3227, %v3469
      %v3558 = vadd.f32 %v3228, %v3480
      %v3559 = vadd.f32 %v3229, %v3483
      %v3560 = vadd.f32 %v3230, %v3494
      %v3561 = vadd.f32 %v3231, %v3497
      %v3562 = vadd.f32 %v3232, %v3508
      %v3563 = vadd.f32 %v3233, %v3511
      %s3564 = scalar_lea.vmem %s1, 14
      %v3565 = vld [vmem:[%s3564] sm:$0x3]
      %v3567 = vsel %vm581, %v3565, 0
      %3569 = vmatprep.subr.bf16.mxu0 0
      %3570 = vmatpush1.bf16.msra.mxu0 %v3567
      %3571 = vmatprep.subr.bf16.mxu0 0
      %3572 = vmatpush1.bf16.msra.mxu0 0
      %3573 = vmatprep.subr.bf16.mxu0 0
      %3574 = vmatpush1.bf16.msra.mxu0 0
      %3575 = vmatprep.subr.bf16.mxu0 0
      %3576 = vmatpush1.bf16.msra.mxu0 0
      %3577 = vmatprep.subr.bf16.mxu0 0
      %3578 = vmatpush1.bf16.msra.mxu0 0
      %3579 = vmatprep.subr.bf16.mxu0 0
      %3580 = vmatpush1.bf16.msra.mxu0 0
      %3581 = vmatprep.subr.bf16.mxu0 0
      %3582 = vmatpush1.bf16.msra.mxu0 0
      %3583 = vmatprep.subr.bf16.mxu0 0
      %3584 = vmatpush1.bf16.msra.mxu0 0
      %3585 = vmatprep.subr.bf16.mxu0 0
      %3586 = vmatpush1.bf16.msra.mxu0 0
      %3587 = vmatprep.subr.bf16.mxu0 0
      %3588 = vmatpush1.bf16.msra.mxu0 0
      %3589 = vmatprep.subr.bf16.mxu0 0
      %3590 = vmatpush1.bf16.msra.mxu0 0
      %3591 = vmatprep.subr.bf16.mxu0 0
      %3592 = vmatpush1.bf16.msra.mxu0 0
      %3593 = vmatprep.subr.bf16.mxu0 0
      %3594 = vmatpush1.bf16.msra.mxu0 0
      %3595 = vmatprep.subr.bf16.mxu0 0
      %3596 = vmatpush1.bf16.msra.mxu0 0
      %3597 = vmatprep.subr.bf16.mxu0 0
      %3598 = vmatpush1.bf16.msra.mxu0 0
      %3599 = vmatprep.subr.bf16.mxu0 0
      %3600 = vmatpush1.bf16.msra.mxu0 0
      %3601 = vmatprep.mubr.bf16.mxu0 0
      %3602 = vmatmul.mubr.bf16.gmra.mrb[0].mxu0 %v468
      %v3603 = vpop.f32.mrb[0].mxu0
      %v3604 = vpop.f32.mrb[0].mxu0
      %v3605 = vpop.f32.mrb[0].mxu0
      %v3606 = vpop.f32.mrb[0].mxu0
      %3607 = vmatprep.mubr.bf16.mxu0 0
      %3608 = vmatmul.mubr.bf16.gmra.mrb[0].mxu0 %v471
      %v3609 = vpop.f32.mrb[0].mxu0
      %v3610 = vpop.f32.mrb[0].mxu0
      %v3611 = vpop.f32.mrb[0].mxu0
      %v3612 = vpop.f32.mrb[0].mxu0
      %3613 = vmatprep.mubr.bf16.mxu0 0
      %3614 = vmatmul.mubr.bf16.gmra.mrb[0].mxu0 %v474
      %v3615 = vpop.f32.mrb[0].mxu0
      %v3616 = vpop.f32.mrb[0].mxu0
      %v3617 = vpop.f32.mrb[0].mxu0
      %v3618 = vpop.f32.mrb[0].mxu0
      %3619 = vmatprep.mubr.bf16.mxu0 0
      %3620 = vmatmul.mubr.bf16.gmra.mrb[0].mxu0 %v477
      %v3621 = vpop.f32.mrb[0].mxu0
      %v3622 = vpop.f32.mrb[0].mxu0
      %v3623 = vpop.f32.mrb[0].mxu0
      %v3624 = vpop.f32.mrb[0].mxu0
      %3625 = vmatprep.mubr.bf16.mxu0 0
      %3626 = vmatmul.mubr.bf16.gmra.mrb[0].mxu0 %v480
      %v3627 = vpop.f32.mrb[0].mxu0
      %v3628 = vadd.f32 0.0, %v3627
      %v3629 = vpop.f32.mrb[0].mxu0
      %v3630 = vpop.f32.mrb[0].mxu0
      %v3631 = vadd.f32 0.0, %v3630
      %v3632 = vpop.f32.mrb[0].mxu0
      %3633 = vmatprep.mubr.bf16.mxu0 0
      %3634 = vmatmul.mubr.bf16.gmra.mrb[0].mxu0 %v483
      %v3635 = vpop.f32.mrb[0].mxu0
      %v3636 = vadd.f32 0.0, %v3635
      %v3637 = vpop.f32.mrb[0].mxu0
      %v3638 = vpop.f32.mrb[0].mxu0
      %v3639 = vpop.f32.mrb[0].mxu0
      %3640 = vmatprep.mubr.bf16.mxu0 0
      %3641 = vmatmul.mubr.bf16.gmra.mrb[0].mxu0 %v486
      %v3642 = vpop.f32.mrb[0].mxu0
      %v3643 = vadd.f32 0.0, %v3642
      %v3644 = vpop.f32.mrb[0].mxu0
      %v3645 = vpop.f32.mrb[0].mxu0
      %v3646 = vadd.f32 0.0, %v3645
      %v3647 = vpop.f32.mrb[0].mxu0
      %3648 = vmatprep.mubr.bf16.mxu0 0
      %3649 = vmatmul.mubr.bf16.gmra.mrb[0].mxu0 %v489
      %v3650 = vpop.f32.mrb[0].mxu0
      %v3651 = vadd.f32 0.0, %v3650
      %v3652 = vpop.f32.mrb[0].mxu0
      %v3653 = vpop.f32.mrb[0].mxu0
      %v3654 = vpop.f32.mrb[0].mxu0
      %3655 = vmatprep.mubr.bf16.mxu0 0
      %3656 = vmatmul.mubr.bf16.gmra.mrb[0].mxu0 %v492
      %v3657 = vpop.f32.mrb[0].mxu0
      %v3658 = vadd.f32 0.0, %v3657
      %v3659 = vpop.f32.mrb[0].mxu0
      %v3660 = vpop.f32.mrb[0].mxu0
      %v3661 = vadd.f32 0.0, %v3660
      %v3662 = vpop.f32.mrb[0].mxu0
      %3663 = vmatprep.mubr.bf16.mxu0 0
      %3664 = vmatmul.mubr.bf16.gmra.mrb[0].mxu0 %v495
      %v3665 = vpop.f32.mrb[0].mxu0
      %v3666 = vadd.f32 0.0, %v3665
      %v3667 = vpop.f32.mrb[0].mxu0
      %v3668 = vpop.f32.mrb[0].mxu0
      %v3669 = vpop.f32.mrb[0].mxu0
      %3670 = vmatprep.mubr.bf16.mxu0 0
      %3671 = vmatmul.mubr.bf16.gmra.mrb[0].mxu0 %v498
      %v3672 = vpop.f32.mrb[0].mxu0
      %v3673 = vadd.f32 0.0, %v3672
      %v3674 = vpop.f32.mrb[0].mxu0
      %v3675 = vpop.f32.mrb[0].mxu0
      %v3676 = vadd.f32 0.0, %v3675
      %v3677 = vpop.f32.mrb[0].mxu0
      %3678 = vmatprep.mubr.bf16.mxu0 0
      %3679 = vmatmul.mubr.bf16.gmra.mrb[0].mxu0 %v501
      %v3680 = vpop.f32.mrb[0].mxu0
      %v3681 = vadd.f32 0.0, %v3680
      %v3682 = vpop.f32.mrb[0].mxu0
      %v3683 = vpop.f32.mrb[0].mxu0
      %v3684 = vpop.f32.mrb[0].mxu0
      %3685 = vmatprep.mubr.bf16.mxu0 0
      %3686 = vmatmul.mubr.bf16.gmra.mrb[0].mxu0 %v504
      %v3687 = vpop.f32.mrb[0].mxu0
      %v3688 = vadd.f32 0.0, %v3687
      %v3689 = vpop.f32.mrb[0].mxu0
      %v3690 = vpop.f32.mrb[0].mxu0
      %v3691 = vadd.f32 0.0, %v3690
      %v3692 = vpop.f32.mrb[0].mxu0
      %3693 = vmatprep.mubr.bf16.mxu0 0
      %3694 = vmatmul.mubr.bf16.gmra.mrb[0].mxu0 %v507
      %v3695 = vpop.f32.mrb[0].mxu0
      %v3696 = vadd.f32 0.0, %v3695
      %v3697 = vpop.f32.mrb[0].mxu0
      %v3698 = vpop.f32.mrb[0].mxu0
      %v3699 = vpop.f32.mrb[0].mxu0
      %3700 = vmatprep.mubr.bf16.mxu0 0
      %3701 = vmatmul.mubr.bf16.gmra.mrb[0].mxu0 %v510
      %v3702 = vpop.f32.mrb[0].mxu0
      %v3703 = vadd.f32 0.0, %v3702
      %v3704 = vpop.f32.mrb[0].mxu0
      %v3705 = vpop.f32.mrb[0].mxu0
      %v3706 = vadd.f32 0.0, %v3705
      %v3707 = vpop.f32.mrb[0].mxu0
      %3708 = vmatprep.mubr.bf16.mxu0 0
      %3709 = vmatmul.mubr.bf16.gmra.mrb[0].mxu0 %v513
      %v3710 = vpop.f32.mrb[0].mxu0
      %v3711 = vadd.f32 0.0, %v3710
      %v3712 = vpop.f32.mrb[0].mxu0
      %v3713 = vpop.f32.mrb[0].mxu0
      %v3714 = vpop.f32.mrb[0].mxu0
      %3715 = vmatprep.mubr.bf16.mxu0 0
      %3716 = vmatmul.mubr.bf16.gmra.mrb[0].mxu0 %v516
      %v3717 = vpop.f32.mrb[0].mxu0
      %v3718 = vadd.f32 0.0, %v3717
      %v3719 = vpop.f32.mrb[0].mxu0
      %v3720 = vpop.f32.mrb[0].mxu0
      %v3721 = vadd.f32 0.0, %v3720
      %v3722 = vpop.f32.mrb[0].mxu0
      %3723 = vmatprep.mubr.bf16.mxu0 0
      %3724 = vmatmul.mubr.bf16.gmra.mrb[0].mxu0 %v519
      %v3725 = vpop.f32.mrb[0].mxu0
      %v3726 = vadd.f32 0.0, %v3725
      %v3727 = vpop.f32.mrb[0].mxu0
      %v3728 = vpop.f32.mrb[0].mxu0
      %v3729 = vpop.f32.mrb[0].mxu0
      %3730 = vmatprep.mubr.bf16.mxu0 0
      %3731 = vmatmul.mubr.bf16.gmra.mrb[0].mxu0 %v522
      %v3732 = vpop.f32.mrb[0].mxu0
      %v3733 = vadd.f32 0.0, %v3732
      %v3734 = vpop.f32.mrb[0].mxu0
      %v3735 = vpop.f32.mrb[0].mxu0
      %v3736 = vadd.f32 0.0, %v3735
      %v3737 = vpop.f32.mrb[0].mxu0
      %3738 = vmatprep.mubr.bf16.mxu0 0
      %3739 = vmatmul.mubr.bf16.gmra.mrb[0].mxu0 %v525
      %v3740 = vpop.f32.mrb[0].mxu0
      %v3741 = vadd.f32 0.0, %v3740
      %v3742 = vpop.f32.mrb[0].mxu0
      %v3743 = vpop.f32.mrb[0].mxu0
      %v3744 = vpop.f32.mrb[0].mxu0
      %3745 = vmatprep.mubr.bf16.mxu0 0
      %3746 = vmatmul.mubr.bf16.gmra.mrb[0].mxu0 %v528
      %v3747 = vpop.f32.mrb[0].mxu0
      %v3748 = vadd.f32 0.0, %v3747
      %v3749 = vpop.f32.mrb[0].mxu0
      %v3750 = vpop.f32.mrb[0].mxu0
      %v3751 = vadd.f32 0.0, %v3750
      %v3752 = vpop.f32.mrb[0].mxu0
      %3753 = vmatprep.mubr.bf16.mxu0 0
      %3754 = vmatmul.mubr.bf16.gmra.mrb[0].mxu0 %v531
      %v3755 = vpop.f32.mrb[0].mxu0
      %v3756 = vadd.f32 0.0, %v3755
      %v3757 = vpop.f32.mrb[0].mxu0
      %v3758 = vpop.f32.mrb[0].mxu0
      %v3759 = vpop.f32.mrb[0].mxu0
      %3760 = vmatprep.mubr.bf16.mxu0 0
      %3761 = vmatmul.mubr.bf16.gmra.mrb[0].mxu0 %v534
      %v3762 = vpop.f32.mrb[0].mxu0
      %v3763 = vadd.f32 0.0, %v3762
      %v3764 = vpop.f32.mrb[0].mxu0
      %v3765 = vpop.f32.mrb[0].mxu0
      %v3766 = vadd.f32 0.0, %v3765
      %v3767 = vpop.f32.mrb[0].mxu0
      %3768 = vmatprep.mubr.bf16.mxu0 0
      %3769 = vmatmul.mubr.bf16.gmra.mrb[0].mxu0 %v537
      %v3770 = vpop.f32.mrb[0].mxu0
      %v3771 = vadd.f32 0.0, %v3770
      %v3772 = vpop.f32.mrb[0].mxu0
      %v3773 = vpop.f32.mrb[0].mxu0
      %v3774 = vpop.f32.mrb[0].mxu0
      %3775 = vmatprep.mubr.bf16.mxu0 0
      %3776 = vmatmul.mubr.bf16.gmra.mrb[0].mxu0 %v540
      %v3777 = vpop.f32.mrb[0].mxu0
      %v3778 = vadd.f32 0.0, %v3777
      %v3779 = vpop.f32.mrb[0].mxu0
      %v3780 = vpop.f32.mrb[0].mxu0
      %v3781 = vadd.f32 0.0, %v3780
      %v3782 = vpop.f32.mrb[0].mxu0
      %3783 = vmatprep.mubr.bf16.mxu0 0
      %3784 = vmatmul.mubr.bf16.gmra.mrb[0].mxu0 %v543
      %v3785 = vpop.f32.mrb[0].mxu0
      %v3786 = vadd.f32 0.0, %v3785
      %v3787 = vpop.f32.mrb[0].mxu0
      %v3788 = vpop.f32.mrb[0].mxu0
      %v3789 = vpop.f32.mrb[0].mxu0
      %3790 = vmatprep.mubr.bf16.mxu0 0
      %3791 = vmatmul.mubr.bf16.gmra.mrb[0].mxu0 %v546
      %v3792 = vpop.f32.mrb[0].mxu0
      %v3793 = vadd.f32 0.0, %v3792
      %v3794 = vpop.f32.mrb[0].mxu0
      %v3795 = vpop.f32.mrb[0].mxu0
      %v3796 = vadd.f32 0.0, %v3795
      %v3797 = vpop.f32.mrb[0].mxu0
      %3798 = vmatprep.mubr.bf16.mxu0 0
      %3799 = vmatmul.mubr.bf16.gmra.mrb[0].mxu0 %v549
      %v3800 = vpop.f32.mrb[0].mxu0
      %v3801 = vadd.f32 0.0, %v3800
      %v3802 = vpop.f32.mrb[0].mxu0
      %v3803 = vpop.f32.mrb[0].mxu0
      %v3804 = vpop.f32.mrb[0].mxu0
      %3805 = vmatprep.mubr.bf16.mxu0 0
      %3806 = vmatmul.mubr.bf16.gmra.mrb[0].mxu0 %v552
      %v3807 = vpop.f32.mrb[0].mxu0
      %v3808 = vadd.f32 0.0, %v3807
      %v3809 = vpop.f32.mrb[0].mxu0
      %v3810 = vpop.f32.mrb[0].mxu0
      %v3811 = vadd.f32 0.0, %v3810
      %v3812 = vpop.f32.mrb[0].mxu0
      %3813 = vmatprep.mubr.bf16.mxu0 0
      %3814 = vmatmul.mubr.bf16.gmra.mrb[0].mxu0 %v555
      %v3815 = vpop.f32.mrb[0].mxu0
      %v3816 = vadd.f32 0.0, %v3815
      %v3817 = vpop.f32.mrb[0].mxu0
      %v3818 = vpop.f32.mrb[0].mxu0
      %v3819 = vpop.f32.mrb[0].mxu0
      %3820 = vmatprep.mubr.bf16.mxu0 0
      %3821 = vmatmul.mubr.bf16.gmra.mrb[0].mxu0 %v558
      %v3822 = vpop.f32.mrb[0].mxu0
      %v3823 = vadd.f32 0.0, %v3822
      %v3824 = vpop.f32.mrb[0].mxu0
      %v3825 = vpop.f32.mrb[0].mxu0
      %v3826 = vadd.f32 0.0, %v3825
      %v3827 = vpop.f32.mrb[0].mxu0
      %3828 = vmatprep.mubr.bf16.mxu0 0
      %3829 = vmatmul.mubr.bf16.gmra.mrb[0].mxu0 %v561
      %v3830 = vpop.f32.mrb[0].mxu0
      %v3831 = vadd.f32 0.0, %v3830
      %v3832 = vpop.f32.mrb[0].mxu0
      %v3833 = vpop.f32.mrb[0].mxu0
      %v3834 = vpop.f32.mrb[0].mxu0
      %3835 = vmatprep.mubr.bf16.mxu0 0
      %3836 = vmatmul.mubr.bf16.gmra.mrb[0].mxu0 %v564
      %v3837 = vpop.f32.mrb[0].mxu0
      %v3838 = vadd.f32 0.0, %v3837
      %v3839 = vpop.f32.mrb[0].mxu0
      %v3840 = vpop.f32.mrb[0].mxu0
      %v3841 = vadd.f32 0.0, %v3840
      %v3842 = vpop.f32.mrb[0].mxu0
      %3843 = vmatprep.mubr.bf16.mxu0 0
      %3844 = vmatmul.mubr.bf16.gmra.mrb[0].mxu0 %v567
      %v3845 = vpop.f32.mrb[0].mxu0
      %v3846 = vadd.f32 0.0, %v3845
      %v3847 = vpop.f32.mrb[0].mxu0
      %v3848 = vpop.f32.mrb[0].mxu0
      %v3849 = vpop.f32.mrb[0].mxu0
      %3850 = vmatprep.mubr.bf16.mxu0 0
      %3851 = vmatmul.mubr.bf16.gmra.mrb[0].mxu0 %v570
      %v3852 = vpop.f32.mrb[0].mxu0
      %v3853 = vadd.f32 0.0, %v3852
      %v3854 = vpop.f32.mrb[0].mxu0
      %v3855 = vpop.f32.mrb[0].mxu0
      %v3856 = vadd.f32 0.0, %v3855
      %v3857 = vpop.f32.mrb[0].mxu0
      %3858 = vmatprep.mubr.bf16.mxu0 0
      %3859 = vmatmul.mubr.bf16.gmra.mrb[0].mxu0 %v573
      %v3860 = vpop.f32.mrb[0].mxu0
      %v3861 = vadd.f32 0.0, %v3860
      %v3862 = vpop.f32.mrb[0].mxu0
      %v3863 = vpop.f32.mrb[0].mxu0
      %v3864 = vpop.f32.mrb[0].mxu0
      %3865 = vmatprep.mubr.bf16.mxu0 0
      %3866 = vmatmul.mubr.bf16.gmra.mrb[0].mxu0 %v576
      %v3867 = vpop.f32.mrb[0].mxu0
      %v3868 = vpop.f32.mrb[0].mxu0
      %v3869 = vpop.f32.mrb[0].mxu0
      %v3870 = vpop.f32.mrb[0].mxu0
      %3871 = vmatprep.mubr.bf16.mxu0 0
      %3872 = vmatmul.mubr.bf16.gmra.mrb[0].mxu0 %v579
      %v3873 = vpop.f32.mrb[0].mxu0
      %v3874 = vpop.f32.mrb[0].mxu0
      %v3875 = vpop.f32.mrb[0].mxu0
      %v3876 = vpop.f32.mrb[0].mxu0
      %3877 = vdwg.mxu0
      %v3926 = vrot.slane %v3628, 1
      %v3927 = vrot.slane %v3631, 1
      %v3928 = vsel %vm1240, %v3926, %v3927
      %v3929 = vrot.slane %v3636, 1
      %v3930 = vsel %vm1240, %v3927, %v3929
      %v3931 = vrot.slane %v3643, 1
      %v3932 = vrot.slane %v3646, 1
      %v3933 = vsel %vm1240, %v3931, %v3932
      %v3934 = vrot.slane %v3651, 1
      %v3935 = vsel %vm1240, %v3932, %v3934
      %v3936 = vrot.slane %v3658, 1
      %v3937 = vrot.slane %v3661, 1
      %v3938 = vsel %vm1240, %v3936, %v3937
      %v3939 = vrot.slane %v3666, 1
      %v3940 = vsel %vm1240, %v3937, %v3939
      %v3941 = vrot.slane %v3673, 1
      %v3942 = vrot.slane %v3676, 1
      %v3943 = vsel %vm1240, %v3941, %v3942
      %v3944 = vrot.slane %v3681, 1
      %v3945 = vsel %vm1240, %v3942, %v3944
      %v3946 = vrot.slane %v3688, 1
      %v3947 = vrot.slane %v3691, 1
      %v3948 = vsel %vm1240, %v3946, %v3947
      %v3949 = vrot.slane %v3696, 1
      %v3950 = vsel %vm1240, %v3947, %v3949
      %v3951 = vrot.slane %v3703, 1
      %v3952 = vrot.slane %v3706, 1
      %v3953 = vsel %vm1240, %v3951, %v3952
      %v3954 = vrot.slane %v3711, 1
      %v3955 = vsel %vm1240, %v3952, %v3954
      %v3956 = vrot.slane %v3718, 1
      %v3957 = vrot.slane %v3721, 1
      %v3958 = vsel %vm1240, %v3956, %v3957
      %v3959 = vrot.slane %v3726, 1
      %v3960 = vsel %vm1240, %v3957, %v3959
      %v3961 = vrot.slane %v3733, 1
      %v3962 = vrot.slane %v3736, 1
      %v3963 = vsel %vm1240, %v3961, %v3962
      %v3964 = vrot.slane %v3741, 1
      %v3965 = vsel %vm1240, %v3962, %v3964
      %v3966 = vrot.slane %v3748, 1
      %v3967 = vrot.slane %v3751, 1
      %v3968 = vsel %vm1240, %v3966, %v3967
      %v3969 = vrot.slane %v3756, 1
      %v3970 = vsel %vm1240, %v3967, %v3969
      %v3971 = vrot.slane %v3763, 1
      %v3972 = vrot.slane %v3766, 1
      %v3973 = vsel %vm1240, %v3971, %v3972
      %v3974 = vrot.slane %v3771, 1
      %v3975 = vsel %vm1240, %v3972, %v3974
      %v3976 = vrot.slane %v3778, 1
      %v3977 = vrot.slane %v3781, 1
      %v3978 = vsel %vm1240, %v3976, %v3977
      %v3979 = vrot.slane %v3786, 1
      %v3980 = vsel %vm1240, %v3977, %v3979
      %v3981 = vrot.slane %v3793, 1
      %v3982 = vrot.slane %v3796, 1
      %v3983 = vsel %vm1240, %v3981, %v3982
      %v3984 = vrot.slane %v3801, 1
      %v3985 = vsel %vm1240, %v3982, %v3984
      %v3986 = vrot.slane %v3808, 1
      %v3987 = vrot.slane %v3811, 1
      %v3988 = vsel %vm1240, %v3986, %v3987
      %v3989 = vrot.slane %v3816, 1
      %v3990 = vsel %vm1240, %v3987, %v3989
      %v3991 = vrot.slane %v3823, 1
      %v3992 = vrot.slane %v3826, 1
      %v3993 = vsel %vm1240, %v3991, %v3992
      %v3994 = vrot.slane %v3831, 1
      %v3995 = vsel %vm1240, %v3992, %v3994
      %v3996 = vrot.slane %v3838, 1
      %v3997 = vrot.slane %v3841, 1
      %v3998 = vsel %vm1240, %v3996, %v3997
      %v3999 = vrot.slane %v3846, 1
      %v4000 = vsel %vm1240, %v3997, %v3999
      %v4001 = vrot.slane %v3853, 1
      %v4002 = vrot.slane %v3856, 1
      %v4003 = vsel %vm1240, %v4001, %v4002
      %v4004 = vrot.slane %v3861, 1
      %v4005 = vsel %vm1240, %v4002, %v4004
      %v4038 = vadd.f32 %v3532, %v3928
      %v4039 = vadd.f32 %v3533, %v3930
      %v4040 = vadd.f32 %v3534, %v3933
      %v4041 = vadd.f32 %v3535, %v3935
      %v4042 = vadd.f32 %v3536, %v3938
      %v4043 = vadd.f32 %v3537, %v3940
      %v4044 = vadd.f32 %v3538, %v3943
      %v4045 = vadd.f32 %v3539, %v3945
      %v4046 = vadd.f32 %v3540, %v3948
      %v4047 = vadd.f32 %v3541, %v3950
      %v4048 = vadd.f32 %v3542, %v3953
      %v4049 = vadd.f32 %v3543, %v3955
      %v4050 = vadd.f32 %v3544, %v3958
      %v4051 = vadd.f32 %v3545, %v3960
      %v4052 = vadd.f32 %v3546, %v3963
      %v4053 = vadd.f32 %v3547, %v3965
      %v4054 = vadd.f32 %v3548, %v3968
      %v4055 = vadd.f32 %v3549, %v3970
      %v4056 = vadd.f32 %v3550, %v3973
      %v4057 = vadd.f32 %v3551, %v3975
      %v4058 = vadd.f32 %v3552, %v3978
      %v4059 = vadd.f32 %v3553, %v3980
      %v4060 = vadd.f32 %v3554, %v3983
      %v4061 = vadd.f32 %v3555, %v3985
      %v4062 = vadd.f32 %v3556, %v3988
      %v4063 = vadd.f32 %v3557, %v3990
      %v4064 = vadd.f32 %v3558, %v3993
      %v4065 = vadd.f32 %v3559, %v3995
      %v4066 = vadd.f32 %v3560, %v3998
      %v4067 = vadd.f32 %v3561, %v4000
      %v4068 = vadd.f32 %v3562, %v4003
      %v4069 = vadd.f32 %v3563, %v4005
      %s4070 = scalar_lea.vmem %s1, 16
      %v4071 = vld [vmem:[%s4070] sm:$0x3]
      %v4073 = vsel %vm581, %v4071, 0
      %4075 = vmatprep.subr.bf16.mxu0 0
      %4076 = vmatpush1.bf16.msra.mxu0 %v4073
      %4077 = vmatprep.subr.bf16.mxu0 0
      %4078 = vmatpush1.bf16.msra.mxu0 0
      %4079 = vmatprep.subr.bf16.mxu0 0
      %4080 = vmatpush1.bf16.msra.mxu0 0
      %4081 = vmatprep.subr.bf16.mxu0 0
      %4082 = vmatpush1.bf16.msra.mxu0 0
      %4083 = vmatprep.subr.bf16.mxu0 0
      %4084 = vmatpush1.bf16.msra.mxu0 0
      %4085 = vmatprep.subr.bf16.mxu0 0
      %4086 = vmatpush1.bf16.msra.mxu0 0
      %4087 = vmatprep.subr.bf16.mxu0 0
      %4088 = vmatpush1.bf16.msra.mxu0 0
      %4089 = vmatprep.subr.bf16.mxu0 0
      %4090 = vmatpush1.bf16.msra.mxu0 0
      %4091 = vmatprep.subr.bf16.mxu0 0
      %4092 = vmatpush1.bf16.msra.mxu0 0
      %4093 = vmatprep.subr.bf16.mxu0 0
      %4094 = vmatpush1.bf16.msra.mxu0 0
      %4095 = vmatprep.subr.bf16.mxu0 0
      %4096 = vmatpush1.bf16.msra.mxu0 0
      %4097 = vmatprep.subr.bf16.mxu0 0
      %4098 = vmatpush1.bf16.msra.mxu0 0
      %4099 = vmatprep.subr.bf16.mxu0 0
      %4100 = vmatpush1.bf16.msra.mxu0 0
      %4101 = vmatprep.subr.bf16.mxu0 0
      %4102 = vmatpush1.bf16.msra.mxu0 0
      %4103 = vmatprep.subr.bf16.mxu0 0
      %4104 = vmatpush1.bf16.msra.mxu0 0
      %4105 = vmatprep.subr.bf16.mxu0 0
      %4106 = vmatpush1.bf16.msra.mxu0 0
      %4107 = vmatprep.mubr.bf16.mxu0 0
      %4108 = vmatmul.mubr.bf16.gmra.mrb[0].mxu0 %v468
      %v4109 = vpop.f32.mrb[0].mxu0
      %v4110 = vpop.f32.mrb[0].mxu0
      %v4111 = vpop.f32.mrb[0].mxu0
      %v4112 = vpop.f32.mrb[0].mxu0
      %4113 = vmatprep.mubr.bf16.mxu0 0
      %4114 = vmatmul.mubr.bf16.gmra.mrb[0].mxu0 %v471
      %v4115 = vpop.f32.mrb[0].mxu0
      %v4116 = vpop.f32.mrb[0].mxu0
      %v4117 = vpop.f32.mrb[0].mxu0
      %v4118 = vpop.f32.mrb[0].mxu0
      %4119 = vmatprep.mubr.bf16.mxu0 0
      %4120 = vmatmul.mubr.bf16.gmra.mrb[0].mxu0 %v474
      %v4121 = vpop.f32.mrb[0].mxu0
      %v4122 = vpop.f32.mrb[0].mxu0
      %v4123 = vpop.f32.mrb[0].mxu0
      %v4124 = vpop.f32.mrb[0].mxu0
      %4125 = vmatprep.mubr.bf16.mxu0 0
      %4126 = vmatmul.mubr.bf16.gmra.mrb[0].mxu0 %v477
      %v4127 = vpop.f32.mrb[0].mxu0
      %v4128 = vpop.f32.mrb[0].mxu0
      %v4129 = vpop.f32.mrb[0].mxu0
      %v4130 = vpop.f32.mrb[0].mxu0
      %4131 = vmatprep.mubr.bf16.mxu0 0
      %4132 = vmatmul.mubr.bf16.gmra.mrb[0].mxu0 %v480
      %v4133 = vpop.f32.mrb[0].mxu0
      %v4134 = vadd.f32 0.0, %v4133
      %v4135 = vpop.f32.mrb[0].mxu0
      %v4136 = vpop.f32.mrb[0].mxu0
      %v4137 = vadd.f32 0.0, %v4136
      %v4138 = vpop.f32.mrb[0].mxu0
      %4139 = vmatprep.mubr.bf16.mxu0 0
      %4140 = vmatmul.mubr.bf16.gmra.mrb[0].mxu0 %v483
      %v4141 = vpop.f32.mrb[0].mxu0
      %v4142 = vadd.f32 0.0, %v4141
      %v4143 = vpop.f32.mrb[0].mxu0
      %v4144 = vpop.f32.mrb[0].mxu0
      %v4145 = vpop.f32.mrb[0].mxu0
      %4146 = vmatprep.mubr.bf16.mxu0 0
      %4147 = vmatmul.mubr.bf16.gmra.mrb[0].mxu0 %v486
      %v4148 = vpop.f32.mrb[0].mxu0
      %v4149 = vadd.f32 0.0, %v4148
      %v4150 = vpop.f32.mrb[0].mxu0
      %v4151 = vpop.f32.mrb[0].mxu0
      %v4152 = vadd.f32 0.0, %v4151
      %v4153 = vpop.f32.mrb[0].mxu0
      %4154 = vmatprep.mubr.bf16.mxu0 0
      %4155 = vmatmul.mubr.bf16.gmra.mrb[0].mxu0 %v489
      %v4156 = vpop.f32.mrb[0].mxu0
      %v4157 = vadd.f32 0.0, %v4156
      %v4158 = vpop.f32.mrb[0].mxu0
      %v4159 = vpop.f32.mrb[0].mxu0
      %v4160 = vpop.f32.mrb[0].mxu0
      %4161 = vmatprep.mubr.bf16.mxu0 0
      %4162 = vmatmul.mubr.bf16.gmra.mrb[0].mxu0 %v492
      %v4163 = vpop.f32.mrb[0].mxu0
      %v4164 = vadd.f32 0.0, %v4163
      %v4165 = vpop.f32.mrb[0].mxu0
      %v4166 = vpop.f32.mrb[0].mxu0
      %v4167 = vadd.f32 0.0, %v4166
      %v4168 = vpop.f32.mrb[0].mxu0
      %4169 = vmatprep.mubr.bf16.mxu0 0
      %4170 = vmatmul.mubr.bf16.gmra.mrb[0].mxu0 %v495
      %v4171 = vpop.f32.mrb[0].mxu0
      %v4172 = vadd.f32 0.0, %v4171
      %v4173 = vpop.f32.mrb[0].mxu0
      %v4174 = vpop.f32.mrb[0].mxu0
      %v4175 = vpop.f32.mrb[0].mxu0
      %4176 = vmatprep.mubr.bf16.mxu0 0
      %4177 = vmatmul.mubr.bf16.gmra.mrb[0].mxu0 %v498
      %v4178 = vpop.f32.mrb[0].mxu0
      %v4179 = vadd.f32 0.0, %v4178
      %v4180 = vpop.f32.mrb[0].mxu0
      %v4181 = vpop.f32.mrb[0].mxu0
      %v4182 = vadd.f32 0.0, %v4181
      %v4183 = vpop.f32.mrb[0].mxu0
      %4184 = vmatprep.mubr.bf16.mxu0 0
      %4185 = vmatmul.mubr.bf16.gmra.mrb[0].mxu0 %v501
      %v4186 = vpop.f32.mrb[0].mxu0
      %v4187 = vadd.f32 0.0, %v4186
      %v4188 = vpop.f32.mrb[0].mxu0
      %v4189 = vpop.f32.mrb[0].mxu0
      %v4190 = vpop.f32.mrb[0].mxu0
      %4191 = vmatprep.mubr.bf16.mxu0 0
      %4192 = vmatmul.mubr.bf16.gmra.mrb[0].mxu0 %v504
      %v4193 = vpop.f32.mrb[0].mxu0
      %v4194 = vadd.f32 0.0, %v4193
      %v4195 = vpop.f32.mrb[0].mxu0
      %v4196 = vpop.f32.mrb[0].mxu0
      %v4197 = vadd.f32 0.0, %v4196
      %v4198 = vpop.f32.mrb[0].mxu0
      %4199 = vmatprep.mubr.bf16.mxu0 0
      %4200 = vmatmul.mubr.bf16.gmra.mrb[0].mxu0 %v507
      %v4201 = vpop.f32.mrb[0].mxu0
      %v4202 = vadd.f32 0.0, %v4201
      %v4203 = vpop.f32.mrb[0].mxu0
      %v4204 = vpop.f32.mrb[0].mxu0
      %v4205 = vpop.f32.mrb[0].mxu0
      %4206 = vmatprep.mubr.bf16.mxu0 0
      %4207 = vmatmul.mubr.bf16.gmra.mrb[0].mxu0 %v510
      %v4208 = vpop.f32.mrb[0].mxu0
      %v4209 = vadd.f32 0.0, %v4208
      %v4210 = vpop.f32.mrb[0].mxu0
      %v4211 = vpop.f32.mrb[0].mxu0
      %v4212 = vadd.f32 0.0, %v4211
      %v4213 = vpop.f32.mrb[0].mxu0
      %4214 = vmatprep.mubr.bf16.mxu0 0
      %4215 = vmatmul.mubr.bf16.gmra.mrb[0].mxu0 %v513
      %v4216 = vpop.f32.mrb[0].mxu0
      %v4217 = vadd.f32 0.0, %v4216
      %v4218 = vpop.f32.mrb[0].mxu0
      %v4219 = vpop.f32.mrb[0].mxu0
      %v4220 = vpop.f32.mrb[0].mxu0
      %4221 = vmatprep.mubr.bf16.mxu0 0
      %4222 = vmatmul.mubr.bf16.gmra.mrb[0].mxu0 %v516
      %v4223 = vpop.f32.mrb[0].mxu0
      %v4224 = vadd.f32 0.0, %v4223
      %v4225 = vpop.f32.mrb[0].mxu0
      %v4226 = vpop.f32.mrb[0].mxu0
      %v4227 = vadd.f32 0.0, %v4226
      %v4228 = vpop.f32.mrb[0].mxu0
      %4229 = vmatprep.mubr.bf16.mxu0 0
      %4230 = vmatmul.mubr.bf16.gmra.mrb[0].mxu0 %v519
      %v4231 = vpop.f32.mrb[0].mxu0
      %v4232 = vadd.f32 0.0, %v4231
      %v4233 = vpop.f32.mrb[0].mxu0
      %v4234 = vpop.f32.mrb[0].mxu0
      %v4235 = vpop.f32.mrb[0].mxu0
      %4236 = vmatprep.mubr.bf16.mxu0 0
      %4237 = vmatmul.mubr.bf16.gmra.mrb[0].mxu0 %v522
      %v4238 = vpop.f32.mrb[0].mxu0
      %v4239 = vadd.f32 0.0, %v4238
      %v4240 = vpop.f32.mrb[0].mxu0
      %v4241 = vpop.f32.mrb[0].mxu0
      %v4242 = vadd.f32 0.0, %v4241
      %v4243 = vpop.f32.mrb[0].mxu0
      %4244 = vmatprep.mubr.bf16.mxu0 0
      %4245 = vmatmul.mubr.bf16.gmra.mrb[0].mxu0 %v525
      %v4246 = vpop.f32.mrb[0].mxu0
      %v4247 = vadd.f32 0.0, %v4246
      %v4248 = vpop.f32.mrb[0].mxu0
      %v4249 = vpop.f32.mrb[0].mxu0
      %v4250 = vpop.f32.mrb[0].mxu0
      %4251 = vmatprep.mubr.bf16.mxu0 0
      %4252 = vmatmul.mubr.bf16.gmra.mrb[0].mxu0 %v528
      %v4253 = vpop.f32.mrb[0].mxu0
      %v4254 = vadd.f32 0.0, %v4253
      %v4255 = vpop.f32.mrb[0].mxu0
      %v4256 = vpop.f32.mrb[0].mxu0
      %v4257 = vadd.f32 0.0, %v4256
      %v4258 = vpop.f32.mrb[0].mxu0
      %4259 = vmatprep.mubr.bf16.mxu0 0
      %4260 = vmatmul.mubr.bf16.gmra.mrb[0].mxu0 %v531
      %v4261 = vpop.f32.mrb[0].mxu0
      %v4262 = vadd.f32 0.0, %v4261
      %v4263 = vpop.f32.mrb[0].mxu0
      %v4264 = vpop.f32.mrb[0].mxu0
      %v4265 = vpop.f32.mrb[0].mxu0
      %4266 = vmatprep.mubr.bf16.mxu0 0
      %4267 = vmatmul.mubr.bf16.gmra.mrb[0].mxu0 %v534
      %v4268 = vpop.f32.mrb[0].mxu0
      %v4269 = vadd.f32 0.0, %v4268
      %v4270 = vpop.f32.mrb[0].mxu0
      %v4271 = vpop.f32.mrb[0].mxu0
      %v4272 = vadd.f32 0.0, %v4271
      %v4273 = vpop.f32.mrb[0].mxu0
      %4274 = vmatprep.mubr.bf16.mxu0 0
      %4275 = vmatmul.mubr.bf16.gmra.mrb[0].mxu0 %v537
      %v4276 = vpop.f32.mrb[0].mxu0
      %v4277 = vadd.f32 0.0, %v4276
      %v4278 = vpop.f32.mrb[0].mxu0
      %v4279 = vpop.f32.mrb[0].mxu0
      %v4280 = vpop.f32.mrb[0].mxu0
      %4281 = vmatprep.mubr.bf16.mxu0 0
      %4282 = vmatmul.mubr.bf16.gmra.mrb[0].mxu0 %v540
      %v4283 = vpop.f32.mrb[0].mxu0
      %v4284 = vadd.f32 0.0, %v4283
      %v4285 = vpop.f32.mrb[0].mxu0
      %v4286 = vpop.f32.mrb[0].mxu0
      %v4287 = vadd.f32 0.0, %v4286
      %v4288 = vpop.f32.mrb[0].mxu0
      %4289 = vmatprep.mubr.bf16.mxu0 0
      %4290 = vmatmul.mubr.bf16.gmra.mrb[0].mxu0 %v543
      %v4291 = vpop.f32.mrb[0].mxu0
      %v4292 = vadd.f32 0.0, %v4291
      %v4293 = vpop.f32.mrb[0].mxu0
      %v4294 = vpop.f32.mrb[0].mxu0
      %v4295 = vpop.f32.mrb[0].mxu0
      %4296 = vmatprep.mubr.bf16.mxu0 0
      %4297 = vmatmul.mubr.bf16.gmra.mrb[0].mxu0 %v546
      %v4298 = vpop.f32.mrb[0].mxu0
      %v4299 = vadd.f32 0.0, %v4298
      %v4300 = vpop.f32.mrb[0].mxu0
      %v4301 = vpop.f32.mrb[0].mxu0
      %v4302 = vadd.f32 0.0, %v4301
      %v4303 = vpop.f32.mrb[0].mxu0
      %4304 = vmatprep.mubr.bf16.mxu0 0
      %4305 = vmatmul.mubr.bf16.gmra.mrb[0].mxu0 %v549
      %v4306 = vpop.f32.mrb[0].mxu0
      %v4307 = vadd.f32 0.0, %v4306
      %v4308 = vpop.f32.mrb[0].mxu0
      %v4309 = vpop.f32.mrb[0].mxu0
      %v4310 = vpop.f32.mrb[0].mxu0
      %4311 = vmatprep.mubr.bf16.mxu0 0
      %4312 = vmatmul.mubr.bf16.gmra.mrb[0].mxu0 %v552
      %v4313 = vpop.f32.mrb[0].mxu0
      %v4314 = vadd.f32 0.0, %v4313
      %v4315 = vpop.f32.mrb[0].mxu0
      %v4316 = vpop.f32.mrb[0].mxu0
      %v4317 = vadd.f32 0.0, %v4316
      %v4318 = vpop.f32.mrb[0].mxu0
      %4319 = vmatprep.mubr.bf16.mxu0 0
      %4320 = vmatmul.mubr.bf16.gmra.mrb[0].mxu0 %v555
      %v4321 = vpop.f32.mrb[0].mxu0
      %v4322 = vadd.f32 0.0, %v4321
      %v4323 = vpop.f32.mrb[0].mxu0
      %v4324 = vpop.f32.mrb[0].mxu0
      %v4325 = vpop.f32.mrb[0].mxu0
      %4326 = vmatprep.mubr.bf16.mxu0 0
      %4327 = vmatmul.mubr.bf16.gmra.mrb[0].mxu0 %v558
      %v4328 = vpop.f32.mrb[0].mxu0
      %v4329 = vadd.f32 0.0, %v4328
      %v4330 = vpop.f32.mrb[0].mxu0
      %v4331 = vpop.f32.mrb[0].mxu0
      %v4332 = vadd.f32 0.0, %v4331
      %v4333 = vpop.f32.mrb[0].mxu0
      %4334 = vmatprep.mubr.bf16.mxu0 0
      %4335 = vmatmul.mubr.bf16.gmra.mrb[0].mxu0 %v561
      %v4336 = vpop.f32.mrb[0].mxu0
      %v4337 = vadd.f32 0.0, %v4336
      %v4338 = vpop.f32.mrb[0].mxu0
      %v4339 = vpop.f32.mrb[0].mxu0
      %v4340 = vpop.f32.mrb[0].mxu0
      %4341 = vmatprep.mubr.bf16.mxu0 0
      %4342 = vmatmul.mubr.bf16.gmra.mrb[0].mxu0 %v564
      %v4343 = vpop.f32.mrb[0].mxu0
      %v4344 = vadd.f32 0.0, %v4343
      %v4345 = vpop.f32.mrb[0].mxu0
      %v4346 = vpop.f32.mrb[0].mxu0
      %v4347 = vadd.f32 0.0, %v4346
      %v4348 = vpop.f32.mrb[0].mxu0
      %4349 = vmatprep.mubr.bf16.mxu0 0
      %4350 = vmatmul.mubr.bf16.gmra.mrb[0].mxu0 %v567
      %v4351 = vpop.f32.mrb[0].mxu0
      %v4352 = vadd.f32 0.0, %v4351
      %v4353 = vpop.f32.mrb[0].mxu0
      %v4354 = vpop.f32.mrb[0].mxu0
      %v4355 = vpop.f32.mrb[0].mxu0
      %4356 = vmatprep.mubr.bf16.mxu0 0
      %4357 = vmatmul.mubr.bf16.gmra.mrb[0].mxu0 %v570
      %v4358 = vpop.f32.mrb[0].mxu0
      %v4359 = vadd.f32 0.0, %v4358
      %v4360 = vpop.f32.mrb[0].mxu0
      %v4361 = vpop.f32.mrb[0].mxu0
      %v4362 = vadd.f32 0.0, %v4361
      %v4363 = vpop.f32.mrb[0].mxu0
      %4364 = vmatprep.mubr.bf16.mxu0 0
      %4365 = vmatmul.mubr.bf16.gmra.mrb[0].mxu0 %v573
      %v4366 = vpop.f32.mrb[0].mxu0
      %v4367 = vadd.f32 0.0, %v4366
      %v4368 = vpop.f32.mrb[0].mxu0
      %v4369 = vpop.f32.mrb[0].mxu0
      %v4370 = vpop.f32.mrb[0].mxu0
      %4371 = vmatprep.mubr.bf16.mxu0 0
      %4372 = vmatmul.mubr.bf16.gmra.mrb[0].mxu0 %v576
      %v4373 = vpop.f32.mrb[0].mxu0
      %v4374 = vpop.f32.mrb[0].mxu0
      %v4375 = vpop.f32.mrb[0].mxu0
      %v4376 = vpop.f32.mrb[0].mxu0
      %4377 = vmatprep.mubr.bf16.mxu0 0
      %4378 = vmatmul.mubr.bf16.gmra.mrb[0].mxu0 %v579
      %v4379 = vpop.f32.mrb[0].mxu0
      %v4380 = vpop.f32.mrb[0].mxu0
      %v4381 = vpop.f32.mrb[0].mxu0
      %v4382 = vpop.f32.mrb[0].mxu0
      %4383 = vdwg.mxu0
      %v4432 = vrot.slane %v4134, 2
      %v4433 = vrot.slane %v4137, 2
      %v4434 = vsel %vm1747, %v4432, %v4433
      %v4435 = vrot.slane %v4142, 2
      %v4436 = vsel %vm1747, %v4433, %v4435
      %v4437 = vrot.slane %v4149, 2
      %v4438 = vrot.slane %v4152, 2
      %v4439 = vsel %vm1747, %v4437, %v4438
      %v4440 = vrot.slane %v4157, 2
      %v4441 = vsel %vm1747, %v4438, %v4440
      %v4442 = vrot.slane %v4164, 2
      %v4443 = vrot.slane %v4167, 2
      %v4444 = vsel %vm1747, %v4442, %v4443
      %v4445 = vrot.slane %v4172, 2
      %v4446 = vsel %vm1747, %v4443, %v4445
      %v4447 = vrot.slane %v4179, 2
      %v4448 = vrot.slane %v4182, 2
      %v4449 = vsel %vm1747, %v4447, %v4448
      %v4450 = vrot.slane %v4187, 2
      %v4451 = vsel %vm1747, %v4448, %v4450
      %v4452 = vrot.slane %v4194, 2
      %v4453 = vrot.slane %v4197, 2
      %v4454 = vsel %vm1747, %v4452, %v4453
      %v4455 = vrot.slane %v4202, 2
      %v4456 = vsel %vm1747, %v4453, %v4455
      %v4457 = vrot.slane %v4209, 2
      %v4458 = vrot.slane %v4212, 2
      %v4459 = vsel %vm1747, %v4457, %v4458
      %v4460 = vrot.slane %v4217, 2
      %v4461 = vsel %vm1747, %v4458, %v4460
      %v4462 = vrot.slane %v4224, 2
      %v4463 = vrot.slane %v4227, 2
      %v4464 = vsel %vm1747, %v4462, %v4463
      %v4465 = vrot.slane %v4232, 2
      %v4466 = vsel %vm1747, %v4463, %v4465
      %v4467 = vrot.slane %v4239, 2
      %v4468 = vrot.slane %v4242, 2
      %v4469 = vsel %vm1747, %v4467, %v4468
      %v4470 = vrot.slane %v4247, 2
      %v4471 = vsel %vm1747, %v4468, %v4470
      %v4472 = vrot.slane %v4254, 2
      %v4473 = vrot.slane %v4257, 2
      %v4474 = vsel %vm1747, %v4472, %v4473
      %v4475 = vrot.slane %v4262, 2
      %v4476 = vsel %vm1747, %v4473, %v4475
      %v4477 = vrot.slane %v4269, 2
      %v4478 = vrot.slane %v4272, 2
      %v4479 = vsel %vm1747, %v4477, %v4478
      %v4480 = vrot.slane %v4277, 2
      %v4481 = vsel %vm1747, %v4478, %v4480
      %v4482 = vrot.slane %v4284, 2
      %v4483 = vrot.slane %v4287, 2
      %v4484 = vsel %vm1747, %v4482, %v4483
      %v4485 = vrot.slane %v4292, 2
      %v4486 = vsel %vm1747, %v4483, %v4485
      %v4487 = vrot.slane %v4299, 2
      %v4488 = vrot.slane %v4302, 2
      %v4489 = vsel %vm1747, %v4487, %v4488
      %v4490 = vrot.slane %v4307, 2
      %v4491 = vsel %vm1747, %v4488, %v4490
      %v4492 = vrot.slane %v4314, 2
      %v4493 = vrot.slane %v4317, 2
      %v4494 = vsel %vm1747, %v4492, %v4493
      %v4495 = vrot.slane %v4322, 2
      %v4496 = vsel %vm1747, %v4493, %v4495
      %v4497 = vrot.slane %v4329, 2
      %v4498 = vrot.slane %v4332, 2
      %v4499 = vsel %vm1747, %v4497, %v4498
      %v4500 = vrot.slane %v4337, 2
      %v4501 = vsel %vm1747, %v4498, %v4500
      %v4502 = vrot.slane %v4344, 2
      %v4503 = vrot.slane %v4347, 2
      %v4504 = vsel %vm1747, %v4502, %v4503
      %v4505 = vrot.slane %v4352, 2
      %v4506 = vsel %vm1747, %v4503, %v4505
      %v4507 = vrot.slane %v4359, 2
      %v4508 = vrot.slane %v4362, 2
      %v4509 = vsel %vm1747, %v4507, %v4508
      %v4510 = vrot.slane %v4367, 2
      %v4511 = vsel %vm1747, %v4508, %v4510
      %v4544 = vadd.f32 %v4038, %v4434
      %v4545 = vadd.f32 %v4039, %v4436
      %v4546 = vadd.f32 %v4040, %v4439
      %v4547 = vadd.f32 %v4041, %v4441
      %v4548 = vadd.f32 %v4042, %v4444
      %v4549 = vadd.f32 %v4043, %v4446
      %v4550 = vadd.f32 %v4044, %v4449
      %v4551 = vadd.f32 %v4045, %v4451
      %v4552 = vadd.f32 %v4046, %v4454
      %v4553 = vadd.f32 %v4047, %v4456
      %v4554 = vadd.f32 %v4048, %v4459
      %v4555 = vadd.f32 %v4049, %v4461
      %v4556 = vadd.f32 %v4050, %v4464
      %v4557 = vadd.f32 %v4051, %v4466
      %v4558 = vadd.f32 %v4052, %v4469
      %v4559 = vadd.f32 %v4053, %v4471
      %v4560 = vadd.f32 %v4054, %v4474
      %v4561 = vadd.f32 %v4055, %v4476
      %v4562 = vadd.f32 %v4056, %v4479
      %v4563 = vadd.f32 %v4057, %v4481
      %v4564 = vadd.f32 %v4058, %v4484
      %v4565 = vadd.f32 %v4059, %v4486
      %v4566 = vadd.f32 %v4060, %v4489
      %v4567 = vadd.f32 %v4061, %v4491
      %v4568 = vadd.f32 %v4062, %v4494
      %v4569 = vadd.f32 %v4063, %v4496
      %v4570 = vadd.f32 %v4064, %v4499
      %v4571 = vadd.f32 %v4065, %v4501
      %v4572 = vadd.f32 %v4066, %v4504
      %v4573 = vadd.f32 %v4067, %v4506
      %v4574 = vadd.f32 %v4068, %v4509
      %v4575 = vadd.f32 %v4069, %v4511
      %vm4576 = vcmask 64512
      %v4577 = vsel %vm4576, %v4544, 0.0
      %v4578 = vsel %vm4576, %v4545, 0.0
      %v4579 = vadd.f32 %v4577, %v4578
      %v4580 = vsel %vm4576, %v4546, 0.0
      %v4581 = vadd.f32 %v4579, %v4580
      %v4582 = vsel %vm4576, %v4547, 0.0
      %v4583 = vadd.f32 %v4581, %v4582
      %v4584 = vsel %vm4576, %v4548, 0.0
      %v4585 = vadd.f32 %v4583, %v4584
      %v4586 = vsel %vm4576, %v4549, 0.0
      %v4587 = vadd.f32 %v4585, %v4586
      %v4588 = vsel %vm4576, %v4550, 0.0
      %v4589 = vadd.f32 %v4587, %v4588
      %v4590 = vsel %vm4576, %v4551, 0.0
      %v4591 = vadd.f32 %v4589, %v4590
      %v4592 = vsel %vm4576, %v4552, 0.0
      %v4593 = vadd.f32 %v4591, %v4592
      %v4594 = vsel %vm4576, %v4553, 0.0
      %v4595 = vadd.f32 %v4593, %v4594
      %v4596 = vsel %vm4576, %v4554, 0.0
      %v4597 = vadd.f32 %v4595, %v4596
      %v4598 = vsel %vm4576, %v4555, 0.0
      %v4599 = vadd.f32 %v4597, %v4598
      %v4600 = vsel %vm4576, %v4556, 0.0
      %v4601 = vadd.f32 %v4599, %v4600
      %v4602 = vsel %vm4576, %v4557, 0.0
      %v4603 = vadd.f32 %v4601, %v4602
      %v4604 = vsel %vm4576, %v4558, 0.0
      %v4605 = vadd.f32 %v4603, %v4604
      %v4606 = vsel %vm4576, %v4559, 0.0
      %v4607 = vadd.f32 %v4605, %v4606
      %v4608 = vsel %vm4576, %v4560, 0.0
      %v4609 = vadd.f32 %v4607, %v4608
      %v4610 = vsel %vm4576, %v4561, 0.0
      %v4611 = vadd.f32 %v4609, %v4610
      %v4612 = vsel %vm4576, %v4562, 0.0
      %v4613 = vadd.f32 %v4611, %v4612
      %v4614 = vsel %vm4576, %v4563, 0.0
      %v4615 = vadd.f32 %v4613, %v4614
      %v4616 = vsel %vm4576, %v4564, 0.0
      %v4617 = vadd.f32 %v4615, %v4616
      %v4618 = vsel %vm4576, %v4565, 0.0
      %v4619 = vadd.f32 %v4617, %v4618
      %v4620 = vsel %vm4576, %v4566, 0.0
      %v4621 = vadd.f32 %v4619, %v4620
      %v4622 = vsel %vm4576, %v4567, 0.0
      %v4623 = vadd.f32 %v4621, %v4622
      %v4624 = vsel %vm4576, %v4568, 0.0
      %v4625 = vadd.f32 %v4623, %v4624
      %v4626 = vsel %vm4576, %v4569, 0.0
      %v4627 = vadd.f32 %v4625, %v4626
      %v4628 = vsel %vm4576, %v4570, 0.0
      %v4629 = vadd.f32 %v4627, %v4628
      %v4630 = vsel %vm4576, %v4571, 0.0
      %v4631 = vadd.f32 %v4629, %v4630
      %v4632 = vsel %vm4576, %v4572, 0.0
      %v4633 = vadd.f32 %v4631, %v4632
      %v4634 = vsel %vm4576, %v4573, 0.0
      %v4635 = vadd.f32 %v4633, %v4634
      %v4636 = vsel %vm4576, %v4574, 0.0
      %v4637 = vadd.f32 %v4635, %v4636
      %v4638 = vsel %vm4576, %v4575, 0.0
      %v4639 = vadd.f32 %v4637, %v4638
      %v4640 = vrot.slane %v4639, 4
      %v4641 = vadd.f32 %v4639, %v4640
      %v4642 = vrot.slane %v4641, 2
      %v4643 = vadd.f32 %v4641, %v4642
      %v4644 = vrot.slane %v4643, 1
      %v4645 = vadd.f32 %v4643, %v4644
      %v4646 = vmul.f32 %v4544, %v4544
      %v4647 = vmul.f32 %v4545, %v4545
      %v4648 = vmul.f32 %v4546, %v4546
      %v4649 = vmul.f32 %v4547, %v4547
      %v4650 = vmul.f32 %v4548, %v4548
      %v4651 = vmul.f32 %v4549, %v4549
      %v4652 = vmul.f32 %v4550, %v4550
      %v4653 = vmul.f32 %v4551, %v4551
      %v4654 = vmul.f32 %v4552, %v4552
      %v4655 = vmul.f32 %v4553, %v4553
      %v4656 = vmul.f32 %v4554, %v4554
      %v4657 = vmul.f32 %v4555, %v4555
      %v4658 = vmul.f32 %v4556, %v4556
      %v4659 = vmul.f32 %v4557, %v4557
      %v4660 = vmul.f32 %v4558, %v4558
      %v4661 = vmul.f32 %v4559, %v4559
      %v4662 = vmul.f32 %v4560, %v4560
      %v4663 = vmul.f32 %v4561, %v4561
      %v4664 = vmul.f32 %v4562, %v4562
      %v4665 = vmul.f32 %v4563, %v4563
      %v4666 = vmul.f32 %v4564, %v4564
      %v4667 = vmul.f32 %v4565, %v4565
      %v4668 = vmul.f32 %v4566, %v4566
      %v4669 = vmul.f32 %v4567, %v4567
      %v4670 = vmul.f32 %v4568, %v4568
      %v4671 = vmul.f32 %v4569, %v4569
      %v4672 = vmul.f32 %v4570, %v4570
      %v4673 = vmul.f32 %v4571, %v4571
      %v4674 = vmul.f32 %v4572, %v4572
      %v4675 = vmul.f32 %v4573, %v4573
      %v4676 = vmul.f32 %v4574, %v4574
      %v4677 = vmul.f32 %v4575, %v4575
      %v4678 = vsel %vm4576, %v4646, 0.0
      %v4679 = vsel %vm4576, %v4647, 0.0
      %v4680 = vadd.f32 %v4678, %v4679
      %v4681 = vsel %vm4576, %v4648, 0.0
      %v4682 = vadd.f32 %v4680, %v4681
      %v4683 = vsel %vm4576, %v4649, 0.0
      %v4684 = vadd.f32 %v4682, %v4683
      %v4685 = vsel %vm4576, %v4650, 0.0
      %v4686 = vadd.f32 %v4684, %v4685
      %v4687 = vsel %vm4576, %v4651, 0.0
      %v4688 = vadd.f32 %v4686, %v4687
      %v4689 = vsel %vm4576, %v4652, 0.0
      %v4690 = vadd.f32 %v4688, %v4689
      %v4691 = vsel %vm4576, %v4653, 0.0
      %v4692 = vadd.f32 %v4690, %v4691
      %v4693 = vsel %vm4576, %v4654, 0.0
      %v4694 = vadd.f32 %v4692, %v4693
      %v4695 = vsel %vm4576, %v4655, 0.0
      %v4696 = vadd.f32 %v4694, %v4695
      %v4697 = vsel %vm4576, %v4656, 0.0
      %v4698 = vadd.f32 %v4696, %v4697
      %v4699 = vsel %vm4576, %v4657, 0.0
      %v4700 = vadd.f32 %v4698, %v4699
      %v4701 = vsel %vm4576, %v4658, 0.0
      %v4702 = vadd.f32 %v4700, %v4701
      %v4703 = vsel %vm4576, %v4659, 0.0
      %v4704 = vadd.f32 %v4702, %v4703
      %v4705 = vsel %vm4576, %v4660, 0.0
      %v4706 = vadd.f32 %v4704, %v4705
      %v4707 = vsel %vm4576, %v4661, 0.0
      %v4708 = vadd.f32 %v4706, %v4707
      %v4709 = vsel %vm4576, %v4662, 0.0
      %v4710 = vadd.f32 %v4708, %v4709
      %v4711 = vsel %vm4576, %v4663, 0.0
      %v4712 = vadd.f32 %v4710, %v4711
      %v4713 = vsel %vm4576, %v4664, 0.0
      %v4714 = vadd.f32 %v4712, %v4713
      %v4715 = vsel %vm4576, %v4665, 0.0
      %v4716 = vadd.f32 %v4714, %v4715
      %v4717 = vsel %vm4576, %v4666, 0.0
      %v4718 = vadd.f32 %v4716, %v4717
      %v4719 = vsel %vm4576, %v4667, 0.0
      %v4720 = vadd.f32 %v4718, %v4719
      %v4721 = vsel %vm4576, %v4668, 0.0
      %v4722 = vadd.f32 %v4720, %v4721
      %v4723 = vsel %vm4576, %v4669, 0.0
      %v4724 = vadd.f32 %v4722, %v4723
      %v4725 = vsel %vm4576, %v4670, 0.0
      %v4726 = vadd.f32 %v4724, %v4725
      %v4727 = vsel %vm4576, %v4671, 0.0
      %v4728 = vadd.f32 %v4726, %v4727
      %v4729 = vsel %vm4576, %v4672, 0.0
      %v4730 = vadd.f32 %v4728, %v4729
      %v4731 = vsel %vm4576, %v4673, 0.0
      %v4732 = vadd.f32 %v4730, %v4731
      %v4733 = vsel %vm4576, %v4674, 0.0
      %v4734 = vadd.f32 %v4732, %v4733
      %v4735 = vsel %vm4576, %v4675, 0.0
      %v4736 = vadd.f32 %v4734, %v4735
      %v4737 = vsel %vm4576, %v4676, 0.0
      %v4738 = vadd.f32 %v4736, %v4737
      %v4739 = vsel %vm4576, %v4677, 0.0
      %v4740 = vadd.f32 %v4738, %v4739
      %v4741 = vrot.slane %v4740, 4
      %v4742 = vadd.f32 %v4740, %v4741
      %v4743 = vrot.slane %v4742, 2
      %v4744 = vadd.f32 %v4742, %v4743
      %v4745 = vrot.slane %v4744, 1
      %v4746 = vadd.f32 %v4744, %v4745
      %v4747 = vmul.f32 %v4645, 0.00390625
      %v4748 = vmul.f32 %v4746, 0.00390625
      %v4749 = vmul.f32 %v4747, %v4747
      %v4750 = vsub.f32 %v4748, %v4749
      %v4751 = vadd.f32 %v4750, 1e-05
      %v4752 = vrsqrt.pop %v4751
      %v4753 = vmul.f32 %v197, %v4752
      %v4754 = vmul.f32 %v4747, %v4753
      %v4755 = vsub.f32 %v198, %v4754
      %v4757 = vlaneseq
      %v4758 = vshrl.u32 %v4757, 7
      %v4759 = vsub.s32 0, %v4758
      %v4760 = vrot.slane %v4753, %v4759
      %v4762 = vmul.f32 %v4544, %v4760
      %v4763 = vmul.f32 %v4545, %v4760
      %v4764 = vmul.f32 %v4546, %v4760
      %v4765 = vmul.f32 %v4547, %v4760
      %v4766 = vmul.f32 %v4548, %v4760
      %v4767 = vmul.f32 %v4549, %v4760
      %v4768 = vmul.f32 %v4550, %v4760
      %v4769 = vmul.f32 %v4551, %v4760
      %v4770 = vmul.f32 %v4552, %v4760
      %v4771 = vmul.f32 %v4553, %v4760
      %v4772 = vmul.f32 %v4554, %v4760
      %v4773 = vmul.f32 %v4555, %v4760
      %v4774 = vmul.f32 %v4556, %v4760
      %v4775 = vmul.f32 %v4557, %v4760
      %v4776 = vmul.f32 %v4558, %v4760
      %v4777 = vmul.f32 %v4559, %v4760
      %v4778 = vmul.f32 %v4560, %v4760
      %v4779 = vmul.f32 %v4561, %v4760
      %v4780 = vmul.f32 %v4562, %v4760
      %v4781 = vmul.f32 %v4563, %v4760
      %v4782 = vmul.f32 %v4564, %v4760
      %v4783 = vmul.f32 %v4565, %v4760
      %v4784 = vmul.f32 %v4566, %v4760
      %v4785 = vmul.f32 %v4567, %v4760
      %v4786 = vmul.f32 %v4568, %v4760
      %v4787 = vmul.f32 %v4569, %v4760
      %v4788 = vmul.f32 %v4570, %v4760
      %v4789 = vmul.f32 %v4571, %v4760
      %v4790 = vmul.f32 %v4572, %v4760
      %v4791 = vmul.f32 %v4573, %v4760
      %v4792 = vmul.f32 %v4574, %v4760
      %v4793 = vmul.f32 %v4575, %v4760
      %v4795 = vlaneseq
      %v4796 = vshrl.u32 %v4795, 7
      %v4797 = vsub.s32 0, %v4796
      %v4798 = vrot.slane %v4755, %v4797
      %v4800 = vadd.f32 %v4762, %v4798
      %v4801 = vadd.f32 %v4763, %v4798
      %v4802 = vadd.f32 %v4764, %v4798
      %v4803 = vadd.f32 %v4765, %v4798
      %v4804 = vadd.f32 %v4766, %v4798
      %v4805 = vadd.f32 %v4767, %v4798
      %v4806 = vadd.f32 %v4768, %v4798
      %v4807 = vadd.f32 %v4769, %v4798
      %v4808 = vadd.f32 %v4770, %v4798
      %v4809 = vadd.f32 %v4771, %v4798
      %v4810 = vadd.f32 %v4772, %v4798
      %v4811 = vadd.f32 %v4773, %v4798
      %v4812 = vadd.f32 %v4774, %v4798
      %v4813 = vadd.f32 %v4775, %v4798
      %v4814 = vadd.f32 %v4776, %v4798
      %v4815 = vadd.f32 %v4777, %v4798
      %v4816 = vadd.f32 %v4778, %v4798
      %v4817 = vadd.f32 %v4779, %v4798
      %v4818 = vadd.f32 %v4780, %v4798
      %v4819 = vadd.f32 %v4781, %v4798
      %v4820 = vadd.f32 %v4782, %v4798
      %v4821 = vadd.f32 %v4783, %v4798
      %v4822 = vadd.f32 %v4784, %v4798
      %v4823 = vadd.f32 %v4785, %v4798
      %v4824 = vadd.f32 %v4786, %v4798
      %v4825 = vadd.f32 %v4787, %v4798
      %v4826 = vadd.f32 %v4788, %v4798
      %v4827 = vadd.f32 %v4789, %v4798
      %v4828 = vadd.f32 %v4790, %v4798
      %v4829 = vadd.f32 %v4791, %v4798
      %v4830 = vadd.f32 %v4792, %v4798
      %v4831 = vadd.f32 %v4793, %v4798
      %v4832 = vmax.f32 %v4800, 0.0
      %v4833 = vmax.f32 %v4801, 0.0
      %v4834 = vmax.f32 %v4802, 0.0
      %v4835 = vmax.f32 %v4803, 0.0
      %v4836 = vmax.f32 %v4804, 0.0
      %v4837 = vmax.f32 %v4805, 0.0
      %v4838 = vmax.f32 %v4806, 0.0
      %v4839 = vmax.f32 %v4807, 0.0
      %v4840 = vmax.f32 %v4808, 0.0
      %v4841 = vmax.f32 %v4809, 0.0
      %v4842 = vmax.f32 %v4810, 0.0
      %v4843 = vmax.f32 %v4811, 0.0
      %v4844 = vmax.f32 %v4812, 0.0
      %v4845 = vmax.f32 %v4813, 0.0
      %v4846 = vmax.f32 %v4814, 0.0
      %v4847 = vmax.f32 %v4815, 0.0
      %v4848 = vmax.f32 %v4816, 0.0
      %v4849 = vmax.f32 %v4817, 0.0
      %v4850 = vmax.f32 %v4818, 0.0
      %v4851 = vmax.f32 %v4819, 0.0
      %v4852 = vmax.f32 %v4820, 0.0
      %v4853 = vmax.f32 %v4821, 0.0
      %v4854 = vmax.f32 %v4822, 0.0
      %v4855 = vmax.f32 %v4823, 0.0
      %v4856 = vmax.f32 %v4824, 0.0
      %v4857 = vmax.f32 %v4825, 0.0
      %v4858 = vmax.f32 %v4826, 0.0
      %v4859 = vmax.f32 %v4827, 0.0
      %v4860 = vmax.f32 %v4828, 0.0
      %v4861 = vmax.f32 %v4829, 0.0
      %v4862 = vmax.f32 %v4830, 0.0
      %v4863 = vmax.f32 %v4831, 0.0
      %v4864 = vadd.f32 %v4832, %v4834
      %v4865 = vadd.f32 %v4833, %v4835
      %v4866 = vadd.f32 %v4836, %v4838
      %v4867 = vadd.f32 %v4837, %v4839
      %v4868 = vadd.f32 %v4840, %v4842
      %v4869 = vadd.f32 %v4841, %v4843
      %v4870 = vadd.f32 %v4844, %v4846
      %v4871 = vadd.f32 %v4845, %v4847
      %v4872 = vadd.f32 %v4848, %v4850
      %v4873 = vadd.f32 %v4849, %v4851
      %v4874 = vadd.f32 %v4852, %v4854
      %v4875 = vadd.f32 %v4853, %v4855
      %v4876 = vadd.f32 %v4856, %v4858
      %v4877 = vadd.f32 %v4857, %v4859
      %v4878 = vadd.f32 %v4860, %v4862
      %v4879 = vadd.f32 %v4861, %v4863
      %v4896 = vcombine.high %v4864, %v4864
      %v4898 = vunpack.c.l.s4 1983009808
      %v4899 = vunpack.c.0.s8 %v4898
      %v4900 = vlaneseq
      %v4901 = vshrl.u32 %v4900, 7
      %v4902 = vsub.s32 %v4899, %v4901
      %v4903 = vrot.slane %v4864, %v4902
      %v4905 = vunpack.c.l.s4 1983009808
      %v4906 = vunpack.c.0.s8 %v4905
      %v4907 = vlaneseq
      %v4908 = vshrl.u32 %v4907, 7
      %v4909 = vsub.s32 %v4906, %v4908
      %v4910 = vrot.slane %v4896, %v4909
      %v4911 = vcombine.high %v4903, %v4903
      %v4912 = vcombine.high %v4910, %v4910
      %v4913 = vcombine.high %v4865, %v4865
      %v4915 = vunpack.c.l.s4 1983009808
      %v4916 = vunpack.c.0.s8 %v4915
      %v4917 = vlaneseq
      %v4918 = vshrl.u32 %v4917, 7
      %v4919 = vsub.s32 %v4916, %v4918
      %v4920 = vrot.slane %v4865, %v4919
      %v4922 = vunpack.c.l.s4 1983009808
      %v4923 = vunpack.c.0.s8 %v4922
      %v4924 = vlaneseq
      %v4925 = vshrl.u32 %v4924, 7
      %v4926 = vsub.s32 %v4923, %v4925
      %v4927 = vrot.slane %v4913, %v4926
      %v4928 = vcombine.high %v4920, %v4920
      %v4929 = vcombine.high %v4927, %v4927
      %v4930 = vcombine.high %v4866, %v4866
      %v4932 = vunpack.c.l.s4 1983009808
      %v4933 = vunpack.c.0.s8 %v4932
      %v4934 = vlaneseq
      %v4935 = vshrl.u32 %v4934, 7
      %v4936 = vsub.s32 %v4933, %v4935
      %v4937 = vrot.slane %v4866, %v4936
      %v4939 = vunpack.c.l.s4 1983009808
      %v4940 = vunpack.c.0.s8 %v4939
      %v4941 = vlaneseq
      %v4942 = vshrl.u32 %v4941, 7
      %v4943 = vsub.s32 %v4940, %v4942
      %v4944 = vrot.slane %v4930, %v4943
      %v4945 = vcombine.high %v4937, %v4937
      %v4946 = vcombine.high %v4944, %v4944
      %v4947 = vcombine.high %v4867, %v4867
      %v4949 = vunpack.c.l.s4 1983009808
      %v4950 = vunpack.c.0.s8 %v4949
      %v4951 = vlaneseq
      %v4952 = vshrl.u32 %v4951, 7
      %v4953 = vsub.s32 %v4950, %v4952
      %v4954 = vrot.slane %v4867, %v4953
      %v4956 = vunpack.c.l.s4 1983009808
      %v4957 = vunpack.c.0.s8 %v4956
      %v4958 = vlaneseq
      %v4959 = vshrl.u32 %v4958, 7
      %v4960 = vsub.s32 %v4957, %v4959
      %v4961 = vrot.slane %v4947, %v4960
      %v4962 = vcombine.high %v4954, %v4954
      %v4963 = vcombine.high %v4961, %v4961
      %v4964 = vcombine.high %v4868, %v4868
      %v4966 = vunpack.c.l.s4 1983009808
      %v4967 = vunpack.c.0.s8 %v4966
      %v4968 = vlaneseq
      %v4969 = vshrl.u32 %v4968, 7
      %v4970 = vsub.s32 %v4967, %v4969
      %v4971 = vrot.slane %v4868, %v4970
      %v4973 = vunpack.c.l.s4 1983009808
      %v4974 = vunpack.c.0.s8 %v4973
      %v4975 = vlaneseq
      %v4976 = vshrl.u32 %v4975, 7
      %v4977 = vsub.s32 %v4974, %v4976
      %v4978 = vrot.slane %v4964, %v4977
      %v4979 = vcombine.high %v4971, %v4971
      %v4980 = vcombine.high %v4978, %v4978
      %v4981 = vcombine.high %v4869, %v4869
      %v4983 = vunpack.c.l.s4 1983009808
      %v4984 = vunpack.c.0.s8 %v4983
      %v4985 = vlaneseq
      %v4986 = vshrl.u32 %v4985, 7
      %v4987 = vsub.s32 %v4984, %v4986
      %v4988 = vrot.slane %v4869, %v4987
      %v4990 = vunpack.c.l.s4 1983009808
      %v4991 = vunpack.c.0.s8 %v4990
      %v4992 = vlaneseq
      %v4993 = vshrl.u32 %v4992, 7
      %v4994 = vsub.s32 %v4991, %v4993
      %v4995 = vrot.slane %v4981, %v4994
      %v4996 = vcombine.high %v4988, %v4988
      %v4997 = vcombine.high %v4995, %v4995
      %v4998 = vcombine.high %v4870, %v4870
      %v5000 = vunpack.c.l.s4 1983009808
      %v5001 = vunpack.c.0.s8 %v5000
      %v5002 = vlaneseq
      %v5003 = vshrl.u32 %v5002, 7
      %v5004 = vsub.s32 %v5001, %v5003
      %v5005 = vrot.slane %v4870, %v5004
      %v5007 = vunpack.c.l.s4 1983009808
      %v5008 = vunpack.c.0.s8 %v5007
      %v5009 = vlaneseq
      %v5010 = vshrl.u32 %v5009, 7
      %v5011 = vsub.s32 %v5008, %v5010
      %v5012 = vrot.slane %v4998, %v5011
      %v5013 = vcombine.high %v5005, %v5005
      %v5014 = vcombine.high %v5012, %v5012
      %v5015 = vcombine.high %v4871, %v4871
      %v5017 = vunpack.c.l.s4 1983009808
      %v5018 = vunpack.c.0.s8 %v5017
      %v5019 = vlaneseq
      %v5020 = vshrl.u32 %v5019, 7
      %v5021 = vsub.s32 %v5018, %v5020
      %v5022 = vrot.slane %v4871, %v5021
      %v5024 = vunpack.c.l.s4 1983009808
      %v5025 = vunpack.c.0.s8 %v5024
      %v5026 = vlaneseq
      %v5027 = vshrl.u32 %v5026, 7
      %v5028 = vsub.s32 %v5025, %v5027
      %v5029 = vrot.slane %v5015, %v5028
      %v5030 = vcombine.high %v5022, %v5022
      %v5031 = vcombine.high %v5029, %v5029
      %v5032 = vcombine.high %v4872, %v4872
      %v5034 = vunpack.c.l.s4 1983009808
      %v5035 = vunpack.c.0.s8 %v5034
      %v5036 = vlaneseq
      %v5037 = vshrl.u32 %v5036, 7
      %v5038 = vsub.s32 %v5035, %v5037
      %v5039 = vrot.slane %v4872, %v5038
      %v5041 = vunpack.c.l.s4 1983009808
      %v5042 = vunpack.c.0.s8 %v5041
      %v5043 = vlaneseq
      %v5044 = vshrl.u32 %v5043, 7
      %v5045 = vsub.s32 %v5042, %v5044
      %v5046 = vrot.slane %v5032, %v5045
      %v5047 = vcombine.high %v5039, %v5039
      %v5048 = vcombine.high %v5046, %v5046
      %v5049 = vcombine.high %v4873, %v4873
      %v5051 = vunpack.c.l.s4 1983009808
      %v5052 = vunpack.c.0.s8 %v5051
      %v5053 = vlaneseq
      %v5054 = vshrl.u32 %v5053, 7
      %v5055 = vsub.s32 %v5052, %v5054
      %v5056 = vrot.slane %v4873, %v5055
      %v5058 = vunpack.c.l.s4 1983009808
      %v5059 = vunpack.c.0.s8 %v5058
      %v5060 = vlaneseq
      %v5061 = vshrl.u32 %v5060, 7
      %v5062 = vsub.s32 %v5059, %v5061
      %v5063 = vrot.slane %v5049, %v5062
      %v5064 = vcombine.high %v5056, %v5056
      %v5065 = vcombine.high %v5063, %v5063
      %v5066 = vcombine.high %v4874, %v4874
      %v5068 = vunpack.c.l.s4 1983009808
      %v5069 = vunpack.c.0.s8 %v5068
      %v5070 = vlaneseq
      %v5071 = vshrl.u32 %v5070, 7
      %v5072 = vsub.s32 %v5069, %v5071
      %v5073 = vrot.slane %v4874, %v5072
      %v5075 = vunpack.c.l.s4 1983009808
      %v5076 = vunpack.c.0.s8 %v5075
      %v5077 = vlaneseq
      %v5078 = vshrl.u32 %v5077, 7
      %v5079 = vsub.s32 %v5076, %v5078
      %v5080 = vrot.slane %v5066, %v5079
      %v5081 = vcombine.high %v5073, %v5073
      %v5082 = vcombine.high %v5080, %v5080
      %v5083 = vcombine.high %v4875, %v4875
      %v5085 = vunpack.c.l.s4 1983009808
      %v5086 = vunpack.c.0.s8 %v5085
      %v5087 = vlaneseq
      %v5088 = vshrl.u32 %v5087, 7
      %v5089 = vsub.s32 %v5086, %v5088
      %v5090 = vrot.slane %v4875, %v5089
      %v5092 = vunpack.c.l.s4 1983009808
      %v5093 = vunpack.c.0.s8 %v5092
      %v5094 = vlaneseq
      %v5095 = vshrl.u32 %v5094, 7
      %v5096 = vsub.s32 %v5093, %v5095
      %v5097 = vrot.slane %v5083, %v5096
      %v5098 = vcombine.high %v5090, %v5090
      %v5099 = vcombine.high %v5097, %v5097
      %v5100 = vcombine.high %v4876, %v4876
      %v5102 = vunpack.c.l.s4 1983009808
      %v5103 = vunpack.c.0.s8 %v5102
      %v5104 = vlaneseq
      %v5105 = vshrl.u32 %v5104, 7
      %v5106 = vsub.s32 %v5103, %v5105
      %v5107 = vrot.slane %v4876, %v5106
      %v5109 = vunpack.c.l.s4 1983009808
      %v5110 = vunpack.c.0.s8 %v5109
      %v5111 = vlaneseq
      %v5112 = vshrl.u32 %v5111, 7
      %v5113 = vsub.s32 %v5110, %v5112
      %v5114 = vrot.slane %v5100, %v5113
      %v5115 = vcombine.high %v5107, %v5107
      %v5116 = vcombine.high %v5114, %v5114
      %v5117 = vcombine.high %v4877, %v4877
      %v5119 = vunpack.c.l.s4 1983009808
      %v5120 = vunpack.c.0.s8 %v5119
      %v5121 = vlaneseq
      %v5122 = vshrl.u32 %v5121, 7
      %v5123 = vsub.s32 %v5120, %v5122
      %v5124 = vrot.slane %v4877, %v5123
      %v5126 = vunpack.c.l.s4 1983009808
      %v5127 = vunpack.c.0.s8 %v5126
      %v5128 = vlaneseq
      %v5129 = vshrl.u32 %v5128, 7
      %v5130 = vsub.s32 %v5127, %v5129
      %v5131 = vrot.slane %v5117, %v5130
      %v5132 = vcombine.high %v5124, %v5124
      %v5133 = vcombine.high %v5131, %v5131
      %v5134 = vcombine.high %v4878, %v4878
      %v5136 = vunpack.c.l.s4 1983009808
      %v5137 = vunpack.c.0.s8 %v5136
      %v5138 = vlaneseq
      %v5139 = vshrl.u32 %v5138, 7
      %v5140 = vsub.s32 %v5137, %v5139
      %v5141 = vrot.slane %v4878, %v5140
      %v5143 = vunpack.c.l.s4 1983009808
      %v5144 = vunpack.c.0.s8 %v5143
      %v5145 = vlaneseq
      %v5146 = vshrl.u32 %v5145, 7
      %v5147 = vsub.s32 %v5144, %v5146
      %v5148 = vrot.slane %v5134, %v5147
      %v5149 = vcombine.high %v5141, %v5141
      %v5150 = vcombine.high %v5148, %v5148
      %v5151 = vcombine.high %v4879, %v4879
      %v5153 = vunpack.c.l.s4 1983009808
      %v5154 = vunpack.c.0.s8 %v5153
      %v5155 = vlaneseq
      %v5156 = vshrl.u32 %v5155, 7
      %v5157 = vsub.s32 %v5154, %v5156
      %v5158 = vrot.slane %v4879, %v5157
      %v5160 = vunpack.c.l.s4 1983009808
      %v5161 = vunpack.c.0.s8 %v5160
      %v5162 = vlaneseq
      %v5163 = vshrl.u32 %v5162, 7
      %v5164 = vsub.s32 %v5161, %v5163
      %v5165 = vrot.slane %v5151, %v5164
      %v5166 = vcombine.high %v5158, %v5158
      %v5167 = vcombine.high %v5165, %v5165
      %v5232 = vrot.slane %v4903, 7
      %v5233 = vrot.slane %v5232, 2
      %v5234 = vrot.slane %v4911, 7
      %v5235 = vrot.slane %v5234, 2
      %v5236 = vrot.slane %v4910, 7
      %v5237 = vrot.slane %v5236, 2
      %v5238 = vrot.slane %v4912, 7
      %v5239 = vrot.slane %v5238, 2
      %v5240 = vrot.slane %v4920, 7
      %v5241 = vrot.slane %v5240, 2
      %v5242 = vrot.slane %v4928, 7
      %v5243 = vrot.slane %v5242, 2
      %v5244 = vrot.slane %v4927, 7
      %v5245 = vrot.slane %v5244, 2
      %v5246 = vrot.slane %v4929, 7
      %v5247 = vrot.slane %v5246, 2
      %v5248 = vrot.slane %v4937, 7
      %v5249 = vrot.slane %v5248, 2
      %v5250 = vrot.slane %v4945, 7
      %v5251 = vrot.slane %v5250, 2
      %v5252 = vrot.slane %v4944, 7
      %v5253 = vrot.slane %v5252, 2
      %v5254 = vrot.slane %v4946, 7
      %v5255 = vrot.slane %v5254, 2
      %v5256 = vrot.slane %v4954, 7
      %v5257 = vrot.slane %v5256, 2
      %v5258 = vrot.slane %v4962, 7
      %v5259 = vrot.slane %v5258, 2
      %v5260 = vrot.slane %v4961, 7
      %v5261 = vrot.slane %v5260, 2
      %v5262 = vrot.slane %v4963, 7
      %v5263 = vrot.slane %v5262, 2
      %v5264 = vrot.slane %v4971, 7
      %v5265 = vrot.slane %v5264, 2
      %v5266 = vrot.slane %v4979, 7
      %v5267 = vrot.slane %v5266, 2
      %v5268 = vrot.slane %v4978, 7
      %v5269 = vrot.slane %v5268, 2
      %v5270 = vrot.slane %v4980, 7
      %v5271 = vrot.slane %v5270, 2
      %v5272 = vrot.slane %v4988, 7
      %v5273 = vrot.slane %v5272, 2
      %v5274 = vrot.slane %v4996, 7
      %v5275 = vrot.slane %v5274, 2
      %v5276 = vrot.slane %v4995, 7
      %v5277 = vrot.slane %v5276, 2
      %v5278 = vrot.slane %v4997, 7
      %v5279 = vrot.slane %v5278, 2
      %v5280 = vrot.slane %v5005, 7
      %v5281 = vrot.slane %v5280, 2
      %v5282 = vrot.slane %v5013, 7
      %v5283 = vrot.slane %v5282, 2
      %v5284 = vrot.slane %v5012, 7
      %v5285 = vrot.slane %v5284, 2
      %v5286 = vrot.slane %v5014, 7
      %v5287 = vrot.slane %v5286, 2
      %v5288 = vrot.slane %v5022, 7
      %v5289 = vrot.slane %v5288, 2
      %v5290 = vrot.slane %v5030, 7
      %v5291 = vrot.slane %v5290, 2
      %v5292 = vrot.slane %v5029, 7
      %v5293 = vrot.slane %v5292, 2
      %v5294 = vrot.slane %v5031, 7
      %v5295 = vrot.slane %v5294, 2
      %v5296 = vrot.slane %v5039, 7
      %v5297 = vrot.slane %v5296, 2
      %v5298 = vrot.slane %v5047, 7
      %v5299 = vrot.slane %v5298, 2
      %v5300 = vrot.slane %v5046, 7
      %v5301 = vrot.slane %v5300, 2
      %v5302 = vrot.slane %v5048, 7
      %v5303 = vrot.slane %v5302, 2
      %v5304 = vrot.slane %v5056, 7
      %v5305 = vrot.slane %v5304, 2
      %v5306 = vrot.slane %v5064, 7
      %v5307 = vrot.slane %v5306, 2
      %v5308 = vrot.slane %v5063, 7
      %v5309 = vrot.slane %v5308, 2
      %v5310 = vrot.slane %v5065, 7
      %v5311 = vrot.slane %v5310, 2
      %v5312 = vrot.slane %v5073, 7
      %v5313 = vrot.slane %v5312, 2
      %v5314 = vrot.slane %v5081, 7
      %v5315 = vrot.slane %v5314, 2
      %v5316 = vrot.slane %v5080, 7
      %v5317 = vrot.slane %v5316, 2
      %v5318 = vrot.slane %v5082, 7
      %v5319 = vrot.slane %v5318, 2
      %v5320 = vrot.slane %v5090, 7
      %v5321 = vrot.slane %v5320, 2
      %v5322 = vrot.slane %v5098, 7
      %v5323 = vrot.slane %v5322, 2
      %v5324 = vrot.slane %v5097, 7
      %v5325 = vrot.slane %v5324, 2
      %v5326 = vrot.slane %v5099, 7
      %v5327 = vrot.slane %v5326, 2
      %v5328 = vrot.slane %v5107, 7
      %v5329 = vrot.slane %v5328, 2
      %v5330 = vrot.slane %v5115, 7
      %v5331 = vrot.slane %v5330, 2
      %v5332 = vrot.slane %v5114, 7
      %v5333 = vrot.slane %v5332, 2
      %v5334 = vrot.slane %v5116, 7
      %v5335 = vrot.slane %v5334, 2
      %v5336 = vrot.slane %v5124, 7
      %v5337 = vrot.slane %v5336, 2
      %v5338 = vrot.slane %v5132, 7
      %v5339 = vrot.slane %v5338, 2
      %v5340 = vrot.slane %v5131, 7
      %v5341 = vrot.slane %v5340, 2
      %v5342 = vrot.slane %v5133, 7
      %v5343 = vrot.slane %v5342, 2
      %v5344 = vrot.slane %v5141, 7
      %v5345 = vrot.slane %v5344, 2
      %v5346 = vrot.slane %v5149, 7
      %v5347 = vrot.slane %v5346, 2
      %v5348 = vrot.slane %v5148, 7
      %v5349 = vrot.slane %v5348, 2
      %v5350 = vrot.slane %v5150, 7
      %v5351 = vrot.slane %v5350, 2
      %v5352 = vrot.slane %v5158, 7
      %v5353 = vrot.slane %v5352, 2
      %v5354 = vrot.slane %v5166, 7
      %v5355 = vrot.slane %v5354, 2
      %v5356 = vrot.slane %v5165, 7
      %v5357 = vrot.slane %v5356, 2
      %v5358 = vrot.slane %v5167, 7
      %v5359 = vrot.slane %v5358, 2
      %v5424 = vadd.f32 %v4903, %v5233
      %v5425 = vadd.f32 %v4911, %v5235
      %v5426 = vadd.f32 %v4910, %v5237
      %v5427 = vadd.f32 %v4912, %v5239
      %v5428 = vadd.f32 %v4920, %v5241
      %v5429 = vadd.f32 %v4928, %v5243
      %v5430 = vadd.f32 %v4927, %v5245
      %v5431 = vadd.f32 %v4929, %v5247
      %v5432 = vadd.f32 %v4937, %v5249
      %v5433 = vadd.f32 %v4945, %v5251
      %v5434 = vadd.f32 %v4944, %v5253
      %v5435 = vadd.f32 %v4946, %v5255
      %v5436 = vadd.f32 %v4954, %v5257
      %v5437 = vadd.f32 %v4962, %v5259
      %v5438 = vadd.f32 %v4961, %v5261
      %v5439 = vadd.f32 %v4963, %v5263
      %v5440 = vadd.f32 %v4971, %v5265
      %v5441 = vadd.f32 %v4979, %v5267
      %v5442 = vadd.f32 %v4978, %v5269
      %v5443 = vadd.f32 %v4980, %v5271
      %v5444 = vadd.f32 %v4988, %v5273
      %v5445 = vadd.f32 %v4996, %v5275
      %v5446 = vadd.f32 %v4995, %v5277
      %v5447 = vadd.f32 %v4997, %v5279
      %v5448 = vadd.f32 %v5005, %v5281
      %v5449 = vadd.f32 %v5013, %v5283
      %v5450 = vadd.f32 %v5012, %v5285
      %v5451 = vadd.f32 %v5014, %v5287
      %v5452 = vadd.f32 %v5022, %v5289
      %v5453 = vadd.f32 %v5030, %v5291
      %v5454 = vadd.f32 %v5029, %v5293
      %v5455 = vadd.f32 %v5031, %v5295
      %v5456 = vadd.f32 %v5039, %v5297
      %v5457 = vadd.f32 %v5047, %v5299
      %v5458 = vadd.f32 %v5046, %v5301
      %v5459 = vadd.f32 %v5048, %v5303
      %v5460 = vadd.f32 %v5056, %v5305
      %v5461 = vadd.f32 %v5064, %v5307
      %v5462 = vadd.f32 %v5063, %v5309
      %v5463 = vadd.f32 %v5065, %v5311
      %v5464 = vadd.f32 %v5073, %v5313
      %v5465 = vadd.f32 %v5081, %v5315
      %v5466 = vadd.f32 %v5080, %v5317
      %v5467 = vadd.f32 %v5082, %v5319
      %v5468 = vadd.f32 %v5090, %v5321
      %v5469 = vadd.f32 %v5098, %v5323
      %v5470 = vadd.f32 %v5097, %v5325
      %v5471 = vadd.f32 %v5099, %v5327
      %v5472 = vadd.f32 %v5107, %v5329
      %v5473 = vadd.f32 %v5115, %v5331
      %v5474 = vadd.f32 %v5114, %v5333
      %v5475 = vadd.f32 %v5116, %v5335
      %v5476 = vadd.f32 %v5124, %v5337
      %v5477 = vadd.f32 %v5132, %v5339
      %v5478 = vadd.f32 %v5131, %v5341
      %v5479 = vadd.f32 %v5133, %v5343
      %v5480 = vadd.f32 %v5141, %v5345
      %v5481 = vadd.f32 %v5149, %v5347
      %v5482 = vadd.f32 %v5148, %v5349
      %v5483 = vadd.f32 %v5150, %v5351
      %v5484 = vadd.f32 %v5158, %v5353
      %v5485 = vadd.f32 %v5166, %v5355
      %v5486 = vadd.f32 %v5165, %v5357
      %v5487 = vadd.f32 %v5167, %v5359
      %v5488 = vmul.f32 %v5424, 0.25
      %v5489 = vmul.f32 %v5425, 0.25
      %v5490 = vmul.f32 %v5426, 0.25
      %v5491 = vmul.f32 %v5427, 0.25
      %v5492 = vmul.f32 %v5428, 0.25
      %v5493 = vmul.f32 %v5429, 0.25
      %v5494 = vmul.f32 %v5430, 0.25
      %v5495 = vmul.f32 %v5431, 0.25
      %v5496 = vmul.f32 %v5432, 0.25
      %v5497 = vmul.f32 %v5433, 0.25
      %v5498 = vmul.f32 %v5434, 0.25
      %v5499 = vmul.f32 %v5435, 0.25
      %v5500 = vmul.f32 %v5436, 0.25
      %v5501 = vmul.f32 %v5437, 0.25
      %v5502 = vmul.f32 %v5438, 0.25
      %v5503 = vmul.f32 %v5439, 0.25
      %v5504 = vmul.f32 %v5440, 0.25
      %v5505 = vmul.f32 %v5441, 0.25
      %v5506 = vmul.f32 %v5442, 0.25
      %v5507 = vmul.f32 %v5443, 0.25
      %v5508 = vmul.f32 %v5444, 0.25
      %v5509 = vmul.f32 %v5445, 0.25
      %v5510 = vmul.f32 %v5446, 0.25
      %v5511 = vmul.f32 %v5447, 0.25
      %v5512 = vmul.f32 %v5448, 0.25
      %v5513 = vmul.f32 %v5449, 0.25
      %v5514 = vmul.f32 %v5450, 0.25
      %v5515 = vmul.f32 %v5451, 0.25
      %v5516 = vmul.f32 %v5452, 0.25
      %v5517 = vmul.f32 %v5453, 0.25
      %v5518 = vmul.f32 %v5454, 0.25
      %v5519 = vmul.f32 %v5455, 0.25
      %v5520 = vmul.f32 %v5456, 0.25
      %v5521 = vmul.f32 %v5457, 0.25
      %v5522 = vmul.f32 %v5458, 0.25
      %v5523 = vmul.f32 %v5459, 0.25
      %v5524 = vmul.f32 %v5460, 0.25
      %v5525 = vmul.f32 %v5461, 0.25
      %v5526 = vmul.f32 %v5462, 0.25
      %v5527 = vmul.f32 %v5463, 0.25
      %v5528 = vmul.f32 %v5464, 0.25
      %v5529 = vmul.f32 %v5465, 0.25
      %v5530 = vmul.f32 %v5466, 0.25
      %v5531 = vmul.f32 %v5467, 0.25
      %v5532 = vmul.f32 %v5468, 0.25
      %v5533 = vmul.f32 %v5469, 0.25
      %v5534 = vmul.f32 %v5470, 0.25
      %v5535 = vmul.f32 %v5471, 0.25
      %v5536 = vmul.f32 %v5472, 0.25
      %v5537 = vmul.f32 %v5473, 0.25
      %v5538 = vmul.f32 %v5474, 0.25
      %v5539 = vmul.f32 %v5475, 0.25
      %v5540 = vmul.f32 %v5476, 0.25
      %v5541 = vmul.f32 %v5477, 0.25
      %v5542 = vmul.f32 %v5478, 0.25
      %v5543 = vmul.f32 %v5479, 0.25
      %v5544 = vmul.f32 %v5480, 0.25
      %v5545 = vmul.f32 %v5481, 0.25
      %v5546 = vmul.f32 %v5482, 0.25
      %v5547 = vmul.f32 %v5483, 0.25
      %v5548 = vmul.f32 %v5484, 0.25
      %v5549 = vmul.f32 %v5485, 0.25
      %v5550 = vmul.f32 %v5486, 0.25
      %v5551 = vmul.f32 %v5487, 0.25
      %vm5616 = vcmask 1044484
      %v5617 = vsel %vm5616, %v5488, %v5488
      %vm5618 = vcmask 1046534
      %v5619 = vsel %vm5618, %v5488, %v5617
      %v5620 = vrot.slane %v5489, 7
      %vm5621 = vcmask 1041409
      %v5622 = vsel %vm5621, %v5620, %v5619
      %vm5623 = vcmask 1043459
      %v5624 = vsel %vm5623, %v5620, %v5622
      %vm5625 = vcmask 1045509
      %v5626 = vsel %vm5625, %v5620, %v5624
      %vm5627 = vcmask 1047559
      %v5628 = vsel %vm5627, %v5620, %v5626
      %v5629 = vsel %vm5616, %v5490, %v5490
      %v5630 = vsel %vm5618, %v5490, %v5629
      %v5631 = vrot.slane %v5491, 7
      %v5632 = vsel %vm5621, %v5631, %v5630
      %v5633 = vsel %vm5623, %v5631, %v5632
      %v5634 = vsel %vm5625, %v5631, %v5633
      %v5635 = vsel %vm5627, %v5631, %v5634
      %v5636 = vsel %vm5616, %v5492, %v5492
      %v5637 = vsel %vm5618, %v5492, %v5636
      %v5638 = vrot.slane %v5493, 7
      %v5639 = vsel %vm5621, %v5638, %v5637
      %v5640 = vsel %vm5623, %v5638, %v5639
      %v5641 = vsel %vm5625, %v5638, %v5640
      %v5642 = vsel %vm5627, %v5638, %v5641
      %v5643 = vsel %vm5616, %v5494, %v5494
      %v5644 = vsel %vm5618, %v5494, %v5643
      %v5645 = vrot.slane %v5495, 7
      %v5646 = vsel %vm5621, %v5645, %v5644
      %v5647 = vsel %vm5623, %v5645, %v5646
      %v5648 = vsel %vm5625, %v5645, %v5647
      %v5649 = vsel %vm5627, %v5645, %v5648
      %v5650 = vsel %vm5616, %v5496, %v5496
      %v5651 = vsel %vm5618, %v5496, %v5650
      %v5652 = vrot.slane %v5497, 7
      %v5653 = vsel %vm5621, %v5652, %v5651
      %v5654 = vsel %vm5623, %v5652, %v5653
      %v5655 = vsel %vm5625, %v5652, %v5654
      %v5656 = vsel %vm5627, %v5652, %v5655
      %v5657 = vsel %vm5616, %v5498, %v5498
      %v5658 = vsel %vm5618, %v5498, %v5657
      %v5659 = vrot.slane %v5499, 7
      %v5660 = vsel %vm5621, %v5659, %v5658
      %v5661 = vsel %vm5623, %v5659, %v5660
      %v5662 = vsel %vm5625, %v5659, %v5661
      %v5663 = vsel %vm5627, %v5659, %v5662
      %v5664 = vsel %vm5616, %v5500, %v5500
      %v5665 = vsel %vm5618, %v5500, %v5664
      %v5666 = vrot.slane %v5501, 7
      %v5667 = vsel %vm5621, %v5666, %v5665
      %v5668 = vsel %vm5623, %v5666, %v5667
      %v5669 = vsel %vm5625, %v5666, %v5668
      %v5670 = vsel %vm5627, %v5666, %v5669
      %v5671 = vsel %vm5616, %v5502, %v5502
      %v5672 = vsel %vm5618, %v5502, %v5671
      %v5673 = vrot.slane %v5503, 7
      %v5674 = vsel %vm5621, %v5673, %v5672
      %v5675 = vsel %vm5623, %v5673, %v5674
      %v5676 = vsel %vm5625, %v5673, %v5675
      %v5677 = vsel %vm5627, %v5673, %v5676
      %v5678 = vsel %vm5616, %v5504, %v5504
      %v5679 = vsel %vm5618, %v5504, %v5678
      %v5680 = vrot.slane %v5505, 7
      %v5681 = vsel %vm5621, %v5680, %v5679
      %v5682 = vsel %vm5623, %v5680, %v5681
      %v5683 = vsel %vm5625, %v5680, %v5682
      %v5684 = vsel %vm5627, %v5680, %v5683
      %v5685 = vsel %vm5616, %v5506, %v5506
      %v5686 = vsel %vm5618, %v5506, %v5685
      %v5687 = vrot.slane %v5507, 7
      %v5688 = vsel %vm5621, %v5687, %v5686
      %v5689 = vsel %vm5623, %v5687, %v5688
      %v5690 = vsel %vm5625, %v5687, %v5689
      %v5691 = vsel %vm5627, %v5687, %v5690
      %v5692 = vsel %vm5616, %v5508, %v5508
      %v5693 = vsel %vm5618, %v5508, %v5692
      %v5694 = vrot.slane %v5509, 7
      %v5695 = vsel %vm5621, %v5694, %v5693
      %v5696 = vsel %vm5623, %v5694, %v5695
      %v5697 = vsel %vm5625, %v5694, %v5696
      %v5698 = vsel %vm5627, %v5694, %v5697
      %v5699 = vsel %vm5616, %v5510, %v5510
      %v5700 = vsel %vm5618, %v5510, %v5699
      %v5701 = vrot.slane %v5511, 7
      %v5702 = vsel %vm5621, %v5701, %v5700
      %v5703 = vsel %vm5623, %v5701, %v5702
      %v5704 = vsel %vm5625, %v5701, %v5703
      %v5705 = vsel %vm5627, %v5701, %v5704
      %v5706 = vsel %vm5616, %v5512, %v5512
      %v5707 = vsel %vm5618, %v5512, %v5706
      %v5708 = vrot.slane %v5513, 7
      %v5709 = vsel %vm5621, %v5708, %v5707
      %v5710 = vsel %vm5623, %v5708, %v5709
      %v5711 = vsel %vm5625, %v5708, %v5710
      %v5712 = vsel %vm5627, %v5708, %v5711
      %v5713 = vsel %vm5616, %v5514, %v5514
      %v5714 = vsel %vm5618, %v5514, %v5713
      %v5715 = vrot.slane %v5515, 7
      %v5716 = vsel %vm5621, %v5715, %v5714
      %v5717 = vsel %vm5623, %v5715, %v5716
      %v5718 = vsel %vm5625, %v5715, %v5717
      %v5719 = vsel %vm5627, %v5715, %v5718
      %v5720 = vsel %vm5616, %v5516, %v5516
      %v5721 = vsel %vm5618, %v5516, %v5720
      %v5722 = vrot.slane %v5517, 7
      %v5723 = vsel %vm5621, %v5722, %v5721
      %v5724 = vsel %vm5623, %v5722, %v5723
      %v5725 = vsel %vm5625, %v5722, %v5724
      %v5726 = vsel %vm5627, %v5722, %v5725
      %v5727 = vsel %vm5616, %v5518, %v5518
      %v5728 = vsel %vm5618, %v5518, %v5727
      %v5729 = vrot.slane %v5519, 7
      %v5730 = vsel %vm5621, %v5729, %v5728
      %v5731 = vsel %vm5623, %v5729, %v5730
      %v5732 = vsel %vm5625, %v5729, %v5731
      %v5733 = vsel %vm5627, %v5729, %v5732
      %v5734 = vsel %vm5616, %v5520, %v5520
      %v5735 = vsel %vm5618, %v5520, %v5734
      %v5736 = vrot.slane %v5521, 7
      %v5737 = vsel %vm5621, %v5736, %v5735
      %v5738 = vsel %vm5623, %v5736, %v5737
      %v5739 = vsel %vm5625, %v5736, %v5738
      %v5740 = vsel %vm5627, %v5736, %v5739
      %v5741 = vsel %vm5616, %v5522, %v5522
      %v5742 = vsel %vm5618, %v5522, %v5741
      %v5743 = vrot.slane %v5523, 7
      %v5744 = vsel %vm5621, %v5743, %v5742
      %v5745 = vsel %vm5623, %v5743, %v5744
      %v5746 = vsel %vm5625, %v5743, %v5745
      %v5747 = vsel %vm5627, %v5743, %v5746
      %v5748 = vsel %vm5616, %v5524, %v5524
      %v5749 = vsel %vm5618, %v5524, %v5748
      %v5750 = vrot.slane %v5525, 7
      %v5751 = vsel %vm5621, %v5750, %v5749
      %v5752 = vsel %vm5623, %v5750, %v5751
      %v5753 = vsel %vm5625, %v5750, %v5752
      %v5754 = vsel %vm5627, %v5750, %v5753
      %v5755 = vsel %vm5616, %v5526, %v5526
      %v5756 = vsel %vm5618, %v5526, %v5755
      %v5757 = vrot.slane %v5527, 7
      %v5758 = vsel %vm5621, %v5757, %v5756
      %v5759 = vsel %vm5623, %v5757, %v5758
      %v5760 = vsel %vm5625, %v5757, %v5759
      %v5761 = vsel %vm5627, %v5757, %v5760
      %v5762 = vsel %vm5616, %v5528, %v5528
      %v5763 = vsel %vm5618, %v5528, %v5762
      %v5764 = vrot.slane %v5529, 7
      %v5765 = vsel %vm5621, %v5764, %v5763
      %v5766 = vsel %vm5623, %v5764, %v5765
      %v5767 = vsel %vm5625, %v5764, %v5766
      %v5768 = vsel %vm5627, %v5764, %v5767
      %v5769 = vsel %vm5616, %v5530, %v5530
      %v5770 = vsel %vm5618, %v5530, %v5769
      %v5771 = vrot.slane %v5531, 7
      %v5772 = vsel %vm5621, %v5771, %v5770
      %v5773 = vsel %vm5623, %v5771, %v5772
      %v5774 = vsel %vm5625, %v5771, %v5773
      %v5775 = vsel %vm5627, %v5771, %v5774
      %v5776 = vsel %vm5616, %v5532, %v5532
      %v5777 = vsel %vm5618, %v5532, %v5776
      %v5778 = vrot.slane %v5533, 7
      %v5779 = vsel %vm5621, %v5778, %v5777
      %v5780 = vsel %vm5623, %v5778, %v5779
      %v5781 = vsel %vm5625, %v5778, %v5780
      %v5782 = vsel %vm5627, %v5778, %v5781
      %v5783 = vsel %vm5616, %v5534, %v5534
      %v5784 = vsel %vm5618, %v5534, %v5783
      %v5785 = vrot.slane %v5535, 7
      %v5786 = vsel %vm5621, %v5785, %v5784
      %v5787 = vsel %vm5623, %v5785, %v5786
      %v5788 = vsel %vm5625, %v5785, %v5787
      %v5789 = vsel %vm5627, %v5785, %v5788
      %v5790 = vsel %vm5616, %v5536, %v5536
      %v5791 = vsel %vm5618, %v5536, %v5790
      %v5792 = vrot.slane %v5537, 7
      %v5793 = vsel %vm5621, %v5792, %v5791
      %v5794 = vsel %vm5623, %v5792, %v5793
      %v5795 = vsel %vm5625, %v5792, %v5794
      %v5796 = vsel %vm5627, %v5792, %v5795
      %v5797 = vsel %vm5616, %v5538, %v5538
      %v5798 = vsel %vm5618, %v5538, %v5797
      %v5799 = vrot.slane %v5539, 7
      %v5800 = vsel %vm5621, %v5799, %v5798
      %v5801 = vsel %vm5623, %v5799, %v5800
      %v5802 = vsel %vm5625, %v5799, %v5801
      %v5803 = vsel %vm5627, %v5799, %v5802
      %v5804 = vsel %vm5616, %v5540, %v5540
      %v5805 = vsel %vm5618, %v5540, %v5804
      %v5806 = vrot.slane %v5541, 7
      %v5807 = vsel %vm5621, %v5806, %v5805
      %v5808 = vsel %vm5623, %v5806, %v5807
      %v5809 = vsel %vm5625, %v5806, %v5808
      %v5810 = vsel %vm5627, %v5806, %v5809
      %v5811 = vsel %vm5616, %v5542, %v5542
      %v5812 = vsel %vm5618, %v5542, %v5811
      %v5813 = vrot.slane %v5543, 7
      %v5814 = vsel %vm5621, %v5813, %v5812
      %v5815 = vsel %vm5623, %v5813, %v5814
      %v5816 = vsel %vm5625, %v5813, %v5815
      %v5817 = vsel %vm5627, %v5813, %v5816
      %v5818 = vsel %vm5616, %v5544, %v5544
      %v5819 = vsel %vm5618, %v5544, %v5818
      %v5820 = vrot.slane %v5545, 7
      %v5821 = vsel %vm5621, %v5820, %v5819
      %v5822 = vsel %vm5623, %v5820, %v5821
      %v5823 = vsel %vm5625, %v5820, %v5822
      %v5824 = vsel %vm5627, %v5820, %v5823
      %v5825 = vsel %vm5616, %v5546, %v5546
      %v5826 = vsel %vm5618, %v5546, %v5825
      %v5827 = vrot.slane %v5547, 7
      %v5828 = vsel %vm5621, %v5827, %v5826
      %v5829 = vsel %vm5623, %v5827, %v5828
      %v5830 = vsel %vm5625, %v5827, %v5829
      %v5831 = vsel %vm5627, %v5827, %v5830
      %v5832 = vsel %vm5616, %v5548, %v5548
      %v5833 = vsel %vm5618, %v5548, %v5832
      %v5834 = vrot.slane %v5549, 7
      %v5835 = vsel %vm5621, %v5834, %v5833
      %v5836 = vsel %vm5623, %v5834, %v5835
      %v5837 = vsel %vm5625, %v5834, %v5836
      %v5838 = vsel %vm5627, %v5834, %v5837
      %v5839 = vsel %vm5616, %v5550, %v5550
      %v5840 = vsel %vm5618, %v5550, %v5839
      %v5841 = vrot.slane %v5551, 7
      %v5842 = vsel %vm5621, %v5841, %v5840
      %v5843 = vsel %vm5623, %v5841, %v5842
      %v5844 = vsel %vm5625, %v5841, %v5843
      %v5845 = vsel %vm5627, %v5841, %v5844
      %v5878 = vcombine.low %v5628, %v5656
      %v5880 = vunpack.c.l.s4 1934713408
      %v5881 = vunpack.c.0.s8 %v5880
      %v5882 = vlaneseq
      %v5883 = vshrl.u32 %v5882, 7
      %v5884 = vsub.s32 %v5881, %v5883
      %v5885 = vrot.slane %v5878, %v5884
      %v5886 = vcombine.high %v5885, 0.0
      %v5887 = vcombine.low %v5684, %v5712
      %v5889 = vunpack.c.l.s4 1934713408
      %v5890 = vunpack.c.0.s8 %v5889
      %v5891 = vlaneseq
      %v5892 = vshrl.u32 %v5891, 7
      %v5893 = vsub.s32 %v5890, %v5892
      %v5894 = vrot.slane %v5887, %v5893
      %v5895 = vcombine.high %v5894, 0.0
      %v5896 = vcombine.low %v5740, %v5768
      %v5898 = vunpack.c.l.s4 1934713408
      %v5899 = vunpack.c.0.s8 %v5898
      %v5900 = vlaneseq
      %v5901 = vshrl.u32 %v5900, 7
      %v5902 = vsub.s32 %v5899, %v5901
      %v5903 = vrot.slane %v5896, %v5902
      %v5904 = vcombine.high %v5903, 0.0
      %v5905 = vcombine.low %v5796, %v5824
      %v5907 = vunpack.c.l.s4 1934713408
      %v5908 = vunpack.c.0.s8 %v5907
      %v5909 = vlaneseq
      %v5910 = vshrl.u32 %v5909, 7
      %v5911 = vsub.s32 %v5908, %v5910
      %v5912 = vrot.slane %v5905, %v5911
      %v5913 = vcombine.high %v5912, 0.0
      %v5914 = vcombine.low %v5635, %v5663
      %v5916 = vunpack.c.l.s4 1934713408
      %v5917 = vunpack.c.0.s8 %v5916
      %v5918 = vlaneseq
      %v5919 = vshrl.u32 %v5918, 7
      %v5920 = vsub.s32 %v5917, %v5919
      %v5921 = vrot.slane %v5914, %v5920
      %v5922 = vcombine.high %v5921, 0.0
      %v5923 = vcombine.low %v5691, %v5719
      %v5925 = vunpack.c.l.s4 1934713408
      %v5926 = vunpack.c.0.s8 %v5925
      %v5927 = vlaneseq
      %v5928 = vshrl.u32 %v5927, 7
      %v5929 = vsub.s32 %v5926, %v5928
      %v5930 = vrot.slane %v5923, %v5929
      %v5931 = vcombine.high %v5930, 0.0
      %v5932 = vcombine.low %v5747, %v5775
      %v5934 = vunpack.c.l.s4 1934713408
      %v5935 = vunpack.c.0.s8 %v5934
      %v5936 = vlaneseq
      %v5937 = vshrl.u32 %v5936, 7
      %v5938 = vsub.s32 %v5935, %v5937
      %v5939 = vrot.slane %v5932, %v5938
      %v5940 = vcombine.high %v5939, 0.0
      %v5941 = vcombine.low %v5803, %v5831
      %v5943 = vunpack.c.l.s4 1934713408
      %v5944 = vunpack.c.0.s8 %v5943
      %v5945 = vlaneseq
      %v5946 = vshrl.u32 %v5945, 7
      %v5947 = vsub.s32 %v5944, %v5946
      %v5948 = vrot.slane %v5941, %v5947
      %v5949 = vcombine.high %v5948, 0.0
      %v5950 = vcombine.low %v5642, %v5670
      %v5952 = vunpack.c.l.s4 1934713408
      %v5953 = vunpack.c.0.s8 %v5952
      %v5954 = vlaneseq
      %v5955 = vshrl.u32 %v5954, 7
      %v5956 = vsub.s32 %v5953, %v5955
      %v5957 = vrot.slane %v5950, %v5956
      %v5958 = vcombine.high %v5957, 0.0
      %v5959 = vcombine.low %v5698, %v5726
      %v5961 = vunpack.c.l.s4 1934713408
      %v5962 = vunpack.c.0.s8 %v5961
      %v5963 = vlaneseq
      %v5964 = vshrl.u32 %v5963, 7
      %v5965 = vsub.s32 %v5962, %v5964
      %v5966 = vrot.slane %v5959, %v5965
      %v5967 = vcombine.high %v5966, 0.0
      %v5968 = vcombine.low %v5754, %v5782
      %v5970 = vunpack.c.l.s4 1934713408
      %v5971 = vunpack.c.0.s8 %v5970
      %v5972 = vlaneseq
      %v5973 = vshrl.u32 %v5972, 7
      %v5974 = vsub.s32 %v5971, %v5973
      %v5975 = vrot.slane %v5968, %v5974
      %v5976 = vcombine.high %v5975, 0.0
      %v5977 = vcombine.low %v5810, %v5838
      %v5979 = vunpack.c.l.s4 1934713408
      %v5980 = vunpack.c.0.s8 %v5979
      %v5981 = vlaneseq
      %v5982 = vshrl.u32 %v5981, 7
      %v5983 = vsub.s32 %v5980, %v5982
      %v5984 = vrot.slane %v5977, %v5983
      %v5985 = vcombine.high %v5984, 0.0
      %v5986 = vcombine.low %v5649, %v5677
      %v5988 = vunpack.c.l.s4 1934713408
      %v5989 = vunpack.c.0.s8 %v5988
      %v5990 = vlaneseq
      %v5991 = vshrl.u32 %v5990, 7
      %v5992 = vsub.s32 %v5989, %v5991
      %v5993 = vrot.slane %v5986, %v5992
      %v5994 = vcombine.high %v5993, 0.0
      %v5995 = vcombine.low %v5705, %v5733
      %v5997 = vunpack.c.l.s4 1934713408
      %v5998 = vunpack.c.0.s8 %v5997
      %v5999 = vlaneseq
      %v6000 = vshrl.u32 %v5999, 7
      %v6001 = vsub.s32 %v5998, %v6000
      %v6002 = vrot.slane %v5995, %v6001
      %v6003 = vcombine.high %v6002, 0.0
      %v6004 = vcombine.low %v5761, %v5789
      %v6006 = vunpack.c.l.s4 1934713408
      %v6007 = vunpack.c.0.s8 %v6006
      %v6008 = vlaneseq
      %v6009 = vshrl.u32 %v6008, 7
      %v6010 = vsub.s32 %v6007, %v6009
      %v6011 = vrot.slane %v6004, %v6010
      %v6012 = vcombine.high %v6011, 0.0
      %v6013 = vcombine.low %v5817, %v5845
      %v6015 = vunpack.c.l.s4 1934713408
      %v6016 = vunpack.c.0.s8 %v6015
      %v6017 = vlaneseq
      %v6018 = vshrl.u32 %v6017, 7
      %v6019 = vsub.s32 %v6016, %v6018
      %v6020 = vrot.slane %v6013, %v6019
      %v6021 = vcombine.high %v6020, 0.0
      %v6026 = vcombine.low %v5885, %v5894
      %v6027 = vcombine.low %v5903, %v5912
      %v6029 = vunpack.c.l.s4 1983009808
      %v6030 = vunpack.c.0.s8 %v6029
      %v6031 = vlaneseq
      %v6032 = vshrl.u32 %v6031, 7
      %v6033 = vsub.s32 %v6030, %v6032
      %v6034 = vrot.slane %v6026, %v6033
      %v6036 = vunpack.c.l.s4 1983009808
      %v6037 = vunpack.c.0.s8 %v6036
      %v6038 = vlaneseq
      %v6039 = vshrl.u32 %v6038, 7
      %v6040 = vsub.s32 %v6037, %v6039
      %v6041 = vrot.slane %v6027, %v6040
      %v6042 = vcombine.low %v6034, %v6041
      %v6048 = vcombine.low %v5886, %v5895
      %v6049 = vcombine.low %v5904, %v5913
      %v6051 = vunpack.c.l.s4 1983009808
      %v6052 = vunpack.c.0.s8 %v6051
      %v6053 = vlaneseq
      %v6054 = vshrl.u32 %v6053, 7
      %v6055 = vsub.s32 %v6052, %v6054
      %v6056 = vrot.slane %v6048, %v6055
      %v6058 = vunpack.c.l.s4 1983009808
      %v6059 = vunpack.c.0.s8 %v6058
      %v6060 = vlaneseq
      %v6061 = vshrl.u32 %v6060, 7
      %v6062 = vsub.s32 %v6059, %v6061
      %v6063 = vrot.slane %v6049, %v6062
      %v6064 = vcombine.low %v6056, %v6063
      %6065 = vrot.lane.b32.xlu0 %v6064, 8
      %v6066 = vpop.permute.xlu0 %6065
      %v6072 = vcombine.low %v5921, %v5930
      %v6073 = vcombine.low %v5939, %v5948
      %v6075 = vunpack.c.l.s4 1983009808
      %v6076 = vunpack.c.0.s8 %v6075
      %v6077 = vlaneseq
      %v6078 = vshrl.u32 %v6077, 7
      %v6079 = vsub.s32 %v6076, %v6078
      %v6080 = vrot.slane %v6072, %v6079
      %v6082 = vunpack.c.l.s4 1983009808
      %v6083 = vunpack.c.0.s8 %v6082
      %v6084 = vlaneseq
      %v6085 = vshrl.u32 %v6084, 7
      %v6086 = vsub.s32 %v6083, %v6085
      %v6087 = vrot.slane %v6073, %v6086
      %v6088 = vcombine.low %v6080, %v6087
      %6089 = vrot.lane.b32.xlu0 %v6088, 16
      %v6090 = vpop.permute.xlu0 %6089
      %v6096 = vcombine.low %v5922, %v5931
      %v6097 = vcombine.low %v5940, %v5949
      %v6099 = vunpack.c.l.s4 1983009808
      %v6100 = vunpack.c.0.s8 %v6099
      %v6101 = vlaneseq
      %v6102 = vshrl.u32 %v6101, 7
      %v6103 = vsub.s32 %v6100, %v6102
      %v6104 = vrot.slane %v6096, %v6103
      %v6106 = vunpack.c.l.s4 1983009808
      %v6107 = vunpack.c.0.s8 %v6106
      %v6108 = vlaneseq
      %v6109 = vshrl.u32 %v6108, 7
      %v6110 = vsub.s32 %v6107, %v6109
      %v6111 = vrot.slane %v6097, %v6110
      %v6112 = vcombine.low %v6104, %v6111
      %6113 = vrot.lane.b32.xlu0 %v6112, 24
      %v6114 = vpop.permute.xlu0 %6113
      %v6120 = vcombine.low %v5957, %v5966
      %v6121 = vcombine.low %v5975, %v5984
      %v6123 = vunpack.c.l.s4 1983009808
      %v6124 = vunpack.c.0.s8 %v6123
      %v6125 = vlaneseq
      %v6126 = vshrl.u32 %v6125, 7
      %v6127 = vsub.s32 %v6124, %v6126
      %v6128 = vrot.slane %v6120, %v6127
      %v6130 = vunpack.c.l.s4 1983009808
      %v6131 = vunpack.c.0.s8 %v6130
      %v6132 = vlaneseq
      %v6133 = vshrl.u32 %v6132, 7
      %v6134 = vsub.s32 %v6131, %v6133
      %v6135 = vrot.slane %v6121, %v6134
      %v6136 = vcombine.low %v6128, %v6135
      %6137 = vrot.lane.b32.xlu0 %v6136, 32
      %v6138 = vpop.permute.xlu0 %6137
      %v6144 = vcombine.low %v5958, %v5967
      %v6145 = vcombine.low %v5976, %v5985
      %v6147 = vunpack.c.l.s4 1983009808
      %v6148 = vunpack.c.0.s8 %v6147
      %v6149 = vlaneseq
      %v6150 = vshrl.u32 %v6149, 7
      %v6151 = vsub.s32 %v6148, %v6150
      %v6152 = vrot.slane %v6144, %v6151
      %v6154 = vunpack.c.l.s4 1983009808
      %v6155 = vunpack.c.0.s8 %v6154
      %v6156 = vlaneseq
      %v6157 = vshrl.u32 %v6156, 7
      %v6158 = vsub.s32 %v6155, %v6157
      %v6159 = vrot.slane %v6145, %v6158
      %v6160 = vcombine.low %v6152, %v6159
      %6161 = vrot.lane.b32.xlu0 %v6160, 40
      %v6162 = vpop.permute.xlu0 %6161
      %v6168 = vcombine.low %v5993, %v6002
      %v6169 = vcombine.low %v6011, %v6020
      %v6171 = vunpack.c.l.s4 1983009808
      %v6172 = vunpack.c.0.s8 %v6171
      %v6173 = vlaneseq
      %v6174 = vshrl.u32 %v6173, 7
      %v6175 = vsub.s32 %v6172, %v6174
      %v6176 = vrot.slane %v6168, %v6175
      %v6178 = vunpack.c.l.s4 1983009808
      %v6179 = vunpack.c.0.s8 %v6178
      %v6180 = vlaneseq
      %v6181 = vshrl.u32 %v6180, 7
      %v6182 = vsub.s32 %v6179, %v6181
      %v6183 = vrot.slane %v6169, %v6182
      %v6184 = vcombine.low %v6176, %v6183
      %6185 = vrot.lane.b32.xlu0 %v6184, 48
      %v6186 = vpop.permute.xlu0 %6185
      %v6192 = vcombine.low %v5994, %v6003
      %v6193 = vcombine.low %v6012, %v6021
      %v6195 = vunpack.c.l.s4 1983009808
      %v6196 = vunpack.c.0.s8 %v6195
      %v6197 = vlaneseq
      %v6198 = vshrl.u32 %v6197, 7
      %v6199 = vsub.s32 %v6196, %v6198
      %v6200 = vrot.slane %v6192, %v6199
      %v6202 = vunpack.c.l.s4 1983009808
      %v6203 = vunpack.c.0.s8 %v6202
      %v6204 = vlaneseq
      %v6205 = vshrl.u32 %v6204, 7
      %v6206 = vsub.s32 %v6203, %v6205
      %v6207 = vrot.slane %v6193, %v6206
      %v6208 = vcombine.low %v6200, %v6207
      %6209 = vrot.lane.b32.xlu0 %v6208, 56
      %v6210 = vpop.permute.xlu0 %6209
      %v6212 = vsel %vm4576, %v6042, %v6066
      %vm6213 = vcmask 130048
      %v6214 = vsel %vm6213, %v6212, %v6090
      %vm6215 = vcmask 195584
      %v6216 = vsel %vm6215, %v6214, %v6114
      %vm6217 = vcmask 261120
      %v6218 = vsel %vm6217, %v6216, %v6138
      %vm6219 = vcmask 326656
      %v6220 = vsel %vm6219, %v6218, %v6162
      %vm6221 = vcmask 392192
      %v6222 = vsel %vm6221, %v6220, %v6186
      %vm6223 = vcmask 457728
      %v6224 = vsel %vm6223, %v6222, %v6210
      %vm6225 = vcmask 523264
      %6226 = vst.msk [vmem:[%s195] sm:$0xff] %vm6225, %v6224
      %p6227 = scmp.lt.s32.totalorder %s15, 1
      %s6228 = scalar_select %p6227, %s15, 1
      %s6229 = smul.addr %s6228, 8
      %s6230 = scalar_lea.vmem %s4, %s6229
      // Predicated region
      $region37: #{down_block2d.1} parent=35 // pred_check
        %p6231 = pneg %p122
      $region38: #{down_block2d.1} parent=35 // pred_check_branch
        %6233 = sbr.rel (%p6231) target = $region40
      $region39: #{down_block2d.1} parent=35 // pred_region
        _
      $region40: #{down_block2d.1} parent=35 // pred_fallthru
        _
    $region36: #{down_block2d.1} parent=5 // pred_fallthru
      _
    %p6234 = scmp.le.s32.totalorder 2, %s10
    // Predicated region
    $region41: #{down_block2d.1} parent=5 // pred_check
      %p6235 = pneg %p6234
    $region42: #{down_block2d.1} parent=5 // pred_check_branch
      %6237 = sbr.rel (%p6235) target = $region44
    $region43: #{down_block2d.1} parent=5 // pred_region
      %s6238 = ssub.s32 %s10, 2
      // Predicated region
      $region45: #{down_block2d.1} parent=43 // pred_check
        %p6239 = pneg %p128
      $region46: #{down_block2d.1} parent=43 // pred_check_branch
        %6241 = sbr.rel (%p6239) target = $region48
      $region47: #{down_block2d.1} parent=43 // pred_region
        %p6242 = scmp.lt.s32.totalorder %s16, 1
        %s6243 = scalar_select %p6242, %s16, 1
        %s6244 = smul.addr %s6243, 8
        %s6245 = scalar_lea.vmem %s4, %s6244
      $region48: #{down_block2d.1} parent=43 // pred_fallthru
        _
    $region44: #{down_block2d.1} parent=5 // pred_fallthru
      _
  $region6: #{down_block2d.1} parent=0 // loop_footer
    %s14 = sadd.s32 1, %s10
  $region7: #{down_block2d.1} parent=0 // loop_footer_branch
    %9 = sbr.rel target = $region3
  $region8: #{down_block2d.1} parent=0 // loop_exit
    _

</llo_original>
